<compile_context>
chip_gen: v7x
topology: tpu7x:2x2x1
jax: 0.10.0
libtpu: 0.0.40
codegen_flags: <defaults>
</compile_context>

<pallas_src>
import functools

import numpy as np
import jax
import jax.numpy as jnp
from jax import lax
from jax.experimental import pallas as pl
from jax.experimental.pallas import tpu as pltpu


# ----------------------------------------------------------------------------
# helpers
# ----------------------------------------------------------------------------
def _round_up(x, m):
    return (x + m - 1) // m * m


def _pad2(m, rows, cols):
    out = np.zeros((rows, cols), np.float32)
    out[: m.shape[0], : m.shape[1]] = m
    return out


# ----------------------------------------------------------------------------
# One-time host-side lowering: conv layers -> dense (in, out) matrices
# ----------------------------------------------------------------------------
def _conv1d_dense(w, b, L_in, stride, pad):
    """Conv1d(C_in,C_out,K,stride,pad) as a dense (C_in*L_in, C_out*L_out) matrix.
    Flattening convention is channel-major (index = c*L + l), matching
    PyTorch's x.view(N, -1) on an (N, C, L) tensor."""
    C_out, C_in, K = w.shape
    L_out = (L_in + 2 * pad - K) // stride + 1
    M = np.zeros((C_in * L_in, C_out * L_out), np.float32)
    rows = np.arange(C_in) * L_in
    cols = np.arange(C_out) * L_out
    for j in range(L_out):
        for k in range(K):
            li = stride * j + k - pad
            if 0 <= li < L_in:
                M[np.ix_(rows + li, cols + j)] = w[:, :, k].T
    bias = np.repeat(b, L_out)                       # bias[co*L_out + j] = b[co]
    return M, bias, L_out


def _convT1d_dense(w, b, L_in, stride):
    """ConvTranspose1d(C_in,C_out,K=stride,pad=0): windows don't overlap, exact
    dense equivalent of shape (C_in*L_in, C_out*stride*L_in)."""
    C_in, C_out, K = w.shape
    L_out = (L_in - 1) * stride + K                  # == stride * L_in when K == stride
    M = np.zeros((C_in * L_in, C_out * L_out), np.float32)
    rows = np.arange(C_in) * L_in
    cols = np.arange(C_out) * L_out
    for l in range(L_in):
        for k in range(K):
            M[np.ix_(rows + l, cols + stride * l + k)] = w[:, :, k]
    bias = np.repeat(b, L_out)
    return M, bias, L_out


def prepare_fused_params(params, cfg):
    """Lower conv/convT/linear weights to dense, lane-padded (x128) matrices once.

    Also:
      * merges fc_mu / fc_var into one [mu | log_var] matrix whose halves sit on
        128-lane boundaries, and
      * folds the `output[:, :in_dim]` slice (MSE column mask) into the last
        decoder matrix by zeroing its columns >= in_dim (exact, since only the
        loss is returned)."""
    fr, ks = cfg["fold_rate"], cfg["kernel_size"]
    in_dim = cfg["in_dim"]
    lat = cfg["latent_dim"]
    lat_pad = _round_up(lat, 128)

    mats = []

    # encoder convs -> dense
    L = cfg["real_input_dim"]
    for (w, b) in params["enc"]:
        M, bias, L = _conv1d_dense(np.asarray(w), np.asarray(b), L, stride=fr, pad=ks // 2)
        mats.append((M, bias))

    # fc_mu + fc_var -> one matmul producing [mu | log_var]
    w_mu, b_mu = (np.asarray(a) for a in params["fc_mu"])     # (lat, lat) in (in, out) layout
    w_var, b_var = (np.asarray(a) for a in params["fc_var"])
    Wmv = np.zeros((lat, 2 * lat_pad), np.float32)
    Wmv[:, :lat] = w_mu
    Wmv[:, lat_pad:lat_pad + lat] = w_var
    bmv = np.zeros((2 * lat_pad,), np.float32)
    bmv[:lat] = b_mu
    bmv[lat_pad:lat_pad + lat] = b_var
    mats.append((Wmv, bmv))

    # decoder transposed convs -> dense
    L = cfg["real_input_dim"] // fr ** len(cfg["enc_channel_list"])
    dec = []
    for (w, b) in params["dec"]:
        M, bias, L = _convT1d_dense(np.asarray(w), np.asarray(b), L, stride=fr)
        dec.append([M, bias])
    # Fold adjust_output[:, :in_dim] + MSE mask into the final layer's weights.
    dec[-1][0][:, in_dim:] = 0.0
    dec[-1][1][in_dim:] = 0.0
    mats.extend((M, bias) for M, bias in dec)

    flat = []
    for (M, bias) in mats:
        rp = _round_up(M.shape[0], 128)               # contraction dim -> lane-dense activations
        cp = _round_up(M.shape[1], 128)
        flat.append(jnp.asarray(_pad2(M, rp, cp)))
        flat.append(jnp.asarray(_pad2(bias[None, :], 1, cp)))
    return tuple(flat)


# ----------------------------------------------------------------------------
# Fused Pallas kernel: whole ODVAE forward -> scalar loss
# ----------------------------------------------------------------------------
def _fused_kernel(*refs, n_enc, n_dec, lat_pad, kld_weight, batch, inv_mse):
    x_ref, eps_ref = refs[0], refs[1]
    wb = refs[2:-1]          # alternating (W, b) VMEM refs
    out_ref = refs[-1]       # (1, 1) SMEM scalar

    def dense(h, w_ref, b_ref, act):
        y = jnp.dot(h, w_ref[...], preferred_element_type=jnp.float32) + b_ref[...]
        if act:
            y = jnp.maximum(y, 0.01 * y)              # LeakyReLU(0.01), one VPU op
        return y

    x = x_ref[...]                                    # (N, P_real), zeros past in_dim
    h = x
    i = 0
    for l in range(n_enc):                            # encoder convs (dense form)
        h = dense(h, wb[i], wb[i + 1], act=(l < n_enc - 1))
        i += 2

    mv = dense(h, wb[i], wb[i + 1], act=False)        # [mu | log_var], lane-aligned halves
    i += 2
    mu = mv[:, :lat_pad]                              # padded cols exactly 0
    log_var = mv[:, lat_pad:]                         # padded cols exactly 0

    std = jnp.exp(0.5 * log_var)                      # EUP
    z = jnp.clip(mu + eps_ref[...] * std, -1.0, 1.0)  # padded cols stay 0

    d = z
    for l in range(n_dec):                            # decoder transposed convs (dense form)
        d = dense(d, wb[i], wb[i + 1], act=(l < n_dec - 1))
        i += 2

    # MSE: last decoder matrix already zeroes columns >= in_dim, and x is zero
    # there too, so the full-width reduction equals the [:, :in_dim] MSE.
    diff = d - x
    recons_loss = jnp.sum(diff * diff) * inv_mse

    # KLD: padded lanes contribute 1 + 0 - 0 - exp(0) = 0, so the full sum is exact.
    kld_terms = 1.0 + log_var - mu * mu - jnp.exp(log_var)
    kld = -0.5 * jnp.sum(kld_terms) / batch

    out_ref[0, 0] = recons_loss + kld_weight * kld


# ----------------------------------------------------------------------------
# ODVAE config / params / forward
# ----------------------------------------------------------------------------
def make_config(in_dim, fold_rate=3, kernel_size=3, kld_weight=0.5,
                enc_channel_list=(2, 2, 2, 2), dec_channel_list=(2, 64, 64, 8)):
    enc_layer_num = len(enc_channel_list)
    real_input_dim = int(in_dim / fold_rate ** enc_layer_num + 1) * fold_rate ** enc_layer_num
    latent_len = real_input_dim // fold_rate ** enc_layer_num
    latent_dim = enc_channel_list[-1] * latent_len
    return dict(in_dim=in_dim, fold_rate=fold_rate, kernel_size=kernel_size,
                kld_weight=kld_weight, enc_channel_list=tuple(enc_channel_list),
                dec_channel_list=tuple(dec_channel_list),
                real_input_dim=real_input_dim, latent_dim=latent_dim)


def init_params(key, cfg):
    K = cfg["kernel_size"]
    keys = iter(jax.random.split(key, 32))
    enc, dec = [], []
    c_prev = 1
    for c in cfg["enc_channel_list"]:
        w = jax.random.normal(next(keys), (c, c_prev, K), jnp.float32) / jnp.sqrt(c_prev * K)
        b = 0.01 * jax.random.normal(next(keys), (c,), jnp.float32)
        enc.append((w, b))
        c_prev = c
    c_prev = cfg["dec_channel_list"][0]
    for c in list(cfg["dec_channel_list"][1:]) + [1]:
        w = jax.random.normal(next(keys), (c_prev, c, K), jnp.float32) / jnp.sqrt(c_prev * K)
        b = 0.01 * jax.random.normal(next(keys), (c,), jnp.float32)
        dec.append((w, b))
        c_prev = c
    ld = cfg["latent_dim"]
    fc_mu = (jax.random.normal(next(keys), (ld, ld), jnp.float32) / jnp.sqrt(ld),
             jnp.zeros((ld,), jnp.float32))
    fc_var = (jax.random.normal(next(keys), (ld, ld), jnp.float32) / jnp.sqrt(ld),
              jnp.zeros((ld,), jnp.float32))
    return dict(enc=enc, dec=dec, fc_mu=fc_mu, fc_var=fc_var)


def odvae_forward(fused_params, x, eps, *, cfg):
    """x: (N, in_dim), eps: (N, latent_dim).  Returns scalar VAE loss."""
    N = x.shape[0]
    P_real = _round_up(cfg["real_input_dim"], 128)
    P_lat = _round_up(cfg["latent_dim"], 128)

    # Only per-call host glue: pad the two data inputs to lane-dense widths.
    xp = jnp.zeros((N, P_real), jnp.float32).at[:, :cfg["in_dim"]].set(x.astype(jnp.float32))
    ep = jnp.zeros((N, P_lat), jnp.float32).at[:, :cfg["latent_dim"]].set(eps.astype(jnp.float32))

    kernel = functools.partial(
        _fused_kernel,
        n_enc=len(cfg["enc_channel_list"]),
        n_dec=len(cfg["dec_channel_list"]),
        lat_pad=P_lat,
        kld_weight=float(cfg["kld_weight"]),
        batch=float(N),
        inv_mse=1.0 / float(N * cfg["in_dim"]),
    )

    # Advisory cost estimate for XLA's scheduler around the fused call.
    flops = 0
    bytes_accessed = xp.size * 4 + ep.size * 4 + 4
    for i in range(0, len(fused_params), 2):
        w, b = fused_params[i], fused_params[i + 1]
        flops += 2 * N * w.shape[0] * w.shape[1]
        bytes_accessed += (w.size + b.size) * 4
    cost = pl.CostEstimate(flops=int(flops), transcendentals=int(2 * N * P_lat),
                           bytes_accessed=int(bytes_accessed))

    n_in = 2 + len(fused_params)
    out = pl.pallas_call(
        kernel,
        out_shape=jax.ShapeDtypeStruct((1, 1), jnp.float32),
        in_specs=[pl.BlockSpec(memory_space=pltpu.MemorySpace.VMEM)] * n_in,
        out_specs=pl.BlockSpec(memory_space=pltpu.MemorySpace.SMEM),
        compiler_params=pltpu.CompilerParams(vmem_limit_bytes=32 * 1024 * 1024),
        cost_estimate=cost,
    )(xp, ep, *fused_params)
    return out[0, 0]


# ----------------------------------------------------------------------------
# Pure-JAX reference (original conv formulation) for a correctness check
# ----------------------------------------------------------------------------
def _reference_forward(params, x, eps, cfg):
    N = x.shape[0]
    fr, K = cfg["fold_rate"], cfg["kernel_size"]
    pad = K // 2
    real, in_dim = cfg["real_input_dim"], cfg["in_dim"]

    h = jnp.zeros((N, 1, real), jnp.float32).at[:, 0, :in_dim].set(x.astype(jnp.float32))
    n_enc = len(params["enc"])
    for i, (w, b) in enumerate(params["enc"]):
        _, _, L = h.shape
        L_out = (L + 2 * pad - K) // fr + 1
        hp = jnp.pad(h, ((0, 0), (0, 0), (pad, pad)))
        idx = fr * jnp.arange(L_out)[:, None] + jnp.arange(K)[None, :]
        patches = hp[:, :, idx]                                   # (N, C_in, L_out, K)
        y = jnp.einsum("nclk,ock->nol", patches, w) + b[None, :, None]
        if i < n_enc - 1:
            y = jnp.where(y >= 0, y, 0.01 * y)
        h = y

    h_flat = h.reshape(N, -1)
    mu = h_flat @ params["fc_mu"][0] + params["fc_mu"][1]
    log_var = h_flat @ params["fc_var"][0] + params["fc_var"][1]
    z = jnp.clip(mu + eps * jnp.exp(0.5 * log_var), -1.0, 1.0).reshape(h.shape)

    d = z
    n_dec = len(params["dec"])
    for i, (w, b) in enumerate(params["dec"]):
        Nb, _, L = d.shape
        y = jnp.einsum("ncl,cok->nolk", d, w).reshape(Nb, w.shape[1], L * K) + b[None, :, None]
        if i < n_dec - 1:
            y = jnp.where(y >= 0, y, 0.01 * y)
        d = y

    recons = d[:, 0, :in_dim]
    recons_loss = jnp.mean((recons - x) ** 2)
    kld = jnp.mean(-0.5 * jnp.sum(1 + log_var - mu ** 2 - jnp.exp(log_var), axis=1))
    return recons_loss + cfg["kld_weight"] * kld


# ----------------------------------------------------------------------------
if __name__ == "__main__":
    key = jax.random.PRNGKey(0)
    pkey, xkey, ekey = jax.random.split(key, 3)

    in_dim = 100                                  # small flat parameter vector
    cfg = make_config(in_dim)                     # real_input_dim=162, latent_dim=4
    params = init_params(pkey, cfg)
    fused_params = prepare_fused_params(params, cfg)   # one-time lowering + padding

    batch = 2
    x = jax.random.normal(xkey, (batch, in_dim), jnp.float32)
    eps = jax.random.normal(ekey, (batch, cfg["latent_dim"]), jnp.float32)

    fwd = jax.jit(functools.partial(odvae_forward, cfg=cfg))
    loss = fwd(fused_params, x, eps)
    jax.block_until_ready(loss)

    ref = _reference_forward(params, x, eps, cfg)
    assert loss.shape == () and bool(jnp.isfinite(loss))
    assert bool(jnp.allclose(loss, ref, rtol=1e-3, atol=1e-3)), (float(loss), float(ref))
    print("KERNEL_OK")
</pallas_src>

<mosaic_0001>
module attributes {stable_mosaic.version = 11 : i64} {
  func.func @_fused_kernel(%arg0: memref<2x256xf32, #tpu.memory_space<vmem>>, %arg1: memref<2x128xf32, #tpu.memory_space<vmem>>, %arg2: memref<256x128xf32, #tpu.memory_space<vmem>>, %arg3: memref<1x128xf32, #tpu.memory_space<vmem>>, %arg4: memref<128x128xf32, #tpu.memory_space<vmem>>, %arg5: memref<1x128xf32, #tpu.memory_space<vmem>>, %arg6: memref<128x128xf32, #tpu.memory_space<vmem>>, %arg7: memref<1x128xf32, #tpu.memory_space<vmem>>, %arg8: memref<128x128xf32, #tpu.memory_space<vmem>>, %arg9: memref<1x128xf32, #tpu.memory_space<vmem>>, %arg10: memref<128x256xf32, #tpu.memory_space<vmem>>, %arg11: memref<1x256xf32, #tpu.memory_space<vmem>>, %arg12: memref<128x384xf32, #tpu.memory_space<vmem>>, %arg13: memref<1x384xf32, #tpu.memory_space<vmem>>, %arg14: memref<384x1152xf32, #tpu.memory_space<vmem>>, %arg15: memref<1x1152xf32, #tpu.memory_space<vmem>>, %arg16: memref<1152x512xf32, #tpu.memory_space<vmem>>, %arg17: memref<1x512xf32, #tpu.memory_space<vmem>>, %arg18: memref<512x256xf32, #tpu.memory_space<vmem>>, %arg19: memref<1x256xf32, #tpu.memory_space<vmem>>, %arg20: memref<1x1xf32, #tpu.memory_space<smem>>) attributes {dimension_semantics = [], scalar_prefetch = 0 : i64, scratch_operands = 0 : i64, tpu.core_type = #tpu.core_type<tc>} {
    %c0 = arith.constant 0 : index
    %c0_0 = arith.constant 0 : index
    %0 = vector.load %arg0[%c0, %c0_0] : memref<2x256xf32, #tpu.memory_space<vmem>>, vector<2x256xf32>
    %c0_1 = arith.constant 0 : index
    %c0_2 = arith.constant 0 : index
    %1 = vector.load %arg2[%c0_1, %c0_2] : memref<256x128xf32, #tpu.memory_space<vmem>>, vector<256x128xf32>
    %cst = arith.constant dense<0.000000e+00> : vector<2x128xf32>
    %2 = tpu.matmul %0, %1, %cst {dimension_numbers = #tpu.dot_dimension_numbers<[1], [0], [0], [1], [0, 0, 1, 1], [], []>} : vector<2x256xf32>, vector<256x128xf32>, vector<2x128xf32> -> vector<2x128xf32>
    %c0_3 = arith.constant 0 : index
    %c0_4 = arith.constant 0 : index
    %3 = vector.load %arg3[%c0_3, %c0_4] : memref<1x128xf32, #tpu.memory_space<vmem>>, vector<1x128xf32>
    %4 = vector.broadcast %3 : vector<1x128xf32> to vector<2x128xf32>
    %5 = arith.addf %2, %4 : vector<2x128xf32>
    %cst_5 = arith.constant 0.00999999977 : f32
    %6 = vector.broadcast %cst_5 : f32 to vector<2x128xf32>
    %7 = arith.mulf %6, %5 : vector<2x128xf32>
    %8 = arith.maximumf %5, %7 : vector<2x128xf32>
    %c0_6 = arith.constant 0 : index
    %c0_7 = arith.constant 0 : index
    %9 = vector.load %arg4[%c0_6, %c0_7] : memref<128x128xf32, #tpu.memory_space<vmem>>, vector<128x128xf32>
    %cst_8 = arith.constant dense<0.000000e+00> : vector<2x128xf32>
    %10 = tpu.matmul %8, %9, %cst_8 {dimension_numbers = #tpu.dot_dimension_numbers<[1], [0], [0], [1], [0, 0, 1, 1], [], []>} : vector<2x128xf32>, vector<128x128xf32>, vector<2x128xf32> -> vector<2x128xf32>
    %c0_9 = arith.constant 0 : index
    %c0_10 = arith.constant 0 : index
    %11 = vector.load %arg5[%c0_9, %c0_10] : memref<1x128xf32, #tpu.memory_space<vmem>>, vector<1x128xf32>
    %12 = vector.broadcast %11 : vector<1x128xf32> to vector<2x128xf32>
    %13 = arith.addf %10, %12 : vector<2x128xf32>
    %cst_11 = arith.constant 0.00999999977 : f32
    %14 = vector.broadcast %cst_11 : f32 to vector<2x128xf32>
    %15 = arith.mulf %14, %13 : vector<2x128xf32>
    %16 = arith.maximumf %13, %15 : vector<2x128xf32>
    %c0_12 = arith.constant 0 : index
    %c0_13 = arith.constant 0 : index
    %17 = vector.load %arg6[%c0_12, %c0_13] : memref<128x128xf32, #tpu.memory_space<vmem>>, vector<128x128xf32>
    %cst_14 = arith.constant dense<0.000000e+00> : vector<2x128xf32>
    %18 = tpu.matmul %16, %17, %cst_14 {dimension_numbers = #tpu.dot_dimension_numbers<[1], [0], [0], [1], [0, 0, 1, 1], [], []>} : vector<2x128xf32>, vector<128x128xf32>, vector<2x128xf32> -> vector<2x128xf32>
    %c0_15 = arith.constant 0 : index
    %c0_16 = arith.constant 0 : index
    %19 = vector.load %arg7[%c0_15, %c0_16] : memref<1x128xf32, #tpu.memory_space<vmem>>, vector<1x128xf32>
    %20 = vector.broadcast %19 : vector<1x128xf32> to vector<2x128xf32>
    %21 = arith.addf %18, %20 : vector<2x128xf32>
    %cst_17 = arith.constant 0.00999999977 : f32
    %22 = vector.broadcast %cst_17 : f32 to vector<2x128xf32>
    %23 = arith.mulf %22, %21 : vector<2x128xf32>
    %24 = arith.maximumf %21, %23 : vector<2x128xf32>
    %c0_18 = arith.constant 0 : index
    %c0_19 = arith.constant 0 : index
    %25 = vector.load %arg8[%c0_18, %c0_19] : memref<128x128xf32, #tpu.memory_space<vmem>>, vector<128x128xf32>
    %cst_20 = arith.constant dense<0.000000e+00> : vector<2x128xf32>
    %26 = tpu.matmul %24, %25, %cst_20 {dimension_numbers = #tpu.dot_dimension_numbers<[1], [0], [0], [1], [0, 0, 1, 1], [], []>} : vector<2x128xf32>, vector<128x128xf32>, vector<2x128xf32> -> vector<2x128xf32>
    %c0_21 = arith.constant 0 : index
    %c0_22 = arith.constant 0 : index
    %27 = vector.load %arg9[%c0_21, %c0_22] : memref<1x128xf32, #tpu.memory_space<vmem>>, vector<1x128xf32>
    %28 = vector.broadcast %27 : vector<1x128xf32> to vector<2x128xf32>
    %29 = arith.addf %26, %28 : vector<2x128xf32>
    %c0_23 = arith.constant 0 : index
    %c0_24 = arith.constant 0 : index
    %30 = vector.load %arg10[%c0_23, %c0_24] : memref<128x256xf32, #tpu.memory_space<vmem>>, vector<128x256xf32>
    %cst_25 = arith.constant dense<0.000000e+00> : vector<2x256xf32>
    %31 = tpu.matmul %29, %30, %cst_25 {dimension_numbers = #tpu.dot_dimension_numbers<[1], [0], [0], [1], [0, 0, 1, 1], [], []>} : vector<2x128xf32>, vector<128x256xf32>, vector<2x256xf32> -> vector<2x256xf32>
    %c0_26 = arith.constant 0 : index
    %c0_27 = arith.constant 0 : index
    %32 = vector.load %arg11[%c0_26, %c0_27] : memref<1x256xf32, #tpu.memory_space<vmem>>, vector<1x256xf32>
    %33 = vector.broadcast %32 : vector<1x256xf32> to vector<2x256xf32>
    %34 = arith.addf %31, %33 : vector<2x256xf32>
    %35 = vector.extract_strided_slice %34 {offsets = [0, 0], sizes = [2, 128], strides = [1, 1]} : vector<2x256xf32> to vector<2x128xf32>
    %36 = vector.extract_strided_slice %34 {offsets = [0, 128], sizes = [2, 128], strides = [1, 1]} : vector<2x256xf32> to vector<2x128xf32>
    %cst_28 = arith.constant 5.000000e-01 : f32
    %37 = vector.broadcast %cst_28 : f32 to vector<2x128xf32>
    %38 = arith.mulf %37, %36 : vector<2x128xf32>
    %39 = math.exp %38 : vector<2x128xf32>
    %c0_29 = arith.constant 0 : index
    %c0_30 = arith.constant 0 : index
    %40 = vector.load %arg1[%c0_29, %c0_30] : memref<2x128xf32, #tpu.memory_space<vmem>>, vector<2x128xf32>
    %41 = arith.mulf %40, %39 : vector<2x128xf32>
    %42 = arith.addf %35, %41 : vector<2x128xf32>
    %cst_31 = arith.constant -1.000000e+00 : f32
    %cst_32 = arith.constant 1.000000e+00 : f32
    %43 = vector.broadcast %cst_31 : f32 to vector<2x128xf32>
    %44 = arith.maximumf %43, %42 : vector<2x128xf32>
    %45 = vector.broadcast %cst_32 : f32 to vector<2x128xf32>
    %46 = arith.minimumf %45, %44 : vector<2x128xf32>
    %c0_33 = arith.constant 0 : index
    %c0_34 = arith.constant 0 : index
    %47 = vector.load %arg12[%c0_33, %c0_34] : memref<128x384xf32, #tpu.memory_space<vmem>>, vector<128x384xf32>
    %cst_35 = arith.constant dense<0.000000e+00> : vector<2x384xf32>
    %48 = tpu.matmul %46, %47, %cst_35 {dimension_numbers = #tpu.dot_dimension_numbers<[1], [0], [0], [1], [0, 0, 1, 1], [], []>} : vector<2x128xf32>, vector<128x384xf32>, vector<2x384xf32> -> vector<2x384xf32>
    %c0_36 = arith.constant 0 : index
    %c0_37 = arith.constant 0 : index
    %49 = vector.load %arg13[%c0_36, %c0_37] : memref<1x384xf32, #tpu.memory_space<vmem>>, vector<1x384xf32>
    %50 = vector.broadcast %49 : vector<1x384xf32> to vector<2x384xf32>
    %51 = arith.addf %48, %50 : vector<2x384xf32>
    %cst_38 = arith.constant 0.00999999977 : f32
    %52 = vector.broadcast %cst_38 : f32 to vector<2x384xf32>
    %53 = arith.mulf %52, %51 : vector<2x384xf32>
    %54 = arith.maximumf %51, %53 : vector<2x384xf32>
    %c0_39 = arith.constant 0 : index
    %c0_40 = arith.constant 0 : index
    %55 = vector.load %arg14[%c0_39, %c0_40] : memref<384x1152xf32, #tpu.memory_space<vmem>>, vector<384x1152xf32>
    %cst_41 = arith.constant dense<0.000000e+00> : vector<2x1152xf32>
    %56 = tpu.matmul %54, %55, %cst_41 {dimension_numbers = #tpu.dot_dimension_numbers<[1], [0], [0], [1], [0, 0, 1, 1], [], []>} : vector<2x384xf32>, vector<384x1152xf32>, vector<2x1152xf32> -> vector<2x1152xf32>
    %c0_42 = arith.constant 0 : index
    %c0_43 = arith.constant 0 : index
    %57 = vector.load %arg15[%c0_42, %c0_43] : memref<1x1152xf32, #tpu.memory_space<vmem>>, vector<1x1152xf32>
    %58 = vector.broadcast %57 : vector<1x1152xf32> to vector<2x1152xf32>
    %59 = arith.addf %56, %58 : vector<2x1152xf32>
    %cst_44 = arith.constant 0.00999999977 : f32
    %60 = vector.broadcast %cst_44 : f32 to vector<2x1152xf32>
    %61 = arith.mulf %60, %59 : vector<2x1152xf32>
    %62 = arith.maximumf %59, %61 : vector<2x1152xf32>
    %c0_45 = arith.constant 0 : index
    %c0_46 = arith.constant 0 : index
    %63 = vector.load %arg16[%c0_45, %c0_46] : memref<1152x512xf32, #tpu.memory_space<vmem>>, vector<1152x512xf32>
    %cst_47 = arith.constant dense<0.000000e+00> : vector<2x512xf32>
    %64 = tpu.matmul %62, %63, %cst_47 {dimension_numbers = #tpu.dot_dimension_numbers<[1], [0], [0], [1], [0, 0, 1, 1], [], []>} : vector<2x1152xf32>, vector<1152x512xf32>, vector<2x512xf32> -> vector<2x512xf32>
    %c0_48 = arith.constant 0 : index
    %c0_49 = arith.constant 0 : index
    %65 = vector.load %arg17[%c0_48, %c0_49] : memref<1x512xf32, #tpu.memory_space<vmem>>, vector<1x512xf32>
    %66 = vector.broadcast %65 : vector<1x512xf32> to vector<2x512xf32>
    %67 = arith.addf %64, %66 : vector<2x512xf32>
    %cst_50 = arith.constant 0.00999999977 : f32
    %68 = vector.broadcast %cst_50 : f32 to vector<2x512xf32>
    %69 = arith.mulf %68, %67 : vector<2x512xf32>
    %70 = arith.maximumf %67, %69 : vector<2x512xf32>
    %c0_51 = arith.constant 0 : index
    %c0_52 = arith.constant 0 : index
    %71 = vector.load %arg18[%c0_51, %c0_52] : memref<512x256xf32, #tpu.memory_space<vmem>>, vector<512x256xf32>
    %cst_53 = arith.constant dense<0.000000e+00> : vector<2x256xf32>
    %72 = tpu.matmul %70, %71, %cst_53 {dimension_numbers = #tpu.dot_dimension_numbers<[1], [0], [0], [1], [0, 0, 1, 1], [], []>} : vector<2x512xf32>, vector<512x256xf32>, vector<2x256xf32> -> vector<2x256xf32>
    %c0_54 = arith.constant 0 : index
    %c0_55 = arith.constant 0 : index
    %73 = vector.load %arg19[%c0_54, %c0_55] : memref<1x256xf32, #tpu.memory_space<vmem>>, vector<1x256xf32>
    %74 = vector.broadcast %73 : vector<1x256xf32> to vector<2x256xf32>
    %75 = arith.addf %72, %74 : vector<2x256xf32>
    %76 = arith.subf %75, %0 : vector<2x256xf32>
    %77 = arith.mulf %76, %76 : vector<2x256xf32>
    %78 = vector.shape_cast %77 : vector<2x256xf32> to vector<1x2x256xf32>
    %cst_56 = arith.constant dense<0.000000e+00> : vector<1xf32>
    %79 = vector.multi_reduction <add>, %78, %cst_56 [1, 2] : vector<1x2x256xf32> to vector<1xf32>
    %80 = vector.shape_cast %79 : vector<1xf32> to vector<1x1x1xf32>
    %81 = vector.extract %80[0, 0, 0] : f32 from vector<1x1x1xf32>
    %cst_57 = arith.constant 5.000000e-03 : f32
    %82 = arith.mulf %81, %cst_57 : f32
    %cst_58 = arith.constant 1.000000e+00 : f32
    %83 = vector.broadcast %cst_58 : f32 to vector<2x128xf32>
    %84 = arith.addf %83, %36 : vector<2x128xf32>
    %85 = arith.mulf %35, %35 : vector<2x128xf32>
    %86 = arith.subf %84, %85 : vector<2x128xf32>
    %87 = math.exp %36 : vector<2x128xf32>
    %88 = arith.subf %86, %87 : vector<2x128xf32>
    %89 = vector.shape_cast %88 : vector<2x128xf32> to vector<1x2x128xf32>
    %cst_59 = arith.constant dense<0.000000e+00> : vector<1xf32>
    %90 = vector.multi_reduction <add>, %89, %cst_59 [1, 2] : vector<1x2x128xf32> to vector<1xf32>
    %91 = vector.shape_cast %90 : vector<1xf32> to vector<1x1x1xf32>
    %92 = vector.extract %91[0, 0, 0] : f32 from vector<1x1x1xf32>
    %cst_60 = arith.constant -5.000000e-01 : f32
    %93 = arith.mulf %cst_60, %92 : f32
    %cst_61 = arith.constant 2.000000e+00 : f32
    %94 = arith.divf %93, %cst_61 : f32
    %cst_62 = arith.constant 5.000000e-01 : f32
    %95 = arith.mulf %cst_62, %94 : f32
    %96 = arith.addf %82, %95 : f32
    %c0_63 = arith.constant 0 : index
    %c0_64 = arith.constant 0 : index
    %97 = memref.load %arg20[%c0_63, %c0_64] : memref<1x1xf32, #tpu.memory_space<smem>>
    memref.store %96, %arg20[%c0_63, %c0_64] : memref<1x1xf32, #tpu.memory_space<smem>>
    return
  }
}

</mosaic_0001>

<llo_original>
// kernel: odvae_forward.1
$region0: #{odvae_forward.1}
  #allocation0 [shape = 'u32[]', space=smem, size = 0x4, offset = 0x4, fixed_abs, tag = 'smem constant byte address 0x4 - core index']
  #allocation1 [shape = 'u32[144,128]{1,0:T(1,128)}', space=vmem, size = 0x12000, scoped, tag = 'internal scratch']
  %s0 = inlined_call_operand.vmem [shape: f32[2,256], index: 0, kind: input, shape index: {}]
  %s1 = inlined_call_operand.vmem [shape: f32[2,128], index: 1, kind: input, shape index: {}]
  %s2 = inlined_call_operand.hbm [shape: f32[256,128], index: 2, kind: input, shape index: {}]
  %s3 = inlined_call_operand.hbm [shape: f32[1,128], index: 3, kind: input, shape index: {}]
  %s4 = inlined_call_operand.hbm [shape: f32[128,128], index: 4, kind: input, shape index: {}]
  %s5 = inlined_call_operand.hbm [shape: f32[1,128], index: 5, kind: input, shape index: {}]
  %s6 = inlined_call_operand.hbm [shape: f32[128,128], index: 6, kind: input, shape index: {}]
  %s7 = inlined_call_operand.hbm [shape: f32[1,128], index: 7, kind: input, shape index: {}]
  %s8 = inlined_call_operand.hbm [shape: f32[128,128], index: 8, kind: input, shape index: {}]
  %s9 = inlined_call_operand.hbm [shape: f32[1,128], index: 9, kind: input, shape index: {}]
  %s10 = inlined_call_operand.hbm [shape: f32[128,256], index: 10, kind: input, shape index: {}]
  %s11 = inlined_call_operand.hbm [shape: f32[1,256], index: 11, kind: input, shape index: {}]
  %s12 = inlined_call_operand.hbm [shape: f32[128,384], index: 12, kind: input, shape index: {}]
  %s13 = inlined_call_operand.hbm [shape: f32[1,384], index: 13, kind: input, shape index: {}]
  %s14 = inlined_call_operand.hbm [shape: f32[384,1152], index: 14, kind: input, shape index: {}]
  %s15 = inlined_call_operand.hbm [shape: f32[1,1152], index: 15, kind: input, shape index: {}]
  %s16 = inlined_call_operand.hbm [shape: f32[1152,512], index: 16, kind: input, shape index: {}]
  %s17 = inlined_call_operand.hbm [shape: f32[1,512], index: 17, kind: input, shape index: {}]
  %s18 = inlined_call_operand.hbm [shape: f32[512,256], index: 18, kind: input, shape index: {}]
  %s19 = inlined_call_operand.hbm [shape: f32[1,256], index: 19, kind: input, shape index: {}]
  %s20 = inlined_call_operand.hbm [shape: f32[1,1], index: 20, kind: output, shape index: {}]
  %s21 = sld [smem:[#allocation0]]
  $region162: #{odvae_forward.1} parent=0
    _
  %s23 = ssub.s32 1, %s21
  %s24 = scalar_select 0, %s23, %s21
  $region1: #{odvae_forward.1} parent=0
    #allocation2 [shape = 'u8[131072]{0}', space=vmem, size = 0x20000, scoped, tag = 'input window, operand 2, single buffered']
    #allocation3 [shape = 's32[1]{0}', space=sflag, size = 0x4, scoped, tag = 'scoped memory for odvae_forward.1']
    #allocation4 [shape = 's32[1]{0}', space=sflag, size = 0x4, scoped, tag = 'scoped memory for odvae_forward.1']
    #allocation5 [shape = 'u8[512]{0}', space=vmem, size = 0x400, scoped, tag = 'input window, operand 3, single buffered']
    #allocation6 [shape = 's32[1]{0}', space=sflag, size = 0x4, scoped, tag = 'scoped memory for odvae_forward.1']
    #allocation7 [shape = 'u8[65536]{0}', space=vmem, size = 0x10000, scoped, tag = 'input window, operand 4, single buffered']
    #allocation8 [shape = 'u8[512]{0}', space=vmem, size = 0x400, scoped, tag = 'input window, operand 5, single buffered']
    #allocation9 [shape = 's32[1]{0}', space=sflag, size = 0x4, scoped, tag = 'scoped memory for odvae_forward.1']
    #allocation10 [shape = 'u8[65536]{0}', space=vmem, size = 0x10000, scoped, tag = 'input window, operand 6, single buffered']
    #allocation11 [shape = 'u8[512]{0}', space=vmem, size = 0x400, scoped, tag = 'input window, operand 7, single buffered']
    #allocation12 [shape = 's32[1]{0}', space=sflag, size = 0x4, scoped, tag = 'scoped memory for odvae_forward.1']
    #allocation13 [shape = 'u8[65536]{0}', space=vmem, size = 0x10000, scoped, tag = 'input window, operand 8, single buffered']
    #allocation14 [shape = 'u8[512]{0}', space=vmem, size = 0x400, scoped, tag = 'input window, operand 9, single buffered']
    #allocation15 [shape = 's32[1]{0}', space=sflag, size = 0x4, scoped, tag = 'scoped memory for odvae_forward.1']
    #allocation16 [shape = 'u8[131072]{0}', space=vmem, size = 0x20000, scoped, tag = 'input window, operand 10, single buffered']
    #allocation17 [shape = 'u8[1024]{0}', space=vmem, size = 0x400, scoped, tag = 'input window, operand 11, single buffered']
    #allocation18 [shape = 's32[1]{0}', space=sflag, size = 0x4, scoped, tag = 'scoped memory for odvae_forward.1']
    #allocation19 [shape = 'u8[196608]{0}', space=vmem, size = 0x30000, scoped, tag = 'input window, operand 12, single buffered']
    #allocation20 [shape = 'u8[1536]{0}', space=vmem, size = 0x800, scoped, tag = 'input window, operand 13, single buffered']
    #allocation21 [shape = 's32[1]{0}', space=sflag, size = 0x4, scoped, tag = 'scoped memory for odvae_forward.1']
    #allocation22 [shape = 'u8[1769472]{0}', space=vmem, size = 0x1b0000, scoped, tag = 'input window, operand 14, single buffered']
    #allocation23 [shape = 'u8[4608]{0}', space=vmem, size = 0x1400, scoped, tag = 'input window, operand 15, single buffered']
    #allocation24 [shape = 's32[1]{0}', space=sflag, size = 0x4, scoped, tag = 'scoped memory for odvae_forward.1']
    #allocation25 [shape = 'u8[2359296]{0}', space=vmem, size = 0x240000, scoped, tag = 'input window, operand 16, single buffered']
    #allocation26 [shape = 'u8[2048]{0}', space=vmem, size = 0x800, scoped, tag = 'input window, operand 17, single buffered']
    #allocation27 [shape = 's32[1]{0}', space=sflag, size = 0x4, scoped, tag = 'scoped memory for odvae_forward.1']
    #allocation28 [shape = 'u8[524288]{0}', space=vmem, size = 0x80000, scoped, tag = 'input window, operand 18, single buffered']
    #allocation29 [shape = 'u8[1024]{0}', space=vmem, size = 0x400, scoped, tag = 'input window, operand 19, single buffered']
    #allocation30 [shape = 's32[1]{0}', space=sflag, size = 0x4, scoped, tag = 'scoped memory for odvae_forward.1']
    #allocation31 [shape = 'u8[512]{0}', space=smem, size = 0x200, scoped, tag = 'output window, operand 0, single buffered']
    %25 = vsyncpa [#allocation3], 0
    %26 = vsyncpa [#allocation6], 0
    %27 = vsyncpa [#allocation9], 0
    %28 = vsyncpa [#allocation12], 0
    %29 = vsyncpa [#allocation15], 0
    %30 = vsyncpa [#allocation18], 0
    %31 = vsyncpa [#allocation21], 0
    %32 = vsyncpa [#allocation24], 0
    %33 = vsyncpa [#allocation27], 0
    %34 = vsyncpa [#allocation30], 0
    %35 = vsyncpa [#allocation4], 0
    // Predicated region
    $region2: #{odvae_forward.1} parent=1 // pred_check
      _
    $region3: #{odvae_forward.1} parent=1 // pred_check_branch
      %37 = sbr.rel (0) target = $region5
    $region4: #{odvae_forward.1} parent=1 // pred_region
      _
    $region5: #{odvae_forward.1} parent=1 // pred_fallthru
      _
    // Predicated region
    $region6: #{odvae_forward.1} parent=1 // pred_check
      _
    $region7: #{odvae_forward.1} parent=1 // pred_check_branch
      %39 = sbr.rel (0) target = $region9
    $region8: #{odvae_forward.1} parent=1 // pred_region
      _
    $region9: #{odvae_forward.1} parent=1 // pred_fallthru
      _
    // Predicated region
    $region10: #{odvae_forward.1} parent=1 // pred_check
      _
    $region11: #{odvae_forward.1} parent=1 // pred_check_branch
      %41 = sbr.rel (0) target = $region13
    $region12: #{odvae_forward.1} parent=1 // pred_region
      %s43 = ssub.s32 4096, 4096
      %44 = vsyncadd [#allocation3], %s43
      %s45 = sshll.u32 [#allocation2], 4
      %s46 = int_to_ptr.vmem [resolvable:$true] %s45
      %51 = dma.hbm_to_vmem [thread:$0]  %s2, 4096, %s46, [#allocation3], 128, 128, 8
    $region13: #{odvae_forward.1} parent=1 // pred_fallthru
      _
    // Predicated region
    $region14: #{odvae_forward.1} parent=1 // pred_check
      _
    $region15: #{odvae_forward.1} parent=1 // pred_check_branch
      %53 = sbr.rel (0) target = $region17
    $region16: #{odvae_forward.1} parent=1 // pred_region
      %s55 = ssub.s32 16, 16
      %56 = vsyncadd [#allocation6], %s55
      %s58 = sshll.u32 [#allocation5], 4
      %s59 = int_to_ptr.vmem [resolvable:$true] %s58
      %61 = dma.hbm_to_vmem [thread:$0]  %s3, 16, %s59, [#allocation6]
    $region17: #{odvae_forward.1} parent=1 // pred_fallthru
      _
    // Predicated region
    $region18: #{odvae_forward.1} parent=1 // pred_check
      _
    $region19: #{odvae_forward.1} parent=1 // pred_check_branch
      %63 = sbr.rel (0) target = $region21
    $region20: #{odvae_forward.1} parent=1 // pred_region
      %s65 = ssub.s32 2048, 2048
      %66 = vsyncadd [#allocation6], %s65
      %s67 = sshll.u32 [#allocation7], 4
      %s68 = int_to_ptr.vmem [resolvable:$true] %s67
      %73 = dma.hbm_to_vmem [thread:$0]  %s4, 2048, %s68, [#allocation6], 128, 128, 8
    $region21: #{odvae_forward.1} parent=1 // pred_fallthru
      _
    // Predicated region
    $region22: #{odvae_forward.1} parent=1 // pred_check
      _
    $region23: #{odvae_forward.1} parent=1 // pred_check_branch
      %75 = sbr.rel (0) target = $region25
    $region24: #{odvae_forward.1} parent=1 // pred_region
      %s77 = ssub.s32 16, 16
      %78 = vsyncadd [#allocation9], %s77
      %s80 = sshll.u32 [#allocation8], 4
      %s81 = int_to_ptr.vmem [resolvable:$true] %s80
      %83 = dma.hbm_to_vmem [thread:$0]  %s5, 16, %s81, [#allocation9]
    $region25: #{odvae_forward.1} parent=1 // pred_fallthru
      _
    // Predicated region
    $region26: #{odvae_forward.1} parent=1 // pred_check
      _
    $region27: #{odvae_forward.1} parent=1 // pred_check_branch
      %85 = sbr.rel (0) target = $region29
    $region28: #{odvae_forward.1} parent=1 // pred_region
      %s87 = ssub.s32 2048, 2048
      %88 = vsyncadd [#allocation9], %s87
      %s89 = sshll.u32 [#allocation10], 4
      %s90 = int_to_ptr.vmem [resolvable:$true] %s89
      %95 = dma.hbm_to_vmem [thread:$0]  %s6, 2048, %s90, [#allocation9], 128, 128, 8
    $region29: #{odvae_forward.1} parent=1 // pred_fallthru
      _
    // Predicated region
    $region30: #{odvae_forward.1} parent=1 // pred_check
      _
    $region31: #{odvae_forward.1} parent=1 // pred_check_branch
      %97 = sbr.rel (0) target = $region33
    $region32: #{odvae_forward.1} parent=1 // pred_region
      %s99 = ssub.s32 16, 16
      %100 = vsyncadd [#allocation12], %s99
      %s102 = sshll.u32 [#allocation11], 4
      %s103 = int_to_ptr.vmem [resolvable:$true] %s102
      %105 = dma.hbm_to_vmem [thread:$0]  %s7, 16, %s103, [#allocation12]
    $region33: #{odvae_forward.1} parent=1 // pred_fallthru
      _
    // Predicated region
    $region34: #{odvae_forward.1} parent=1 // pred_check
      _
    $region35: #{odvae_forward.1} parent=1 // pred_check_branch
      %107 = sbr.rel (0) target = $region37
    $region36: #{odvae_forward.1} parent=1 // pred_region
      %s109 = ssub.s32 2048, 2048
      %110 = vsyncadd [#allocation12], %s109
      %s111 = sshll.u32 [#allocation13], 4
      %s112 = int_to_ptr.vmem [resolvable:$true] %s111
      %117 = dma.hbm_to_vmem [thread:$0]  %s8, 2048, %s112, [#allocation12], 128, 128, 8
    $region37: #{odvae_forward.1} parent=1 // pred_fallthru
      _
    // Predicated region
    $region38: #{odvae_forward.1} parent=1 // pred_check
      _
    $region39: #{odvae_forward.1} parent=1 // pred_check_branch
      %119 = sbr.rel (0) target = $region41
    $region40: #{odvae_forward.1} parent=1 // pred_region
      %s121 = ssub.s32 16, 16
      %122 = vsyncadd [#allocation15], %s121
      %s124 = sshll.u32 [#allocation14], 4
      %s125 = int_to_ptr.vmem [resolvable:$true] %s124
      %127 = dma.hbm_to_vmem [thread:$0]  %s9, 16, %s125, [#allocation15]
    $region41: #{odvae_forward.1} parent=1 // pred_fallthru
      _
    // Predicated region
    $region42: #{odvae_forward.1} parent=1 // pred_check
      _
    $region43: #{odvae_forward.1} parent=1 // pred_check_branch
      %129 = sbr.rel (0) target = $region45
    $region44: #{odvae_forward.1} parent=1 // pred_region
      %s131 = ssub.s32 4096, 4096
      %132 = vsyncadd [#allocation15], %s131
      %s133 = sshll.u32 [#allocation16], 4
      %s134 = int_to_ptr.vmem [resolvable:$true] %s133
      %139 = dma.hbm_to_vmem [thread:$0]  %s10, 4096, %s134, [#allocation15], 256, 256, 16
    $region45: #{odvae_forward.1} parent=1 // pred_fallthru
      _
    // Predicated region
    $region46: #{odvae_forward.1} parent=1 // pred_check
      _
    $region47: #{odvae_forward.1} parent=1 // pred_check_branch
      %141 = sbr.rel (0) target = $region49
    $region48: #{odvae_forward.1} parent=1 // pred_region
      %s143 = ssub.s32 32, 32
      %144 = vsyncadd [#allocation18], %s143
      %s146 = sshll.u32 [#allocation17], 4
      %s147 = int_to_ptr.vmem [resolvable:$true] %s146
      %149 = dma.hbm_to_vmem [thread:$0]  %s11, 32, %s147, [#allocation18]
    $region49: #{odvae_forward.1} parent=1 // pred_fallthru
      _
    // Predicated region
    $region50: #{odvae_forward.1} parent=1 // pred_check
      _
    $region51: #{odvae_forward.1} parent=1 // pred_check_branch
      %151 = sbr.rel (0) target = $region53
    $region52: #{odvae_forward.1} parent=1 // pred_region
      %s153 = ssub.s32 6144, 6144
      %154 = vsyncadd [#allocation18], %s153
      %s155 = sshll.u32 [#allocation19], 4
      %s156 = int_to_ptr.vmem [resolvable:$true] %s155
      %161 = dma.hbm_to_vmem [thread:$0]  %s12, 6144, %s156, [#allocation18], 384, 384, 24
    $region53: #{odvae_forward.1} parent=1 // pred_fallthru
      _
    // Predicated region
    $region54: #{odvae_forward.1} parent=1 // pred_check
      _
    $region55: #{odvae_forward.1} parent=1 // pred_check_branch
      %163 = sbr.rel (0) target = $region57
    $region56: #{odvae_forward.1} parent=1 // pred_region
      %s165 = ssub.s32 48, 48
      %166 = vsyncadd [#allocation21], %s165
      %s168 = sshll.u32 [#allocation20], 4
      %s169 = int_to_ptr.vmem [resolvable:$true] %s168
      %171 = dma.hbm_to_vmem [thread:$0]  %s13, 48, %s169, [#allocation21]
    $region57: #{odvae_forward.1} parent=1 // pred_fallthru
      _
    // Predicated region
    $region58: #{odvae_forward.1} parent=1 // pred_check
      _
    $region59: #{odvae_forward.1} parent=1 // pred_check_branch
      %173 = sbr.rel (0) target = $region61
    $region60: #{odvae_forward.1} parent=1 // pred_region
      %s175 = ssub.s32 55296, 55296
      %176 = vsyncadd [#allocation21], %s175
      %s177 = sshll.u32 [#allocation22], 4
      %s178 = int_to_ptr.vmem [resolvable:$true] %s177
      %183 = dma.hbm_to_vmem [thread:$0]  %s14, 55296, %s178, [#allocation21], 1152, 1152, 72
    $region61: #{odvae_forward.1} parent=1 // pred_fallthru
      _
    // Predicated region
    $region62: #{odvae_forward.1} parent=1 // pred_check
      _
    $region63: #{odvae_forward.1} parent=1 // pred_check_branch
      %185 = sbr.rel (0) target = $region65
    $region64: #{odvae_forward.1} parent=1 // pred_region
      %s187 = ssub.s32 144, 144
      %188 = vsyncadd [#allocation24], %s187
      %s190 = sshll.u32 [#allocation23], 4
      %s191 = int_to_ptr.vmem [resolvable:$true] %s190
      %193 = dma.hbm_to_vmem [thread:$0]  %s15, 144, %s191, [#allocation24]
    $region65: #{odvae_forward.1} parent=1 // pred_fallthru
      _
    // Predicated region
    $region66: #{odvae_forward.1} parent=1 // pred_check
      _
    $region67: #{odvae_forward.1} parent=1 // pred_check_branch
      %195 = sbr.rel (0) target = $region69
    $region68: #{odvae_forward.1} parent=1 // pred_region
      %s197 = ssub.s32 73728, 73728
      %198 = vsyncadd [#allocation24], %s197
      %s199 = sshll.u32 [#allocation25], 4
      %s200 = int_to_ptr.vmem [resolvable:$true] %s199
      %205 = dma.hbm_to_vmem [thread:$0]  %s16, 73728, %s200, [#allocation24], 512, 512, 32
    $region69: #{odvae_forward.1} parent=1 // pred_fallthru
      _
    // Predicated region
    $region70: #{odvae_forward.1} parent=1 // pred_check
      _
    $region71: #{odvae_forward.1} parent=1 // pred_check_branch
      %207 = sbr.rel (0) target = $region73
    $region72: #{odvae_forward.1} parent=1 // pred_region
      %s209 = ssub.s32 64, 64
      %210 = vsyncadd [#allocation27], %s209
      %s212 = sshll.u32 [#allocation26], 4
      %s213 = int_to_ptr.vmem [resolvable:$true] %s212
      %215 = dma.hbm_to_vmem [thread:$0]  %s17, 64, %s213, [#allocation27]
    $region73: #{odvae_forward.1} parent=1 // pred_fallthru
      _
    // Predicated region
    $region74: #{odvae_forward.1} parent=1 // pred_check
      _
    $region75: #{odvae_forward.1} parent=1 // pred_check_branch
      %217 = sbr.rel (0) target = $region77
    $region76: #{odvae_forward.1} parent=1 // pred_region
      %s219 = ssub.s32 16384, 16384
      %220 = vsyncadd [#allocation27], %s219
      %s221 = sshll.u32 [#allocation28], 4
      %s222 = int_to_ptr.vmem [resolvable:$true] %s221
      %227 = dma.hbm_to_vmem [thread:$0]  %s18, 16384, %s222, [#allocation27], 256, 256, 16
    $region77: #{odvae_forward.1} parent=1 // pred_fallthru
      _
    // Predicated region
    $region78: #{odvae_forward.1} parent=1 // pred_check
      _
    $region79: #{odvae_forward.1} parent=1 // pred_check_branch
      %229 = sbr.rel (0) target = $region81
    $region80: #{odvae_forward.1} parent=1 // pred_region
      %s231 = ssub.s32 32, 32
      %232 = vsyncadd [#allocation30], %s231
      %s234 = sshll.u32 [#allocation29], 4
      %s235 = int_to_ptr.vmem [resolvable:$true] %s234
      %237 = dma.hbm_to_vmem [thread:$0]  %s19, 32, %s235, [#allocation30]
    $region81: #{odvae_forward.1} parent=1 // pred_fallthru
      _
    // Predicated region
    $region82: #{odvae_forward.1} parent=1 // pred_check
      _
    $region83: #{odvae_forward.1} parent=1 // pred_check_branch
      %239 = sbr.rel (0) target = $region85
    $region84: #{odvae_forward.1} parent=1 // pred_region
      %240 = dma.done [#allocation3], 4096
    $region85: #{odvae_forward.1} parent=1 // pred_fallthru
      _
    // Predicated region
    $region86: #{odvae_forward.1} parent=1 // pred_check
      _
    $region87: #{odvae_forward.1} parent=1 // pred_check_branch
      %242 = sbr.rel (0) target = $region89
    $region88: #{odvae_forward.1} parent=1 // pred_region
      %243 = dma.done [#allocation6], 16
    $region89: #{odvae_forward.1} parent=1 // pred_fallthru
      _
    // Predicated region
    $region90: #{odvae_forward.1} parent=1 // pred_check
      _
    $region91: #{odvae_forward.1} parent=1 // pred_check_branch
      %245 = sbr.rel (0) target = $region93
    $region92: #{odvae_forward.1} parent=1 // pred_region
      %246 = dma.done [#allocation6], 2048
    $region93: #{odvae_forward.1} parent=1 // pred_fallthru
      _
    // Predicated region
    $region94: #{odvae_forward.1} parent=1 // pred_check
      _
    $region95: #{odvae_forward.1} parent=1 // pred_check_branch
      %248 = sbr.rel (0) target = $region97
    $region96: #{odvae_forward.1} parent=1 // pred_region
      %249 = dma.done [#allocation9], 16
    $region97: #{odvae_forward.1} parent=1 // pred_fallthru
      _
    // Predicated region
    $region98: #{odvae_forward.1} parent=1 // pred_check
      _
    $region99: #{odvae_forward.1} parent=1 // pred_check_branch
      %251 = sbr.rel (0) target = $region101
    $region100: #{odvae_forward.1} parent=1 // pred_region
      %252 = dma.done [#allocation9], 2048
    $region101: #{odvae_forward.1} parent=1 // pred_fallthru
      _
    // Predicated region
    $region102: #{odvae_forward.1} parent=1 // pred_check
      _
    $region103: #{odvae_forward.1} parent=1 // pred_check_branch
      %254 = sbr.rel (0) target = $region105
    $region104: #{odvae_forward.1} parent=1 // pred_region
      %255 = dma.done [#allocation12], 16
    $region105: #{odvae_forward.1} parent=1 // pred_fallthru
      _
    // Predicated region
    $region106: #{odvae_forward.1} parent=1 // pred_check
      _
    $region107: #{odvae_forward.1} parent=1 // pred_check_branch
      %257 = sbr.rel (0) target = $region109
    $region108: #{odvae_forward.1} parent=1 // pred_region
      %258 = dma.done [#allocation12], 2048
    $region109: #{odvae_forward.1} parent=1 // pred_fallthru
      _
    // Predicated region
    $region110: #{odvae_forward.1} parent=1 // pred_check
      _
    $region111: #{odvae_forward.1} parent=1 // pred_check_branch
      %260 = sbr.rel (0) target = $region113
    $region112: #{odvae_forward.1} parent=1 // pred_region
      %261 = dma.done [#allocation15], 16
    $region113: #{odvae_forward.1} parent=1 // pred_fallthru
      _
    // Predicated region
    $region114: #{odvae_forward.1} parent=1 // pred_check
      _
    $region115: #{odvae_forward.1} parent=1 // pred_check_branch
      %263 = sbr.rel (0) target = $region117
    $region116: #{odvae_forward.1} parent=1 // pred_region
      %264 = dma.done [#allocation15], 4096
    $region117: #{odvae_forward.1} parent=1 // pred_fallthru
      _
    // Predicated region
    $region118: #{odvae_forward.1} parent=1 // pred_check
      _
    $region119: #{odvae_forward.1} parent=1 // pred_check_branch
      %266 = sbr.rel (0) target = $region121
    $region120: #{odvae_forward.1} parent=1 // pred_region
      %267 = dma.done [#allocation18], 32
    $region121: #{odvae_forward.1} parent=1 // pred_fallthru
      _
    // Predicated region
    $region122: #{odvae_forward.1} parent=1 // pred_check
      _
    $region123: #{odvae_forward.1} parent=1 // pred_check_branch
      %269 = sbr.rel (0) target = $region125
    $region124: #{odvae_forward.1} parent=1 // pred_region
      %270 = dma.done [#allocation18], 6144
    $region125: #{odvae_forward.1} parent=1 // pred_fallthru
      _
    // Predicated region
    $region126: #{odvae_forward.1} parent=1 // pred_check
      _
    $region127: #{odvae_forward.1} parent=1 // pred_check_branch
      %272 = sbr.rel (0) target = $region129
    $region128: #{odvae_forward.1} parent=1 // pred_region
      %273 = dma.done [#allocation21], 48
    $region129: #{odvae_forward.1} parent=1 // pred_fallthru
      _
    // Predicated region
    $region130: #{odvae_forward.1} parent=1 // pred_check
      _
    $region131: #{odvae_forward.1} parent=1 // pred_check_branch
      %275 = sbr.rel (0) target = $region133
    $region132: #{odvae_forward.1} parent=1 // pred_region
      %276 = dma.done [#allocation21], 55296
    $region133: #{odvae_forward.1} parent=1 // pred_fallthru
      _
    // Predicated region
    $region134: #{odvae_forward.1} parent=1 // pred_check
      _
    $region135: #{odvae_forward.1} parent=1 // pred_check_branch
      %278 = sbr.rel (0) target = $region137
    $region136: #{odvae_forward.1} parent=1 // pred_region
      %279 = dma.done [#allocation24], 144
    $region137: #{odvae_forward.1} parent=1 // pred_fallthru
      _
    // Predicated region
    $region138: #{odvae_forward.1} parent=1 // pred_check
      _
    $region139: #{odvae_forward.1} parent=1 // pred_check_branch
      %281 = sbr.rel (0) target = $region141
    $region140: #{odvae_forward.1} parent=1 // pred_region
      %282 = dma.done [#allocation24], 73728
    $region141: #{odvae_forward.1} parent=1 // pred_fallthru
      _
    // Predicated region
    $region142: #{odvae_forward.1} parent=1 // pred_check
      _
    $region143: #{odvae_forward.1} parent=1 // pred_check_branch
      %284 = sbr.rel (0) target = $region145
    $region144: #{odvae_forward.1} parent=1 // pred_region
      %285 = dma.done [#allocation27], 64
    $region145: #{odvae_forward.1} parent=1 // pred_fallthru
      _
    // Predicated region
    $region146: #{odvae_forward.1} parent=1 // pred_check
      _
    $region147: #{odvae_forward.1} parent=1 // pred_check_branch
      %287 = sbr.rel (0) target = $region149
    $region148: #{odvae_forward.1} parent=1 // pred_region
      %288 = dma.done [#allocation27], 16384
    $region149: #{odvae_forward.1} parent=1 // pred_fallthru
      _
    // Predicated region
    $region150: #{odvae_forward.1} parent=1 // pred_check
      _
    $region151: #{odvae_forward.1} parent=1 // pred_check_branch
      %290 = sbr.rel (0) target = $region153
    $region152: #{odvae_forward.1} parent=1 // pred_region
      %291 = dma.done [#allocation30], 32
    $region153: #{odvae_forward.1} parent=1 // pred_fallthru
      _
    %v292 = vld [vmem:[%s0] sm:$0xf]
    %v293 = vld [vmem:[#allocation2] sm:$0xff]
    %v294 = vld [vmem:[#allocation2 + $0x8] sm:$0xff]
    %v295 = vld [vmem:[#allocation2 + $0x10] sm:$0xff]
    %v296 = vld [vmem:[#allocation2 + $0x18] sm:$0xff]
    %v297 = vld [vmem:[#allocation2 + $0x20] sm:$0xff]
    %v298 = vld [vmem:[#allocation2 + $0x28] sm:$0xff]
    %v299 = vld [vmem:[#allocation2 + $0x30] sm:$0xff]
    %v300 = vld [vmem:[#allocation2 + $0x38] sm:$0xff]
    %v301 = vld [vmem:[#allocation2 + $0x40] sm:$0xff]
    %v302 = vld [vmem:[#allocation2 + $0x48] sm:$0xff]
    %v303 = vld [vmem:[#allocation2 + $0x50] sm:$0xff]
    %v304 = vld [vmem:[#allocation2 + $0x58] sm:$0xff]
    %v305 = vld [vmem:[#allocation2 + $0x60] sm:$0xff]
    %v306 = vld [vmem:[#allocation2 + $0x68] sm:$0xff]
    %v307 = vld [vmem:[#allocation2 + $0x70] sm:$0xff]
    %v308 = vld [vmem:[#allocation2 + $0x78] sm:$0xff]
    %v309 = vld [vmem:[#allocation2 + $0x80] sm:$0xff]
    %v310 = vld [vmem:[#allocation2 + $0x88] sm:$0xff]
    %v311 = vld [vmem:[#allocation2 + $0x90] sm:$0xff]
    %v312 = vld [vmem:[#allocation2 + $0x98] sm:$0xff]
    %v313 = vld [vmem:[#allocation2 + $0xa0] sm:$0xff]
    %v314 = vld [vmem:[#allocation2 + $0xa8] sm:$0xff]
    %v315 = vld [vmem:[#allocation2 + $0xb0] sm:$0xff]
    %v316 = vld [vmem:[#allocation2 + $0xb8] sm:$0xff]
    %v317 = vld [vmem:[#allocation2 + $0xc0] sm:$0xff]
    %v318 = vld [vmem:[#allocation2 + $0xc8] sm:$0xff]
    %v319 = vld [vmem:[#allocation2 + $0xd0] sm:$0xff]
    %v320 = vld [vmem:[#allocation2 + $0xd8] sm:$0xff]
    %v321 = vld [vmem:[#allocation2 + $0xe0] sm:$0xff]
    %v322 = vld [vmem:[#allocation2 + $0xe8] sm:$0xff]
    %v323 = vld [vmem:[#allocation2 + $0xf0] sm:$0xff]
    %v324 = vld [vmem:[#allocation2 + $0xf8] sm:$0xff]
    %v325 = vld [vmem:[#allocation5] sm:$0x1]
    %v327 = vlaneseq
    %v328 = vshrl.u32 %v327, 7
    %v329 = vsub.s32 0, %v328
    %v330 = vrot.slane %v325, %v329
    %v334 = vunpack.c.l.s4 1983009808
    %v335 = vunpack.c.0.s8 %v334
    %v336 = vlaneseq
    %v337 = vshrl.u32 %v336, 7
    %v338 = vsub.s32 %v335, %v337
    %v339 = vrot.slane %v292, %v338
    %v340 = vcombine.high %v339, %v339
    %343 = vmatprep.subr.mxu0 0.0
    %344 = vmatpush1.msra.mxu0 %v293
    %345 = vmatprep.subr.mxu0 0.0
    %346 = vmatpush1.msra.mxu0 %v294
    %347 = vmatprep.subr.mxu0 0.0
    %348 = vmatpush1.msra.mxu0 %v295
    %349 = vmatprep.subr.mxu0 0.0
    %350 = vmatpush1.msra.mxu0 %v296
    %351 = vmatprep.subr.mxu0 0.0
    %352 = vmatpush1.msra.mxu0 %v297
    %353 = vmatprep.subr.mxu0 0.0
    %354 = vmatpush1.msra.mxu0 %v298
    %355 = vmatprep.subr.mxu0 0.0
    %356 = vmatpush1.msra.mxu0 %v299
    %357 = vmatprep.subr.mxu0 0.0
    %358 = vmatpush1.msra.mxu0 %v300
    %359 = vmatprep.subr.mxu0 0.0
    %360 = vmatpush1.msra.mxu0 %v301
    %361 = vmatprep.subr.mxu0 0.0
    %362 = vmatpush1.msra.mxu0 %v302
    %363 = vmatprep.subr.mxu0 0.0
    %364 = vmatpush1.msra.mxu0 %v303
    %365 = vmatprep.subr.mxu0 0.0
    %366 = vmatpush1.msra.mxu0 %v304
    %367 = vmatprep.subr.mxu0 0.0
    %368 = vmatpush1.msra.mxu0 %v305
    %369 = vmatprep.subr.mxu0 0.0
    %370 = vmatpush1.msra.mxu0 %v306
    %371 = vmatprep.subr.mxu0 0.0
    %372 = vmatpush1.msra.mxu0 %v307
    %373 = vmatprep.subr.mxu0 0.0
    %374 = vmatpush1.msra.mxu0 %v308
    %375 = vmatprep.subr.mxu0 0.0
    %376 = vmatpush1.msra.mxu0 %v309
    %377 = vmatprep.subr.mxu0 0.0
    %378 = vmatpush1.msra.mxu0 %v310
    %379 = vmatprep.subr.mxu0 0.0
    %380 = vmatpush1.msra.mxu0 %v311
    %381 = vmatprep.subr.mxu0 0.0
    %382 = vmatpush1.msra.mxu0 %v312
    %383 = vmatprep.subr.mxu0 0.0
    %384 = vmatpush1.msra.mxu0 %v313
    %385 = vmatprep.subr.mxu0 0.0
    %386 = vmatpush1.msra.mxu0 %v314
    %387 = vmatprep.subr.mxu0 0.0
    %388 = vmatpush1.msra.mxu0 %v315
    %389 = vmatprep.subr.mxu0 0.0
    %390 = vmatpush1.msra.mxu0 %v316
    %391 = vmatprep.subr.mxu0 0.0
    %392 = vmatpush1.msra.mxu0 %v317
    %393 = vmatprep.subr.mxu0 0.0
    %394 = vmatpush1.msra.mxu0 %v318
    %395 = vmatprep.subr.mxu0 0.0
    %396 = vmatpush1.msra.mxu0 %v319
    %397 = vmatprep.subr.mxu0 0.0
    %398 = vmatpush1.msra.mxu0 %v320
    %399 = vmatprep.subr.mxu0 0.0
    %400 = vmatpush1.msra.mxu0 %v321
    %401 = vmatprep.subr.mxu0 0.0
    %402 = vmatpush1.msra.mxu0 %v322
    %403 = vmatprep.subr.mxu0 0.0
    %404 = vmatpush1.msra.mxu0 %v323
    %405 = vmatprep.subr.mxu0 0.0
    %406 = vmatpush1.msra.mxu0 %v324
    %407 = vmatprep.mubr.f32.mxu0 %v340
    %408 = vmatmul.mubr.f32.gmra.mrb[0].mxu0 %v339
    %v409 = vpop.f32.mrb[0].mxu0
    %v410 = vadd.f32 %v330, %v409
    %v411 = vpop.f32.mrb[0].mxu0
    %412 = vdwg.mxu0
    %v413 = vmul.f32 %v410, 0.01
    %v414 = vmax.f32 %v410, %v413
    %v415 = vld [vmem:[#allocation7] sm:$0xff]
    %v416 = vld [vmem:[#allocation7 + $0x8] sm:$0xff]
    %v417 = vld [vmem:[#allocation7 + $0x10] sm:$0xff]
    %v418 = vld [vmem:[#allocation7 + $0x18] sm:$0xff]
    %v419 = vld [vmem:[#allocation7 + $0x20] sm:$0xff]
    %v420 = vld [vmem:[#allocation7 + $0x28] sm:$0xff]
    %v421 = vld [vmem:[#allocation7 + $0x30] sm:$0xff]
    %v422 = vld [vmem:[#allocation7 + $0x38] sm:$0xff]
    %v423 = vld [vmem:[#allocation7 + $0x40] sm:$0xff]
    %v424 = vld [vmem:[#allocation7 + $0x48] sm:$0xff]
    %v425 = vld [vmem:[#allocation7 + $0x50] sm:$0xff]
    %v426 = vld [vmem:[#allocation7 + $0x58] sm:$0xff]
    %v427 = vld [vmem:[#allocation7 + $0x60] sm:$0xff]
    %v428 = vld [vmem:[#allocation7 + $0x68] sm:$0xff]
    %v429 = vld [vmem:[#allocation7 + $0x70] sm:$0xff]
    %v430 = vld [vmem:[#allocation7 + $0x78] sm:$0xff]
    %v431 = vld [vmem:[#allocation8] sm:$0x1]
    %v433 = vlaneseq
    %v434 = vshrl.u32 %v433, 7
    %v435 = vsub.s32 0, %v434
    %v436 = vrot.slane %v431, %v435
    %438 = vmatprep.subr.mxu0 0.0
    %439 = vmatpush1.msra.mxu0 %v415
    %440 = vmatprep.subr.mxu0 0.0
    %441 = vmatpush1.msra.mxu0 %v416
    %442 = vmatprep.subr.mxu0 0.0
    %443 = vmatpush1.msra.mxu0 %v417
    %444 = vmatprep.subr.mxu0 0.0
    %445 = vmatpush1.msra.mxu0 %v418
    %446 = vmatprep.subr.mxu0 0.0
    %447 = vmatpush1.msra.mxu0 %v419
    %448 = vmatprep.subr.mxu0 0.0
    %449 = vmatpush1.msra.mxu0 %v420
    %450 = vmatprep.subr.mxu0 0.0
    %451 = vmatpush1.msra.mxu0 %v421
    %452 = vmatprep.subr.mxu0 0.0
    %453 = vmatpush1.msra.mxu0 %v422
    %454 = vmatprep.subr.mxu0 0.0
    %455 = vmatpush1.msra.mxu0 %v423
    %456 = vmatprep.subr.mxu0 0.0
    %457 = vmatpush1.msra.mxu0 %v424
    %458 = vmatprep.subr.mxu0 0.0
    %459 = vmatpush1.msra.mxu0 %v425
    %460 = vmatprep.subr.mxu0 0.0
    %461 = vmatpush1.msra.mxu0 %v426
    %462 = vmatprep.subr.mxu0 0.0
    %463 = vmatpush1.msra.mxu0 %v427
    %464 = vmatprep.subr.mxu0 0.0
    %465 = vmatpush1.msra.mxu0 %v428
    %466 = vmatprep.subr.mxu0 0.0
    %467 = vmatpush1.msra.mxu0 %v429
    %468 = vmatprep.subr.mxu0 0.0
    %469 = vmatpush1.msra.mxu0 %v430
    %470 = vmatprep.subr.mxu0 0.0
    %471 = vmatpush1.msra.mxu0 0.0
    %472 = vmatprep.subr.mxu0 0.0
    %473 = vmatpush1.msra.mxu0 0.0
    %474 = vmatprep.subr.mxu0 0.0
    %475 = vmatpush1.msra.mxu0 0.0
    %476 = vmatprep.subr.mxu0 0.0
    %477 = vmatpush1.msra.mxu0 0.0
    %478 = vmatprep.subr.mxu0 0.0
    %479 = vmatpush1.msra.mxu0 0.0
    %480 = vmatprep.subr.mxu0 0.0
    %481 = vmatpush1.msra.mxu0 0.0
    %482 = vmatprep.subr.mxu0 0.0
    %483 = vmatpush1.msra.mxu0 0.0
    %484 = vmatprep.subr.mxu0 0.0
    %485 = vmatpush1.msra.mxu0 0.0
    %486 = vmatprep.subr.mxu0 0.0
    %487 = vmatpush1.msra.mxu0 0.0
    %488 = vmatprep.subr.mxu0 0.0
    %489 = vmatpush1.msra.mxu0 0.0
    %490 = vmatprep.subr.mxu0 0.0
    %491 = vmatpush1.msra.mxu0 0.0
    %492 = vmatprep.subr.mxu0 0.0
    %493 = vmatpush1.msra.mxu0 0.0
    %494 = vmatprep.subr.mxu0 0.0
    %495 = vmatpush1.msra.mxu0 0.0
    %496 = vmatprep.subr.mxu0 0.0
    %497 = vmatpush1.msra.mxu0 0.0
    %498 = vmatprep.subr.mxu0 0.0
    %499 = vmatpush1.msra.mxu0 0.0
    %500 = vmatprep.subr.mxu0 0.0
    %501 = vmatpush1.msra.mxu0 0.0
    %502 = vmatprep.mubr.f32.mxu0 0.0
    %503 = vmatmul.mubr.f32.gmra.mrb[0].mxu0 %v414
    %v504 = vpop.f32.mrb[0].mxu0
    %v505 = vadd.f32 %v436, %v504
    %v506 = vpop.f32.mrb[0].mxu0
    %507 = vdwg.mxu0
    %v508 = vmul.f32 %v505, 0.01
    %v509 = vmax.f32 %v505, %v508
    %v510 = vld [vmem:[#allocation10] sm:$0xff]
    %v511 = vld [vmem:[#allocation10 + $0x8] sm:$0xff]
    %v512 = vld [vmem:[#allocation10 + $0x10] sm:$0xff]
    %v513 = vld [vmem:[#allocation10 + $0x18] sm:$0xff]
    %v514 = vld [vmem:[#allocation10 + $0x20] sm:$0xff]
    %v515 = vld [vmem:[#allocation10 + $0x28] sm:$0xff]
    %v516 = vld [vmem:[#allocation10 + $0x30] sm:$0xff]
    %v517 = vld [vmem:[#allocation10 + $0x38] sm:$0xff]
    %v518 = vld [vmem:[#allocation10 + $0x40] sm:$0xff]
    %v519 = vld [vmem:[#allocation10 + $0x48] sm:$0xff]
    %v520 = vld [vmem:[#allocation10 + $0x50] sm:$0xff]
    %v521 = vld [vmem:[#allocation10 + $0x58] sm:$0xff]
    %v522 = vld [vmem:[#allocation10 + $0x60] sm:$0xff]
    %v523 = vld [vmem:[#allocation10 + $0x68] sm:$0xff]
    %v524 = vld [vmem:[#allocation10 + $0x70] sm:$0xff]
    %v525 = vld [vmem:[#allocation10 + $0x78] sm:$0xff]
    %v526 = vld [vmem:[#allocation11] sm:$0x1]
    %v528 = vlaneseq
    %v529 = vshrl.u32 %v528, 7
    %v530 = vsub.s32 0, %v529
    %v531 = vrot.slane %v526, %v530
    %533 = vmatprep.subr.mxu0 0.0
    %534 = vmatpush1.msra.mxu0 %v510
    %535 = vmatprep.subr.mxu0 0.0
    %536 = vmatpush1.msra.mxu0 %v511
    %537 = vmatprep.subr.mxu0 0.0
    %538 = vmatpush1.msra.mxu0 %v512
    %539 = vmatprep.subr.mxu0 0.0
    %540 = vmatpush1.msra.mxu0 %v513
    %541 = vmatprep.subr.mxu0 0.0
    %542 = vmatpush1.msra.mxu0 %v514
    %543 = vmatprep.subr.mxu0 0.0
    %544 = vmatpush1.msra.mxu0 %v515
    %545 = vmatprep.subr.mxu0 0.0
    %546 = vmatpush1.msra.mxu0 %v516
    %547 = vmatprep.subr.mxu0 0.0
    %548 = vmatpush1.msra.mxu0 %v517
    %549 = vmatprep.subr.mxu0 0.0
    %550 = vmatpush1.msra.mxu0 %v518
    %551 = vmatprep.subr.mxu0 0.0
    %552 = vmatpush1.msra.mxu0 %v519
    %553 = vmatprep.subr.mxu0 0.0
    %554 = vmatpush1.msra.mxu0 %v520
    %555 = vmatprep.subr.mxu0 0.0
    %556 = vmatpush1.msra.mxu0 %v521
    %557 = vmatprep.subr.mxu0 0.0
    %558 = vmatpush1.msra.mxu0 %v522
    %559 = vmatprep.subr.mxu0 0.0
    %560 = vmatpush1.msra.mxu0 %v523
    %561 = vmatprep.subr.mxu0 0.0
    %562 = vmatpush1.msra.mxu0 %v524
    %563 = vmatprep.subr.mxu0 0.0
    %564 = vmatpush1.msra.mxu0 %v525
    %565 = vmatprep.subr.mxu0 0.0
    %566 = vmatpush1.msra.mxu0 0.0
    %567 = vmatprep.subr.mxu0 0.0
    %568 = vmatpush1.msra.mxu0 0.0
    %569 = vmatprep.subr.mxu0 0.0
    %570 = vmatpush1.msra.mxu0 0.0
    %571 = vmatprep.subr.mxu0 0.0
    %572 = vmatpush1.msra.mxu0 0.0
    %573 = vmatprep.subr.mxu0 0.0
    %574 = vmatpush1.msra.mxu0 0.0
    %575 = vmatprep.subr.mxu0 0.0
    %576 = vmatpush1.msra.mxu0 0.0
    %577 = vmatprep.subr.mxu0 0.0
    %578 = vmatpush1.msra.mxu0 0.0
    %579 = vmatprep.subr.mxu0 0.0
    %580 = vmatpush1.msra.mxu0 0.0
    %581 = vmatprep.subr.mxu0 0.0
    %582 = vmatpush1.msra.mxu0 0.0
    %583 = vmatprep.subr.mxu0 0.0
    %584 = vmatpush1.msra.mxu0 0.0
    %585 = vmatprep.subr.mxu0 0.0
    %586 = vmatpush1.msra.mxu0 0.0
    %587 = vmatprep.subr.mxu0 0.0
    %588 = vmatpush1.msra.mxu0 0.0
    %589 = vmatprep.subr.mxu0 0.0
    %590 = vmatpush1.msra.mxu0 0.0
    %591 = vmatprep.subr.mxu0 0.0
    %592 = vmatpush1.msra.mxu0 0.0
    %593 = vmatprep.subr.mxu0 0.0
    %594 = vmatpush1.msra.mxu0 0.0
    %595 = vmatprep.subr.mxu0 0.0
    %596 = vmatpush1.msra.mxu0 0.0
    %597 = vmatprep.mubr.f32.mxu0 0.0
    %598 = vmatmul.mubr.f32.gmra.mrb[0].mxu0 %v509
    %v599 = vpop.f32.mrb[0].mxu0
    %v600 = vadd.f32 %v531, %v599
    %v601 = vpop.f32.mrb[0].mxu0
    %602 = vdwg.mxu0
    %v603 = vmul.f32 %v600, 0.01
    %v604 = vmax.f32 %v600, %v603
    %v605 = vld [vmem:[#allocation13] sm:$0xff]
    %v606 = vld [vmem:[#allocation13 + $0x8] sm:$0xff]
    %v607 = vld [vmem:[#allocation13 + $0x10] sm:$0xff]
    %v608 = vld [vmem:[#allocation13 + $0x18] sm:$0xff]
    %v609 = vld [vmem:[#allocation13 + $0x20] sm:$0xff]
    %v610 = vld [vmem:[#allocation13 + $0x28] sm:$0xff]
    %v611 = vld [vmem:[#allocation13 + $0x30] sm:$0xff]
    %v612 = vld [vmem:[#allocation13 + $0x38] sm:$0xff]
    %v613 = vld [vmem:[#allocation13 + $0x40] sm:$0xff]
    %v614 = vld [vmem:[#allocation13 + $0x48] sm:$0xff]
    %v615 = vld [vmem:[#allocation13 + $0x50] sm:$0xff]
    %v616 = vld [vmem:[#allocation13 + $0x58] sm:$0xff]
    %v617 = vld [vmem:[#allocation13 + $0x60] sm:$0xff]
    %v618 = vld [vmem:[#allocation13 + $0x68] sm:$0xff]
    %v619 = vld [vmem:[#allocation13 + $0x70] sm:$0xff]
    %v620 = vld [vmem:[#allocation13 + $0x78] sm:$0xff]
    %v621 = vld [vmem:[#allocation14] sm:$0x1]
    %v623 = vlaneseq
    %v624 = vshrl.u32 %v623, 7
    %v625 = vsub.s32 0, %v624
    %v626 = vrot.slane %v621, %v625
    %628 = vmatprep.subr.mxu0 0.0
    %629 = vmatpush1.msra.mxu0 %v605
    %630 = vmatprep.subr.mxu0 0.0
    %631 = vmatpush1.msra.mxu0 %v606
    %632 = vmatprep.subr.mxu0 0.0
    %633 = vmatpush1.msra.mxu0 %v607
    %634 = vmatprep.subr.mxu0 0.0
    %635 = vmatpush1.msra.mxu0 %v608
    %636 = vmatprep.subr.mxu0 0.0
    %637 = vmatpush1.msra.mxu0 %v609
    %638 = vmatprep.subr.mxu0 0.0
    %639 = vmatpush1.msra.mxu0 %v610
    %640 = vmatprep.subr.mxu0 0.0
    %641 = vmatpush1.msra.mxu0 %v611
    %642 = vmatprep.subr.mxu0 0.0
    %643 = vmatpush1.msra.mxu0 %v612
    %644 = vmatprep.subr.mxu0 0.0
    %645 = vmatpush1.msra.mxu0 %v613
    %646 = vmatprep.subr.mxu0 0.0
    %647 = vmatpush1.msra.mxu0 %v614
    %648 = vmatprep.subr.mxu0 0.0
    %649 = vmatpush1.msra.mxu0 %v615
    %650 = vmatprep.subr.mxu0 0.0
    %651 = vmatpush1.msra.mxu0 %v616
    %652 = vmatprep.subr.mxu0 0.0
    %653 = vmatpush1.msra.mxu0 %v617
    %654 = vmatprep.subr.mxu0 0.0
    %655 = vmatpush1.msra.mxu0 %v618
    %656 = vmatprep.subr.mxu0 0.0
    %657 = vmatpush1.msra.mxu0 %v619
    %658 = vmatprep.subr.mxu0 0.0
    %659 = vmatpush1.msra.mxu0 %v620
    %660 = vmatprep.subr.mxu0 0.0
    %661 = vmatpush1.msra.mxu0 0.0
    %662 = vmatprep.subr.mxu0 0.0
    %663 = vmatpush1.msra.mxu0 0.0
    %664 = vmatprep.subr.mxu0 0.0
    %665 = vmatpush1.msra.mxu0 0.0
    %666 = vmatprep.subr.mxu0 0.0
    %667 = vmatpush1.msra.mxu0 0.0
    %668 = vmatprep.subr.mxu0 0.0
    %669 = vmatpush1.msra.mxu0 0.0
    %670 = vmatprep.subr.mxu0 0.0
    %671 = vmatpush1.msra.mxu0 0.0
    %672 = vmatprep.subr.mxu0 0.0
    %673 = vmatpush1.msra.mxu0 0.0
    %674 = vmatprep.subr.mxu0 0.0
    %675 = vmatpush1.msra.mxu0 0.0
    %676 = vmatprep.subr.mxu0 0.0
    %677 = vmatpush1.msra.mxu0 0.0
    %678 = vmatprep.subr.mxu0 0.0
    %679 = vmatpush1.msra.mxu0 0.0
    %680 = vmatprep.subr.mxu0 0.0
    %681 = vmatpush1.msra.mxu0 0.0
    %682 = vmatprep.subr.mxu0 0.0
    %683 = vmatpush1.msra.mxu0 0.0
    %684 = vmatprep.subr.mxu0 0.0
    %685 = vmatpush1.msra.mxu0 0.0
    %686 = vmatprep.subr.mxu0 0.0
    %687 = vmatpush1.msra.mxu0 0.0
    %688 = vmatprep.subr.mxu0 0.0
    %689 = vmatpush1.msra.mxu0 0.0
    %690 = vmatprep.subr.mxu0 0.0
    %691 = vmatpush1.msra.mxu0 0.0
    %692 = vmatprep.mubr.f32.mxu0 0.0
    %693 = vmatmul.mubr.f32.gmra.mrb[0].mxu0 %v604
    %v694 = vpop.f32.mrb[0].mxu0
    %v695 = vadd.f32 %v626, %v694
    %v696 = vpop.f32.mrb[0].mxu0
    %697 = vdwg.mxu0
    %v698 = vld [vmem:[#allocation16] sm:$0xff]
    %v699 = vld [vmem:[#allocation16 + $0x8] sm:$0xff]
    %v700 = vld [vmem:[#allocation16 + $0x10] sm:$0xff]
    %v701 = vld [vmem:[#allocation16 + $0x18] sm:$0xff]
    %v702 = vld [vmem:[#allocation16 + $0x20] sm:$0xff]
    %v703 = vld [vmem:[#allocation16 + $0x28] sm:$0xff]
    %v704 = vld [vmem:[#allocation16 + $0x30] sm:$0xff]
    %v705 = vld [vmem:[#allocation16 + $0x38] sm:$0xff]
    %v706 = vld [vmem:[#allocation16 + $0x40] sm:$0xff]
    %v707 = vld [vmem:[#allocation16 + $0x48] sm:$0xff]
    %v708 = vld [vmem:[#allocation16 + $0x50] sm:$0xff]
    %v709 = vld [vmem:[#allocation16 + $0x58] sm:$0xff]
    %v710 = vld [vmem:[#allocation16 + $0x60] sm:$0xff]
    %v711 = vld [vmem:[#allocation16 + $0x68] sm:$0xff]
    %v712 = vld [vmem:[#allocation16 + $0x70] sm:$0xff]
    %v713 = vld [vmem:[#allocation16 + $0x78] sm:$0xff]
    %v714 = vld [vmem:[#allocation16 + $0x80] sm:$0xff]
    %v715 = vld [vmem:[#allocation16 + $0x88] sm:$0xff]
    %v716 = vld [vmem:[#allocation16 + $0x90] sm:$0xff]
    %v717 = vld [vmem:[#allocation16 + $0x98] sm:$0xff]
    %v718 = vld [vmem:[#allocation16 + $0xa0] sm:$0xff]
    %v719 = vld [vmem:[#allocation16 + $0xa8] sm:$0xff]
    %v720 = vld [vmem:[#allocation16 + $0xb0] sm:$0xff]
    %v721 = vld [vmem:[#allocation16 + $0xb8] sm:$0xff]
    %v722 = vld [vmem:[#allocation16 + $0xc0] sm:$0xff]
    %v723 = vld [vmem:[#allocation16 + $0xc8] sm:$0xff]
    %v724 = vld [vmem:[#allocation16 + $0xd0] sm:$0xff]
    %v725 = vld [vmem:[#allocation16 + $0xd8] sm:$0xff]
    %v726 = vld [vmem:[#allocation16 + $0xe0] sm:$0xff]
    %v727 = vld [vmem:[#allocation16 + $0xe8] sm:$0xff]
    %v728 = vld [vmem:[#allocation16 + $0xf0] sm:$0xff]
    %v729 = vld [vmem:[#allocation16 + $0xf8] sm:$0xff]
    %v730 = vld [vmem:[#allocation17] sm:$0x3]
    %v732 = vlaneseq
    %v733 = vshrl.u32 %v732, 7
    %v734 = vsub.s32 0, %v733
    %v735 = vrot.slane %v730, %v734
    %v736 = vlaneseq
    %v737 = vshrl.u32 %v736, 7
    %v738 = vsub.s32 1, %v737
    %v739 = vrot.slane %v730, %v738
    %742 = vmatprep.subr.mxu0 %v699
    %743 = vmatpush1.msra.mxu0 %v698
    %744 = vmatprep.subr.mxu0 %v701
    %745 = vmatpush1.msra.mxu0 %v700
    %746 = vmatprep.subr.mxu0 %v703
    %747 = vmatpush1.msra.mxu0 %v702
    %748 = vmatprep.subr.mxu0 %v705
    %749 = vmatpush1.msra.mxu0 %v704
    %750 = vmatprep.subr.mxu0 %v707
    %751 = vmatpush1.msra.mxu0 %v706
    %752 = vmatprep.subr.mxu0 %v709
    %753 = vmatpush1.msra.mxu0 %v708
    %754 = vmatprep.subr.mxu0 %v711
    %755 = vmatpush1.msra.mxu0 %v710
    %756 = vmatprep.subr.mxu0 %v713
    %757 = vmatpush1.msra.mxu0 %v712
    %758 = vmatprep.subr.mxu0 %v715
    %759 = vmatpush1.msra.mxu0 %v714
    %760 = vmatprep.subr.mxu0 %v717
    %761 = vmatpush1.msra.mxu0 %v716
    %762 = vmatprep.subr.mxu0 %v719
    %763 = vmatpush1.msra.mxu0 %v718
    %764 = vmatprep.subr.mxu0 %v721
    %765 = vmatpush1.msra.mxu0 %v720
    %766 = vmatprep.subr.mxu0 %v723
    %767 = vmatpush1.msra.mxu0 %v722
    %768 = vmatprep.subr.mxu0 %v725
    %769 = vmatpush1.msra.mxu0 %v724
    %770 = vmatprep.subr.mxu0 %v727
    %771 = vmatpush1.msra.mxu0 %v726
    %772 = vmatprep.subr.mxu0 %v729
    %773 = vmatpush1.msra.mxu0 %v728
    %774 = vmatprep.subr.mxu0 0.0
    %775 = vmatpush1.msra.mxu0 0.0
    %776 = vmatprep.subr.mxu0 0.0
    %777 = vmatpush1.msra.mxu0 0.0
    %778 = vmatprep.subr.mxu0 0.0
    %779 = vmatpush1.msra.mxu0 0.0
    %780 = vmatprep.subr.mxu0 0.0
    %781 = vmatpush1.msra.mxu0 0.0
    %782 = vmatprep.subr.mxu0 0.0
    %783 = vmatpush1.msra.mxu0 0.0
    %784 = vmatprep.subr.mxu0 0.0
    %785 = vmatpush1.msra.mxu0 0.0
    %786 = vmatprep.subr.mxu0 0.0
    %787 = vmatpush1.msra.mxu0 0.0
    %788 = vmatprep.subr.mxu0 0.0
    %789 = vmatpush1.msra.mxu0 0.0
    %790 = vmatprep.subr.mxu0 0.0
    %791 = vmatpush1.msra.mxu0 0.0
    %792 = vmatprep.subr.mxu0 0.0
    %793 = vmatpush1.msra.mxu0 0.0
    %794 = vmatprep.subr.mxu0 0.0
    %795 = vmatpush1.msra.mxu0 0.0
    %796 = vmatprep.subr.mxu0 0.0
    %797 = vmatpush1.msra.mxu0 0.0
    %798 = vmatprep.subr.mxu0 0.0
    %799 = vmatpush1.msra.mxu0 0.0
    %800 = vmatprep.subr.mxu0 0.0
    %801 = vmatpush1.msra.mxu0 0.0
    %802 = vmatprep.subr.mxu0 0.0
    %803 = vmatpush1.msra.mxu0 0.0
    %804 = vmatprep.subr.mxu0 0.0
    %805 = vmatpush1.msra.mxu0 0.0
    %806 = vmatprep.mubr.f32.mxu0 0.0
    %807 = vmatmul.mubr.f32.gmra.mrb[0].mxu0 %v695
    %v808 = vpop.f32.mrb[0].mxu0
    %v809 = vadd.f32 %v735, %v808
    %v810 = vpop.f32.mrb[0].mxu0
    %v811 = vadd.f32 %v739, %v810
    %812 = vdwg.mxu0
    %v813 = vmul.f32 %v811, 0.5
    %v814 = vmul.f32 %v813, 1.442695
    %v815 = vpow.pop %v814
    %v816 = vld [vmem:[%s1] sm:$0x3]
    %v817 = vmul.f32 %v816, %v815
    %v818 = vadd.f32 %v809, %v817
    %v819 = vmax.f32 %v818, -1.0
    %v820 = vmin.f32 %v819, 1.0
    %v821 = vld [vmem:[#allocation19] sm:$0xff]
    %v822 = vld [vmem:[#allocation19 + $0x8] sm:$0xff]
    %v823 = vld [vmem:[#allocation19 + $0x10] sm:$0xff]
    %v824 = vld [vmem:[#allocation19 + $0x18] sm:$0xff]
    %v825 = vld [vmem:[#allocation19 + $0x20] sm:$0xff]
    %v826 = vld [vmem:[#allocation19 + $0x28] sm:$0xff]
    %v827 = vld [vmem:[#allocation19 + $0x30] sm:$0xff]
    %v828 = vld [vmem:[#allocation19 + $0x38] sm:$0xff]
    %v829 = vld [vmem:[#allocation19 + $0x40] sm:$0xff]
    %v830 = vld [vmem:[#allocation19 + $0x48] sm:$0xff]
    %v831 = vld [vmem:[#allocation19 + $0x50] sm:$0xff]
    %v832 = vld [vmem:[#allocation19 + $0x58] sm:$0xff]
    %v833 = vld [vmem:[#allocation19 + $0x60] sm:$0xff]
    %v834 = vld [vmem:[#allocation19 + $0x68] sm:$0xff]
    %v835 = vld [vmem:[#allocation19 + $0x70] sm:$0xff]
    %v836 = vld [vmem:[#allocation19 + $0x78] sm:$0xff]
    %v837 = vld [vmem:[#allocation19 + $0x80] sm:$0xff]
    %v838 = vld [vmem:[#allocation19 + $0x88] sm:$0xff]
    %v839 = vld [vmem:[#allocation19 + $0x90] sm:$0xff]
    %v840 = vld [vmem:[#allocation19 + $0x98] sm:$0xff]
    %v841 = vld [vmem:[#allocation19 + $0xa0] sm:$0xff]
    %v842 = vld [vmem:[#allocation19 + $0xa8] sm:$0xff]
    %v843 = vld [vmem:[#allocation19 + $0xb0] sm:$0xff]
    %v844 = vld [vmem:[#allocation19 + $0xb8] sm:$0xff]
    %v845 = vld [vmem:[#allocation19 + $0xc0] sm:$0xff]
    %v846 = vld [vmem:[#allocation19 + $0xc8] sm:$0xff]
    %v847 = vld [vmem:[#allocation19 + $0xd0] sm:$0xff]
    %v848 = vld [vmem:[#allocation19 + $0xd8] sm:$0xff]
    %v849 = vld [vmem:[#allocation19 + $0xe0] sm:$0xff]
    %v850 = vld [vmem:[#allocation19 + $0xe8] sm:$0xff]
    %v851 = vld [vmem:[#allocation19 + $0xf0] sm:$0xff]
    %v852 = vld [vmem:[#allocation19 + $0xf8] sm:$0xff]
    %v853 = vld [vmem:[#allocation19 + $0x100] sm:$0xff]
    %v854 = vld [vmem:[#allocation19 + $0x108] sm:$0xff]
    %v855 = vld [vmem:[#allocation19 + $0x110] sm:$0xff]
    %v856 = vld [vmem:[#allocation19 + $0x118] sm:$0xff]
    %v857 = vld [vmem:[#allocation19 + $0x120] sm:$0xff]
    %v858 = vld [vmem:[#allocation19 + $0x128] sm:$0xff]
    %v859 = vld [vmem:[#allocation19 + $0x130] sm:$0xff]
    %v860 = vld [vmem:[#allocation19 + $0x138] sm:$0xff]
    %v861 = vld [vmem:[#allocation19 + $0x140] sm:$0xff]
    %v862 = vld [vmem:[#allocation19 + $0x148] sm:$0xff]
    %v863 = vld [vmem:[#allocation19 + $0x150] sm:$0xff]
    %v864 = vld [vmem:[#allocation19 + $0x158] sm:$0xff]
    %v865 = vld [vmem:[#allocation19 + $0x160] sm:$0xff]
    %v866 = vld [vmem:[#allocation19 + $0x168] sm:$0xff]
    %v867 = vld [vmem:[#allocation19 + $0x170] sm:$0xff]
    %v868 = vld [vmem:[#allocation19 + $0x178] sm:$0xff]
    %v869 = vld [vmem:[#allocation20] sm:$0x7]
    %v871 = vlaneseq
    %v872 = vshrl.u32 %v871, 7
    %v873 = vsub.s32 0, %v872
    %v874 = vrot.slane %v869, %v873
    %v875 = vlaneseq
    %v876 = vshrl.u32 %v875, 7
    %v877 = vsub.s32 1, %v876
    %v878 = vrot.slane %v869, %v877
    %v879 = vlaneseq
    %v880 = vshrl.u32 %v879, 7
    %v881 = vsub.s32 2, %v880
    %v882 = vrot.slane %v869, %v881
    %886 = vmatprep.subr.mxu0 %v822
    %887 = vmatpush1.msra.mxu0 %v821
    %888 = vmatprep.subr.mxu0 %v825
    %889 = vmatpush1.msra.mxu0 %v824
    %890 = vmatprep.subr.mxu0 %v828
    %891 = vmatpush1.msra.mxu0 %v827
    %892 = vmatprep.subr.mxu0 %v831
    %893 = vmatpush1.msra.mxu0 %v830
    %894 = vmatprep.subr.mxu0 %v834
    %895 = vmatpush1.msra.mxu0 %v833
    %896 = vmatprep.subr.mxu0 %v837
    %897 = vmatpush1.msra.mxu0 %v836
    %898 = vmatprep.subr.mxu0 %v840
    %899 = vmatpush1.msra.mxu0 %v839
    %900 = vmatprep.subr.mxu0 %v843
    %901 = vmatpush1.msra.mxu0 %v842
    %902 = vmatprep.subr.mxu0 %v846
    %903 = vmatpush1.msra.mxu0 %v845
    %904 = vmatprep.subr.mxu0 %v849
    %905 = vmatpush1.msra.mxu0 %v848
    %906 = vmatprep.subr.mxu0 %v852
    %907 = vmatpush1.msra.mxu0 %v851
    %908 = vmatprep.subr.mxu0 %v855
    %909 = vmatpush1.msra.mxu0 %v854
    %910 = vmatprep.subr.mxu0 %v858
    %911 = vmatpush1.msra.mxu0 %v857
    %912 = vmatprep.subr.mxu0 %v861
    %913 = vmatpush1.msra.mxu0 %v860
    %914 = vmatprep.subr.mxu0 %v864
    %915 = vmatpush1.msra.mxu0 %v863
    %916 = vmatprep.subr.mxu0 %v867
    %917 = vmatpush1.msra.mxu0 %v866
    %918 = vmatprep.subr.mxu0 0.0
    %919 = vmatpush1.msra.mxu0 0.0
    %920 = vmatprep.subr.mxu0 0.0
    %921 = vmatpush1.msra.mxu0 0.0
    %922 = vmatprep.subr.mxu0 0.0
    %923 = vmatpush1.msra.mxu0 0.0
    %924 = vmatprep.subr.mxu0 0.0
    %925 = vmatpush1.msra.mxu0 0.0
    %926 = vmatprep.subr.mxu0 0.0
    %927 = vmatpush1.msra.mxu0 0.0
    %928 = vmatprep.subr.mxu0 0.0
    %929 = vmatpush1.msra.mxu0 0.0
    %930 = vmatprep.subr.mxu0 0.0
    %931 = vmatpush1.msra.mxu0 0.0
    %932 = vmatprep.subr.mxu0 0.0
    %933 = vmatpush1.msra.mxu0 0.0
    %934 = vmatprep.subr.mxu0 0.0
    %935 = vmatpush1.msra.mxu0 0.0
    %936 = vmatprep.subr.mxu0 0.0
    %937 = vmatpush1.msra.mxu0 0.0
    %938 = vmatprep.subr.mxu0 0.0
    %939 = vmatpush1.msra.mxu0 0.0
    %940 = vmatprep.subr.mxu0 0.0
    %941 = vmatpush1.msra.mxu0 0.0
    %942 = vmatprep.subr.mxu0 0.0
    %943 = vmatpush1.msra.mxu0 0.0
    %944 = vmatprep.subr.mxu0 0.0
    %945 = vmatpush1.msra.mxu0 0.0
    %946 = vmatprep.subr.mxu0 0.0
    %947 = vmatpush1.msra.mxu0 0.0
    %948 = vmatprep.subr.mxu0 0.0
    %949 = vmatpush1.msra.mxu0 0.0
    %950 = vmatprep.mubr.f32.mxu0 0.0
    %951 = vmatmul.mubr.f32.gmra.mrb[0].mxu0 %v820
    %v952 = vpop.f32.mrb[0].mxu0
    %v953 = vadd.f32 %v874, %v952
    %v954 = vpop.f32.mrb[0].mxu0
    %v955 = vadd.f32 %v878, %v954
    %956 = vdwg.mxu0
    %957 = vmatprep.subr.mxu0 0.0
    %958 = vmatpush1.msra.mxu0 %v823
    %959 = vmatprep.subr.mxu0 0.0
    %960 = vmatpush1.msra.mxu0 %v826
    %961 = vmatprep.subr.mxu0 0.0
    %962 = vmatpush1.msra.mxu0 %v829
    %963 = vmatprep.subr.mxu0 0.0
    %964 = vmatpush1.msra.mxu0 %v832
    %965 = vmatprep.subr.mxu0 0.0
    %966 = vmatpush1.msra.mxu0 %v835
    %967 = vmatprep.subr.mxu0 0.0
    %968 = vmatpush1.msra.mxu0 %v838
    %969 = vmatprep.subr.mxu0 0.0
    %970 = vmatpush1.msra.mxu0 %v841
    %971 = vmatprep.subr.mxu0 0.0
    %972 = vmatpush1.msra.mxu0 %v844
    %973 = vmatprep.subr.mxu0 0.0
    %974 = vmatpush1.msra.mxu0 %v847
    %975 = vmatprep.subr.mxu0 0.0
    %976 = vmatpush1.msra.mxu0 %v850
    %977 = vmatprep.subr.mxu0 0.0
    %978 = vmatpush1.msra.mxu0 %v853
    %979 = vmatprep.subr.mxu0 0.0
    %980 = vmatpush1.msra.mxu0 %v856
    %981 = vmatprep.subr.mxu0 0.0
    %982 = vmatpush1.msra.mxu0 %v859
    %983 = vmatprep.subr.mxu0 0.0
    %984 = vmatpush1.msra.mxu0 %v862
    %985 = vmatprep.subr.mxu0 0.0
    %986 = vmatpush1.msra.mxu0 %v865
    %987 = vmatprep.subr.mxu0 0.0
    %988 = vmatpush1.msra.mxu0 %v868
    %989 = vmatprep.subr.mxu0 0.0
    %990 = vmatpush1.msra.mxu0 0.0
    %991 = vmatprep.subr.mxu0 0.0
    %992 = vmatpush1.msra.mxu0 0.0
    %993 = vmatprep.subr.mxu0 0.0
    %994 = vmatpush1.msra.mxu0 0.0
    %995 = vmatprep.subr.mxu0 0.0
    %996 = vmatpush1.msra.mxu0 0.0
    %997 = vmatprep.subr.mxu0 0.0
    %998 = vmatpush1.msra.mxu0 0.0
    %999 = vmatprep.subr.mxu0 0.0
    %1000 = vmatpush1.msra.mxu0 0.0
    %1001 = vmatprep.subr.mxu0 0.0
    %1002 = vmatpush1.msra.mxu0 0.0
    %1003 = vmatprep.subr.mxu0 0.0
    %1004 = vmatpush1.msra.mxu0 0.0
    %1005 = vmatprep.subr.mxu0 0.0
    %1006 = vmatpush1.msra.mxu0 0.0
    %1007 = vmatprep.subr.mxu0 0.0
    %1008 = vmatpush1.msra.mxu0 0.0
    %1009 = vmatprep.subr.mxu0 0.0
    %1010 = vmatpush1.msra.mxu0 0.0
    %1011 = vmatprep.subr.mxu0 0.0
    %1012 = vmatpush1.msra.mxu0 0.0
    %1013 = vmatprep.subr.mxu0 0.0
    %1014 = vmatpush1.msra.mxu0 0.0
    %1015 = vmatprep.subr.mxu0 0.0
    %1016 = vmatpush1.msra.mxu0 0.0
    %1017 = vmatprep.subr.mxu0 0.0
    %1018 = vmatpush1.msra.mxu0 0.0
    %1019 = vmatprep.subr.mxu0 0.0
    %1020 = vmatpush1.msra.mxu0 0.0
    %1021 = vmatprep.mubr.f32.mxu0 0.0
    %1022 = vmatmul.mubr.f32.gmra.mrb[0].mxu0 %v820
    %v1023 = vpop.f32.mrb[0].mxu0
    %v1024 = vadd.f32 %v882, %v1023
    %v1025 = vpop.f32.mrb[0].mxu0
    %1026 = vdwg.mxu0
    %v1027 = vmul.f32 %v953, 0.01
    %v1028 = vmul.f32 %v955, 0.01
    %v1029 = vmul.f32 %v1024, 0.01
    %v1030 = vmax.f32 %v953, %v1027
    %v1031 = vmax.f32 %v955, %v1028
    %v1032 = vmax.f32 %v1024, %v1029
    %v1033 = vld [vmem:[#allocation22] sm:$0xff]
    %v1034 = vld [vmem:[#allocation22 + $0x8] sm:$0xff]
    %v1035 = vld [vmem:[#allocation22 + $0x10] sm:$0xff]
    %v1036 = vld [vmem:[#allocation22 + $0x18] sm:$0xff]
    %v1037 = vld [vmem:[#allocation22 + $0x20] sm:$0xff]
    %v1038 = vld [vmem:[#allocation22 + $0x28] sm:$0xff]
    %v1039 = vld [vmem:[#allocation22 + $0x30] sm:$0xff]
    %v1040 = vld [vmem:[#allocation22 + $0x38] sm:$0xff]
    %v1041 = vld [vmem:[#allocation22 + $0x40] sm:$0xff]
    %v1042 = vld [vmem:[#allocation22 + $0x48] sm:$0xff]
    %v1043 = vld [vmem:[#allocation22 + $0x50] sm:$0xff]
    %v1044 = vld [vmem:[#allocation22 + $0x58] sm:$0xff]
    %v1045 = vld [vmem:[#allocation22 + $0x60] sm:$0xff]
    %v1046 = vld [vmem:[#allocation22 + $0x68] sm:$0xff]
    %v1047 = vld [vmem:[#allocation22 + $0x70] sm:$0xff]
    %v1048 = vld [vmem:[#allocation22 + $0x78] sm:$0xff]
    %v1049 = vld [vmem:[#allocation22 + $0x80] sm:$0xff]
    %v1050 = vld [vmem:[#allocation22 + $0x88] sm:$0xff]
    %v1051 = vld [vmem:[#allocation22 + $0x90] sm:$0xff]
    %v1052 = vld [vmem:[#allocation22 + $0x98] sm:$0xff]
    %v1053 = vld [vmem:[#allocation22 + $0xa0] sm:$0xff]
    %v1054 = vld [vmem:[#allocation22 + $0xa8] sm:$0xff]
    %v1055 = vld [vmem:[#allocation22 + $0xb0] sm:$0xff]
    %v1056 = vld [vmem:[#allocation22 + $0xb8] sm:$0xff]
    %v1057 = vld [vmem:[#allocation22 + $0xc0] sm:$0xff]
    %v1058 = vld [vmem:[#allocation22 + $0xc8] sm:$0xff]
    %v1059 = vld [vmem:[#allocation22 + $0xd0] sm:$0xff]
    %v1060 = vld [vmem:[#allocation22 + $0xd8] sm:$0xff]
    %v1061 = vld [vmem:[#allocation22 + $0xe0] sm:$0xff]
    %v1062 = vld [vmem:[#allocation22 + $0xe8] sm:$0xff]
    %v1063 = vld [vmem:[#allocation22 + $0xf0] sm:$0xff]
    %v1064 = vld [vmem:[#allocation22 + $0xf8] sm:$0xff]
    %v1065 = vld [vmem:[#allocation22 + $0x100] sm:$0xff]
    %v1066 = vld [vmem:[#allocation22 + $0x108] sm:$0xff]
    %v1067 = vld [vmem:[#allocation22 + $0x110] sm:$0xff]
    %v1068 = vld [vmem:[#allocation22 + $0x118] sm:$0xff]
    %v1069 = vld [vmem:[#allocation22 + $0x120] sm:$0xff]
    %v1070 = vld [vmem:[#allocation22 + $0x128] sm:$0xff]
    %v1071 = vld [vmem:[#allocation22 + $0x130] sm:$0xff]
    %v1072 = vld [vmem:[#allocation22 + $0x138] sm:$0xff]
    %v1073 = vld [vmem:[#allocation22 + $0x140] sm:$0xff]
    %v1074 = vld [vmem:[#allocation22 + $0x148] sm:$0xff]
    %v1075 = vld [vmem:[#allocation22 + $0x150] sm:$0xff]
    %v1076 = vld [vmem:[#allocation22 + $0x158] sm:$0xff]
    %v1077 = vld [vmem:[#allocation22 + $0x160] sm:$0xff]
    %v1078 = vld [vmem:[#allocation22 + $0x168] sm:$0xff]
    %v1079 = vld [vmem:[#allocation22 + $0x170] sm:$0xff]
    %v1080 = vld [vmem:[#allocation22 + $0x178] sm:$0xff]
    %v1081 = vld [vmem:[#allocation22 + $0x180] sm:$0xff]
    %v1082 = vld [vmem:[#allocation22 + $0x188] sm:$0xff]
    %v1083 = vld [vmem:[#allocation22 + $0x190] sm:$0xff]
    %v1084 = vld [vmem:[#allocation22 + $0x198] sm:$0xff]
    %v1085 = vld [vmem:[#allocation22 + $0x1a0] sm:$0xff]
    %v1086 = vld [vmem:[#allocation22 + $0x1a8] sm:$0xff]
    %v1087 = vld [vmem:[#allocation22 + $0x1b0] sm:$0xff]
    %v1088 = vld [vmem:[#allocation22 + $0x1b8] sm:$0xff]
    %v1089 = vld [vmem:[#allocation22 + $0x1c0] sm:$0xff]
    %v1090 = vld [vmem:[#allocation22 + $0x1c8] sm:$0xff]
    %v1091 = vld [vmem:[#allocation22 + $0x1d0] sm:$0xff]
    %v1092 = vld [vmem:[#allocation22 + $0x1d8] sm:$0xff]
    %v1093 = vld [vmem:[#allocation22 + $0x1e0] sm:$0xff]
    %v1094 = vld [vmem:[#allocation22 + $0x1e8] sm:$0xff]
    %v1095 = vld [vmem:[#allocation22 + $0x1f0] sm:$0xff]
    %v1096 = vld [vmem:[#allocation22 + $0x1f8] sm:$0xff]
    %v1097 = vld [vmem:[#allocation22 + $0x200] sm:$0xff]
    %v1098 = vld [vmem:[#allocation22 + $0x208] sm:$0xff]
    %v1099 = vld [vmem:[#allocation22 + $0x210] sm:$0xff]
    %v1100 = vld [vmem:[#allocation22 + $0x218] sm:$0xff]
    %v1101 = vld [vmem:[#allocation22 + $0x220] sm:$0xff]
    %v1102 = vld [vmem:[#allocation22 + $0x228] sm:$0xff]
    %v1103 = vld [vmem:[#allocation22 + $0x230] sm:$0xff]
    %v1104 = vld [vmem:[#allocation22 + $0x238] sm:$0xff]
    %v1105 = vld [vmem:[#allocation22 + $0x240] sm:$0xff]
    %v1106 = vld [vmem:[#allocation22 + $0x248] sm:$0xff]
    %v1107 = vld [vmem:[#allocation22 + $0x250] sm:$0xff]
    %v1108 = vld [vmem:[#allocation22 + $0x258] sm:$0xff]
    %v1109 = vld [vmem:[#allocation22 + $0x260] sm:$0xff]
    %v1110 = vld [vmem:[#allocation22 + $0x268] sm:$0xff]
    %v1111 = vld [vmem:[#allocation22 + $0x270] sm:$0xff]
    %v1112 = vld [vmem:[#allocation22 + $0x278] sm:$0xff]
    %v1113 = vld [vmem:[#allocation22 + $0x280] sm:$0xff]
    %v1114 = vld [vmem:[#allocation22 + $0x288] sm:$0xff]
    %v1115 = vld [vmem:[#allocation22 + $0x290] sm:$0xff]
    %v1116 = vld [vmem:[#allocation22 + $0x298] sm:$0xff]
    %v1117 = vld [vmem:[#allocation22 + $0x2a0] sm:$0xff]
    %v1118 = vld [vmem:[#allocation22 + $0x2a8] sm:$0xff]
    %v1119 = vld [vmem:[#allocation22 + $0x2b0] sm:$0xff]
    %v1120 = vld [vmem:[#allocation22 + $0x2b8] sm:$0xff]
    %v1121 = vld [vmem:[#allocation22 + $0x2c0] sm:$0xff]
    %v1122 = vld [vmem:[#allocation22 + $0x2c8] sm:$0xff]
    %v1123 = vld [vmem:[#allocation22 + $0x2d0] sm:$0xff]
    %v1124 = vld [vmem:[#allocation22 + $0x2d8] sm:$0xff]
    %v1125 = vld [vmem:[#allocation22 + $0x2e0] sm:$0xff]
    %v1126 = vld [vmem:[#allocation22 + $0x2e8] sm:$0xff]
    %v1127 = vld [vmem:[#allocation22 + $0x2f0] sm:$0xff]
    %v1128 = vld [vmem:[#allocation22 + $0x2f8] sm:$0xff]
    %v1129 = vld [vmem:[#allocation22 + $0x300] sm:$0xff]
    %v1130 = vld [vmem:[#allocation22 + $0x308] sm:$0xff]
    %v1131 = vld [vmem:[#allocation22 + $0x310] sm:$0xff]
    %v1132 = vld [vmem:[#allocation22 + $0x318] sm:$0xff]
    %v1133 = vld [vmem:[#allocation22 + $0x320] sm:$0xff]
    %v1134 = vld [vmem:[#allocation22 + $0x328] sm:$0xff]
    %v1135 = vld [vmem:[#allocation22 + $0x330] sm:$0xff]
    %v1136 = vld [vmem:[#allocation22 + $0x338] sm:$0xff]
    %v1137 = vld [vmem:[#allocation22 + $0x340] sm:$0xff]
    %v1138 = vld [vmem:[#allocation22 + $0x348] sm:$0xff]
    %v1139 = vld [vmem:[#allocation22 + $0x350] sm:$0xff]
    %v1140 = vld [vmem:[#allocation22 + $0x358] sm:$0xff]
    %v1141 = vld [vmem:[#allocation22 + $0x360] sm:$0xff]
    %v1142 = vld [vmem:[#allocation22 + $0x368] sm:$0xff]
    %v1143 = vld [vmem:[#allocation22 + $0x370] sm:$0xff]
    %v1144 = vld [vmem:[#allocation22 + $0x378] sm:$0xff]
    %v1145 = vld [vmem:[#allocation22 + $0x380] sm:$0xff]
    %v1146 = vld [vmem:[#allocation22 + $0x388] sm:$0xff]
    %v1147 = vld [vmem:[#allocation22 + $0x390] sm:$0xff]
    %v1148 = vld [vmem:[#allocation22 + $0x398] sm:$0xff]
    %v1149 = vld [vmem:[#allocation22 + $0x3a0] sm:$0xff]
    %v1150 = vld [vmem:[#allocation22 + $0x3a8] sm:$0xff]
    %v1151 = vld [vmem:[#allocation22 + $0x3b0] sm:$0xff]
    %v1152 = vld [vmem:[#allocation22 + $0x3b8] sm:$0xff]
    %v1153 = vld [vmem:[#allocation22 + $0x3c0] sm:$0xff]
    %v1154 = vld [vmem:[#allocation22 + $0x3c8] sm:$0xff]
    %v1155 = vld [vmem:[#allocation22 + $0x3d0] sm:$0xff]
    %v1156 = vld [vmem:[#allocation22 + $0x3d8] sm:$0xff]
    %v1157 = vld [vmem:[#allocation22 + $0x3e0] sm:$0xff]
    %v1158 = vld [vmem:[#allocation22 + $0x3e8] sm:$0xff]
    %v1159 = vld [vmem:[#allocation22 + $0x3f0] sm:$0xff]
    %v1160 = vld [vmem:[#allocation22 + $0x3f8] sm:$0xff]
    %v1161 = vld [vmem:[#allocation22 + $0x400] sm:$0xff]
    %v1162 = vld [vmem:[#allocation22 + $0x408] sm:$0xff]
    %v1163 = vld [vmem:[#allocation22 + $0x410] sm:$0xff]
    %v1164 = vld [vmem:[#allocation22 + $0x418] sm:$0xff]
    %v1165 = vld [vmem:[#allocation22 + $0x420] sm:$0xff]
    %v1166 = vld [vmem:[#allocation22 + $0x428] sm:$0xff]
    %v1167 = vld [vmem:[#allocation22 + $0x430] sm:$0xff]
    %v1168 = vld [vmem:[#allocation22 + $0x438] sm:$0xff]
    %v1169 = vld [vmem:[#allocation22 + $0x440] sm:$0xff]
    %v1170 = vld [vmem:[#allocation22 + $0x448] sm:$0xff]
    %v1171 = vld [vmem:[#allocation22 + $0x450] sm:$0xff]
    %v1172 = vld [vmem:[#allocation22 + $0x458] sm:$0xff]
    %v1173 = vld [vmem:[#allocation22 + $0x460] sm:$0xff]
    %v1174 = vld [vmem:[#allocation22 + $0x468] sm:$0xff]
    %v1175 = vld [vmem:[#allocation22 + $0x470] sm:$0xff]
    %v1176 = vld [vmem:[#allocation22 + $0x478] sm:$0xff]
    %v1177 = vld [vmem:[#allocation22 + $0x480] sm:$0xff]
    %v1178 = vld [vmem:[#allocation22 + $0x488] sm:$0xff]
    %v1179 = vld [vmem:[#allocation22 + $0x490] sm:$0xff]
    %v1180 = vld [vmem:[#allocation22 + $0x498] sm:$0xff]
    %v1181 = vld [vmem:[#allocation22 + $0x4a0] sm:$0xff]
    %v1182 = vld [vmem:[#allocation22 + $0x4a8] sm:$0xff]
    %v1183 = vld [vmem:[#allocation22 + $0x4b0] sm:$0xff]
    %v1184 = vld [vmem:[#allocation22 + $0x4b8] sm:$0xff]
    %v1185 = vld [vmem:[#allocation22 + $0x4c0] sm:$0xff]
    %v1186 = vld [vmem:[#allocation22 + $0x4c8] sm:$0xff]
    %v1187 = vld [vmem:[#allocation22 + $0x4d0] sm:$0xff]
    %v1188 = vld [vmem:[#allocation22 + $0x4d8] sm:$0xff]
    %v1189 = vld [vmem:[#allocation22 + $0x4e0] sm:$0xff]
    %v1190 = vld [vmem:[#allocation22 + $0x4e8] sm:$0xff]
    %v1191 = vld [vmem:[#allocation22 + $0x4f0] sm:$0xff]
    %v1192 = vld [vmem:[#allocation22 + $0x4f8] sm:$0xff]
    %v1193 = vld [vmem:[#allocation22 + $0x500] sm:$0xff]
    %v1194 = vld [vmem:[#allocation22 + $0x508] sm:$0xff]
    %v1195 = vld [vmem:[#allocation22 + $0x510] sm:$0xff]
    %v1196 = vld [vmem:[#allocation22 + $0x518] sm:$0xff]
    %v1197 = vld [vmem:[#allocation22 + $0x520] sm:$0xff]
    %v1198 = vld [vmem:[#allocation22 + $0x528] sm:$0xff]
    %v1199 = vld [vmem:[#allocation22 + $0x530] sm:$0xff]
    %v1200 = vld [vmem:[#allocation22 + $0x538] sm:$0xff]
    %v1201 = vld [vmem:[#allocation22 + $0x540] sm:$0xff]
    %v1202 = vld [vmem:[#allocation22 + $0x548] sm:$0xff]
    %v1203 = vld [vmem:[#allocation22 + $0x550] sm:$0xff]
    %v1204 = vld [vmem:[#allocation22 + $0x558] sm:$0xff]
    %v1205 = vld [vmem:[#allocation22 + $0x560] sm:$0xff]
    %v1206 = vld [vmem:[#allocation22 + $0x568] sm:$0xff]
    %v1207 = vld [vmem:[#allocation22 + $0x570] sm:$0xff]
    %v1208 = vld [vmem:[#allocation22 + $0x578] sm:$0xff]
    %v1209 = vld [vmem:[#allocation22 + $0x580] sm:$0xff]
    %v1210 = vld [vmem:[#allocation22 + $0x588] sm:$0xff]
    %v1211 = vld [vmem:[#allocation22 + $0x590] sm:$0xff]
    %v1212 = vld [vmem:[#allocation22 + $0x598] sm:$0xff]
    %v1213 = vld [vmem:[#allocation22 + $0x5a0] sm:$0xff]
    %v1214 = vld [vmem:[#allocation22 + $0x5a8] sm:$0xff]
    %v1215 = vld [vmem:[#allocation22 + $0x5b0] sm:$0xff]
    %v1216 = vld [vmem:[#allocation22 + $0x5b8] sm:$0xff]
    %v1217 = vld [vmem:[#allocation22 + $0x5c0] sm:$0xff]
    %v1218 = vld [vmem:[#allocation22 + $0x5c8] sm:$0xff]
    %v1219 = vld [vmem:[#allocation22 + $0x5d0] sm:$0xff]
    %v1220 = vld [vmem:[#allocation22 + $0x5d8] sm:$0xff]
    %v1221 = vld [vmem:[#allocation22 + $0x5e0] sm:$0xff]
    %v1222 = vld [vmem:[#allocation22 + $0x5e8] sm:$0xff]
    %v1223 = vld [vmem:[#allocation22 + $0x5f0] sm:$0xff]
    %v1224 = vld [vmem:[#allocation22 + $0x5f8] sm:$0xff]
    %v1225 = vld [vmem:[#allocation22 + $0x600] sm:$0xff]
    %v1226 = vld [vmem:[#allocation22 + $0x608] sm:$0xff]
    %v1227 = vld [vmem:[#allocation22 + $0x610] sm:$0xff]
    %v1228 = vld [vmem:[#allocation22 + $0x618] sm:$0xff]
    %v1229 = vld [vmem:[#allocation22 + $0x620] sm:$0xff]
    %v1230 = vld [vmem:[#allocation22 + $0x628] sm:$0xff]
    %v1231 = vld [vmem:[#allocation22 + $0x630] sm:$0xff]
    %v1232 = vld [vmem:[#allocation22 + $0x638] sm:$0xff]
    %v1233 = vld [vmem:[#allocation22 + $0x640] sm:$0xff]
    %v1234 = vld [vmem:[#allocation22 + $0x648] sm:$0xff]
    %v1235 = vld [vmem:[#allocation22 + $0x650] sm:$0xff]
    %v1236 = vld [vmem:[#allocation22 + $0x658] sm:$0xff]
    %v1237 = vld [vmem:[#allocation22 + $0x660] sm:$0xff]
    %v1238 = vld [vmem:[#allocation22 + $0x668] sm:$0xff]
    %v1239 = vld [vmem:[#allocation22 + $0x670] sm:$0xff]
    %v1240 = vld [vmem:[#allocation22 + $0x678] sm:$0xff]
    %v1241 = vld [vmem:[#allocation22 + $0x680] sm:$0xff]
    %v1242 = vld [vmem:[#allocation22 + $0x688] sm:$0xff]
    %v1243 = vld [vmem:[#allocation22 + $0x690] sm:$0xff]
    %v1244 = vld [vmem:[#allocation22 + $0x698] sm:$0xff]
    %v1245 = vld [vmem:[#allocation22 + $0x6a0] sm:$0xff]
    %v1246 = vld [vmem:[#allocation22 + $0x6a8] sm:$0xff]
    %v1247 = vld [vmem:[#allocation22 + $0x6b0] sm:$0xff]
    %v1248 = vld [vmem:[#allocation22 + $0x6b8] sm:$0xff]
    %v1249 = vld [vmem:[#allocation22 + $0x6c0] sm:$0xff]
    %v1250 = vld [vmem:[#allocation22 + $0x6c8] sm:$0xff]
    %v1251 = vld [vmem:[#allocation22 + $0x6d0] sm:$0xff]
    %v1252 = vld [vmem:[#allocation22 + $0x6d8] sm:$0xff]
    %v1253 = vld [vmem:[#allocation22 + $0x6e0] sm:$0xff]
    %v1254 = vld [vmem:[#allocation22 + $0x6e8] sm:$0xff]
    %v1255 = vld [vmem:[#allocation22 + $0x6f0] sm:$0xff]
    %v1256 = vld [vmem:[#allocation22 + $0x6f8] sm:$0xff]
    %v1257 = vld [vmem:[#allocation22 + $0x700] sm:$0xff]
    %v1258 = vld [vmem:[#allocation22 + $0x708] sm:$0xff]
    %v1259 = vld [vmem:[#allocation22 + $0x710] sm:$0xff]
    %v1260 = vld [vmem:[#allocation22 + $0x718] sm:$0xff]
    %v1261 = vld [vmem:[#allocation22 + $0x720] sm:$0xff]
    %v1262 = vld [vmem:[#allocation22 + $0x728] sm:$0xff]
    %v1263 = vld [vmem:[#allocation22 + $0x730] sm:$0xff]
    %v1264 = vld [vmem:[#allocation22 + $0x738] sm:$0xff]
    %v1265 = vld [vmem:[#allocation22 + $0x740] sm:$0xff]
    %v1266 = vld [vmem:[#allocation22 + $0x748] sm:$0xff]
    %v1267 = vld [vmem:[#allocation22 + $0x750] sm:$0xff]
    %v1268 = vld [vmem:[#allocation22 + $0x758] sm:$0xff]
    %v1269 = vld [vmem:[#allocation22 + $0x760] sm:$0xff]
    %v1270 = vld [vmem:[#allocation22 + $0x768] sm:$0xff]
    %v1271 = vld [vmem:[#allocation22 + $0x770] sm:$0xff]
    %v1272 = vld [vmem:[#allocation22 + $0x778] sm:$0xff]
    %v1273 = vld [vmem:[#allocation22 + $0x780] sm:$0xff]
    %v1274 = vld [vmem:[#allocation22 + $0x788] sm:$0xff]
    %v1275 = vld [vmem:[#allocation22 + $0x790] sm:$0xff]
    %v1276 = vld [vmem:[#allocation22 + $0x798] sm:$0xff]
    %v1277 = vld [vmem:[#allocation22 + $0x7a0] sm:$0xff]
    %v1278 = vld [vmem:[#allocation22 + $0x7a8] sm:$0xff]
    %v1279 = vld [vmem:[#allocation22 + $0x7b0] sm:$0xff]
    %v1280 = vld [vmem:[#allocation22 + $0x7b8] sm:$0xff]
    %v1281 = vld [vmem:[#allocation22 + $0x7c0] sm:$0xff]
    %v1282 = vld [vmem:[#allocation22 + $0x7c8] sm:$0xff]
    %v1283 = vld [vmem:[#allocation22 + $0x7d0] sm:$0xff]
    %v1284 = vld [vmem:[#allocation22 + $0x7d8] sm:$0xff]
    %v1285 = vld [vmem:[#allocation22 + $0x7e0] sm:$0xff]
    %v1286 = vld [vmem:[#allocation22 + $0x7e8] sm:$0xff]
    %v1287 = vld [vmem:[#allocation22 + $0x7f0] sm:$0xff]
    %v1288 = vld [vmem:[#allocation22 + $0x7f8] sm:$0xff]
    %v1289 = vld [vmem:[#allocation22 + $0x800] sm:$0xff]
    %v1290 = vld [vmem:[#allocation22 + $0x808] sm:$0xff]
    %v1291 = vld [vmem:[#allocation22 + $0x810] sm:$0xff]
    %v1292 = vld [vmem:[#allocation22 + $0x818] sm:$0xff]
    %v1293 = vld [vmem:[#allocation22 + $0x820] sm:$0xff]
    %v1294 = vld [vmem:[#allocation22 + $0x828] sm:$0xff]
    %v1295 = vld [vmem:[#allocation22 + $0x830] sm:$0xff]
    %v1296 = vld [vmem:[#allocation22 + $0x838] sm:$0xff]
    %v1297 = vld [vmem:[#allocation22 + $0x840] sm:$0xff]
    %v1298 = vld [vmem:[#allocation22 + $0x848] sm:$0xff]
    %v1299 = vld [vmem:[#allocation22 + $0x850] sm:$0xff]
    %v1300 = vld [vmem:[#allocation22 + $0x858] sm:$0xff]
    %v1301 = vld [vmem:[#allocation22 + $0x860] sm:$0xff]
    %v1302 = vld [vmem:[#allocation22 + $0x868] sm:$0xff]
    %v1303 = vld [vmem:[#allocation22 + $0x870] sm:$0xff]
    %v1304 = vld [vmem:[#allocation22 + $0x878] sm:$0xff]
    %v1305 = vld [vmem:[#allocation22 + $0x880] sm:$0xff]
    %v1306 = vld [vmem:[#allocation22 + $0x888] sm:$0xff]
    %v1307 = vld [vmem:[#allocation22 + $0x890] sm:$0xff]
    %v1308 = vld [vmem:[#allocation22 + $0x898] sm:$0xff]
    %v1309 = vld [vmem:[#allocation22 + $0x8a0] sm:$0xff]
    %v1310 = vld [vmem:[#allocation22 + $0x8a8] sm:$0xff]
    %v1311 = vld [vmem:[#allocation22 + $0x8b0] sm:$0xff]
    %v1312 = vld [vmem:[#allocation22 + $0x8b8] sm:$0xff]
    %v1313 = vld [vmem:[#allocation22 + $0x8c0] sm:$0xff]
    %v1314 = vld [vmem:[#allocation22 + $0x8c8] sm:$0xff]
    %v1315 = vld [vmem:[#allocation22 + $0x8d0] sm:$0xff]
    %v1316 = vld [vmem:[#allocation22 + $0x8d8] sm:$0xff]
    %v1317 = vld [vmem:[#allocation22 + $0x8e0] sm:$0xff]
    %v1318 = vld [vmem:[#allocation22 + $0x8e8] sm:$0xff]
    %v1319 = vld [vmem:[#allocation22 + $0x8f0] sm:$0xff]
    %v1320 = vld [vmem:[#allocation22 + $0x8f8] sm:$0xff]
    %v1321 = vld [vmem:[#allocation22 + $0x900] sm:$0xff]
    %v1322 = vld [vmem:[#allocation22 + $0x908] sm:$0xff]
    %v1323 = vld [vmem:[#allocation22 + $0x910] sm:$0xff]
    %v1324 = vld [vmem:[#allocation22 + $0x918] sm:$0xff]
    %v1325 = vld [vmem:[#allocation22 + $0x920] sm:$0xff]
    %v1326 = vld [vmem:[#allocation22 + $0x928] sm:$0xff]
    %v1327 = vld [vmem:[#allocation22 + $0x930] sm:$0xff]
    %v1328 = vld [vmem:[#allocation22 + $0x938] sm:$0xff]
    %v1329 = vld [vmem:[#allocation22 + $0x940] sm:$0xff]
    %v1330 = vld [vmem:[#allocation22 + $0x948] sm:$0xff]
    %v1331 = vld [vmem:[#allocation22 + $0x950] sm:$0xff]
    %v1332 = vld [vmem:[#allocation22 + $0x958] sm:$0xff]
    %v1333 = vld [vmem:[#allocation22 + $0x960] sm:$0xff]
    %v1334 = vld [vmem:[#allocation22 + $0x968] sm:$0xff]
    %v1335 = vld [vmem:[#allocation22 + $0x970] sm:$0xff]
    %v1336 = vld [vmem:[#allocation22 + $0x978] sm:$0xff]
    %v1337 = vld [vmem:[#allocation22 + $0x980] sm:$0xff]
    %v1338 = vld [vmem:[#allocation22 + $0x988] sm:$0xff]
    %v1339 = vld [vmem:[#allocation22 + $0x990] sm:$0xff]
    %v1340 = vld [vmem:[#allocation22 + $0x998] sm:$0xff]
    %v1341 = vld [vmem:[#allocation22 + $0x9a0] sm:$0xff]
    %v1342 = vld [vmem:[#allocation22 + $0x9a8] sm:$0xff]
    %v1343 = vld [vmem:[#allocation22 + $0x9b0] sm:$0xff]
    %v1344 = vld [vmem:[#allocation22 + $0x9b8] sm:$0xff]
    %v1345 = vld [vmem:[#allocation22 + $0x9c0] sm:$0xff]
    %v1346 = vld [vmem:[#allocation22 + $0x9c8] sm:$0xff]
    %v1347 = vld [vmem:[#allocation22 + $0x9d0] sm:$0xff]
    %v1348 = vld [vmem:[#allocation22 + $0x9d8] sm:$0xff]
    %v1349 = vld [vmem:[#allocation22 + $0x9e0] sm:$0xff]
    %v1350 = vld [vmem:[#allocation22 + $0x9e8] sm:$0xff]
    %v1351 = vld [vmem:[#allocation22 + $0x9f0] sm:$0xff]
    %v1352 = vld [vmem:[#allocation22 + $0x9f8] sm:$0xff]
    %v1353 = vld [vmem:[#allocation22 + $0xa00] sm:$0xff]
    %v1354 = vld [vmem:[#allocation22 + $0xa08] sm:$0xff]
    %v1355 = vld [vmem:[#allocation22 + $0xa10] sm:$0xff]
    %v1356 = vld [vmem:[#allocation22 + $0xa18] sm:$0xff]
    %v1357 = vld [vmem:[#allocation22 + $0xa20] sm:$0xff]
    %v1358 = vld [vmem:[#allocation22 + $0xa28] sm:$0xff]
    %v1359 = vld [vmem:[#allocation22 + $0xa30] sm:$0xff]
    %v1360 = vld [vmem:[#allocation22 + $0xa38] sm:$0xff]
    %v1361 = vld [vmem:[#allocation22 + $0xa40] sm:$0xff]
    %v1362 = vld [vmem:[#allocation22 + $0xa48] sm:$0xff]
    %v1363 = vld [vmem:[#allocation22 + $0xa50] sm:$0xff]
    %v1364 = vld [vmem:[#allocation22 + $0xa58] sm:$0xff]
    %v1365 = vld [vmem:[#allocation22 + $0xa60] sm:$0xff]
    %v1366 = vld [vmem:[#allocation22 + $0xa68] sm:$0xff]
    %v1367 = vld [vmem:[#allocation22 + $0xa70] sm:$0xff]
    %v1368 = vld [vmem:[#allocation22 + $0xa78] sm:$0xff]
    %v1369 = vld [vmem:[#allocation22 + $0xa80] sm:$0xff]
    %v1370 = vld [vmem:[#allocation22 + $0xa88] sm:$0xff]
    %v1371 = vld [vmem:[#allocation22 + $0xa90] sm:$0xff]
    %v1372 = vld [vmem:[#allocation22 + $0xa98] sm:$0xff]
    %v1373 = vld [vmem:[#allocation22 + $0xaa0] sm:$0xff]
    %v1374 = vld [vmem:[#allocation22 + $0xaa8] sm:$0xff]
    %v1375 = vld [vmem:[#allocation22 + $0xab0] sm:$0xff]
    %v1376 = vld [vmem:[#allocation22 + $0xab8] sm:$0xff]
    %v1377 = vld [vmem:[#allocation22 + $0xac0] sm:$0xff]
    %v1378 = vld [vmem:[#allocation22 + $0xac8] sm:$0xff]
    %v1379 = vld [vmem:[#allocation22 + $0xad0] sm:$0xff]
    %v1380 = vld [vmem:[#allocation22 + $0xad8] sm:$0xff]
    %v1381 = vld [vmem:[#allocation22 + $0xae0] sm:$0xff]
    %v1382 = vld [vmem:[#allocation22 + $0xae8] sm:$0xff]
    %v1383 = vld [vmem:[#allocation22 + $0xaf0] sm:$0xff]
    %v1384 = vld [vmem:[#allocation22 + $0xaf8] sm:$0xff]
    %v1385 = vld [vmem:[#allocation22 + $0xb00] sm:$0xff]
    %v1386 = vld [vmem:[#allocation22 + $0xb08] sm:$0xff]
    %v1387 = vld [vmem:[#allocation22 + $0xb10] sm:$0xff]
    %v1388 = vld [vmem:[#allocation22 + $0xb18] sm:$0xff]
    %v1389 = vld [vmem:[#allocation22 + $0xb20] sm:$0xff]
    %v1390 = vld [vmem:[#allocation22 + $0xb28] sm:$0xff]
    %v1391 = vld [vmem:[#allocation22 + $0xb30] sm:$0xff]
    %v1392 = vld [vmem:[#allocation22 + $0xb38] sm:$0xff]
    %v1393 = vld [vmem:[#allocation22 + $0xb40] sm:$0xff]
    %v1394 = vld [vmem:[#allocation22 + $0xb48] sm:$0xff]
    %v1395 = vld [vmem:[#allocation22 + $0xb50] sm:$0xff]
    %v1396 = vld [vmem:[#allocation22 + $0xb58] sm:$0xff]
    %v1397 = vld [vmem:[#allocation22 + $0xb60] sm:$0xff]
    %v1398 = vld [vmem:[#allocation22 + $0xb68] sm:$0xff]
    %v1399 = vld [vmem:[#allocation22 + $0xb70] sm:$0xff]
    %v1400 = vld [vmem:[#allocation22 + $0xb78] sm:$0xff]
    %v1401 = vld [vmem:[#allocation22 + $0xb80] sm:$0xff]
    %v1402 = vld [vmem:[#allocation22 + $0xb88] sm:$0xff]
    %v1403 = vld [vmem:[#allocation22 + $0xb90] sm:$0xff]
    %v1404 = vld [vmem:[#allocation22 + $0xb98] sm:$0xff]
    %v1405 = vld [vmem:[#allocation22 + $0xba0] sm:$0xff]
    %v1406 = vld [vmem:[#allocation22 + $0xba8] sm:$0xff]
    %v1407 = vld [vmem:[#allocation22 + $0xbb0] sm:$0xff]
    %v1408 = vld [vmem:[#allocation22 + $0xbb8] sm:$0xff]
    %v1409 = vld [vmem:[#allocation22 + $0xbc0] sm:$0xff]
    %v1410 = vld [vmem:[#allocation22 + $0xbc8] sm:$0xff]
    %v1411 = vld [vmem:[#allocation22 + $0xbd0] sm:$0xff]
    %v1412 = vld [vmem:[#allocation22 + $0xbd8] sm:$0xff]
    %v1413 = vld [vmem:[#allocation22 + $0xbe0] sm:$0xff]
    %v1414 = vld [vmem:[#allocation22 + $0xbe8] sm:$0xff]
    %v1415 = vld [vmem:[#allocation22 + $0xbf0] sm:$0xff]
    %v1416 = vld [vmem:[#allocation22 + $0xbf8] sm:$0xff]
    %v1417 = vld [vmem:[#allocation22 + $0xc00] sm:$0xff]
    %v1418 = vld [vmem:[#allocation22 + $0xc08] sm:$0xff]
    %v1419 = vld [vmem:[#allocation22 + $0xc10] sm:$0xff]
    %v1420 = vld [vmem:[#allocation22 + $0xc18] sm:$0xff]
    %v1421 = vld [vmem:[#allocation22 + $0xc20] sm:$0xff]
    %v1422 = vld [vmem:[#allocation22 + $0xc28] sm:$0xff]
    %v1423 = vld [vmem:[#allocation22 + $0xc30] sm:$0xff]
    %v1424 = vld [vmem:[#allocation22 + $0xc38] sm:$0xff]
    %v1425 = vld [vmem:[#allocation22 + $0xc40] sm:$0xff]
    %v1426 = vld [vmem:[#allocation22 + $0xc48] sm:$0xff]
    %v1427 = vld [vmem:[#allocation22 + $0xc50] sm:$0xff]
    %v1428 = vld [vmem:[#allocation22 + $0xc58] sm:$0xff]
    %v1429 = vld [vmem:[#allocation22 + $0xc60] sm:$0xff]
    %v1430 = vld [vmem:[#allocation22 + $0xc68] sm:$0xff]
    %v1431 = vld [vmem:[#allocation22 + $0xc70] sm:$0xff]
    %v1432 = vld [vmem:[#allocation22 + $0xc78] sm:$0xff]
    %v1433 = vld [vmem:[#allocation22 + $0xc80] sm:$0xff]
    %v1434 = vld [vmem:[#allocation22 + $0xc88] sm:$0xff]
    %v1435 = vld [vmem:[#allocation22 + $0xc90] sm:$0xff]
    %v1436 = vld [vmem:[#allocation22 + $0xc98] sm:$0xff]
    %v1437 = vld [vmem:[#allocation22 + $0xca0] sm:$0xff]
    %v1438 = vld [vmem:[#allocation22 + $0xca8] sm:$0xff]
    %v1439 = vld [vmem:[#allocation22 + $0xcb0] sm:$0xff]
    %v1440 = vld [vmem:[#allocation22 + $0xcb8] sm:$0xff]
    %v1441 = vld [vmem:[#allocation22 + $0xcc0] sm:$0xff]
    %v1442 = vld [vmem:[#allocation22 + $0xcc8] sm:$0xff]
    %v1443 = vld [vmem:[#allocation22 + $0xcd0] sm:$0xff]
    %v1444 = vld [vmem:[#allocation22 + $0xcd8] sm:$0xff]
    %v1445 = vld [vmem:[#allocation22 + $0xce0] sm:$0xff]
    %v1446 = vld [vmem:[#allocation22 + $0xce8] sm:$0xff]
    %v1447 = vld [vmem:[#allocation22 + $0xcf0] sm:$0xff]
    %v1448 = vld [vmem:[#allocation22 + $0xcf8] sm:$0xff]
    %v1449 = vld [vmem:[#allocation22 + $0xd00] sm:$0xff]
    %v1450 = vld [vmem:[#allocation22 + $0xd08] sm:$0xff]
    %v1451 = vld [vmem:[#allocation22 + $0xd10] sm:$0xff]
    %v1452 = vld [vmem:[#allocation22 + $0xd18] sm:$0xff]
    %v1453 = vld [vmem:[#allocation22 + $0xd20] sm:$0xff]
    %v1454 = vld [vmem:[#allocation22 + $0xd28] sm:$0xff]
    %v1455 = vld [vmem:[#allocation22 + $0xd30] sm:$0xff]
    %v1456 = vld [vmem:[#allocation22 + $0xd38] sm:$0xff]
    %v1457 = vld [vmem:[#allocation22 + $0xd40] sm:$0xff]
    %v1458 = vld [vmem:[#allocation22 + $0xd48] sm:$0xff]
    %v1459 = vld [vmem:[#allocation22 + $0xd50] sm:$0xff]
    %v1460 = vld [vmem:[#allocation22 + $0xd58] sm:$0xff]
    %v1461 = vld [vmem:[#allocation22 + $0xd60] sm:$0xff]
    %v1462 = vld [vmem:[#allocation22 + $0xd68] sm:$0xff]
    %v1463 = vld [vmem:[#allocation22 + $0xd70] sm:$0xff]
    %v1464 = vld [vmem:[#allocation22 + $0xd78] sm:$0xff]
    %v1465 = vld [vmem:[#allocation23] sm:$0xff]
    %v1466 = vld [vmem:[#allocation23 + $0x8] sm:$0x1]
    %v1469 = vlaneseq
    %v1470 = vshrl.u32 %v1469, 7
    %v1471 = vsub.s32 0, %v1470
    %v1472 = vrot.slane %v1465, %v1471
    %v1473 = vlaneseq
    %v1474 = vshrl.u32 %v1473, 7
    %v1475 = vsub.s32 1, %v1474
    %v1476 = vrot.slane %v1465, %v1475
    %v1477 = vlaneseq
    %v1478 = vshrl.u32 %v1477, 7
    %v1479 = vsub.s32 2, %v1478
    %v1480 = vrot.slane %v1465, %v1479
    %v1481 = vlaneseq
    %v1482 = vshrl.u32 %v1481, 7
    %v1483 = vsub.s32 3, %v1482
    %v1484 = vrot.slane %v1465, %v1483
    %v1485 = vlaneseq
    %v1486 = vshrl.u32 %v1485, 7
    %v1487 = vsub.s32 4, %v1486
    %v1488 = vrot.slane %v1465, %v1487
    %v1489 = vlaneseq
    %v1490 = vshrl.u32 %v1489, 7
    %v1491 = vsub.s32 5, %v1490
    %v1492 = vrot.slane %v1465, %v1491
    %v1493 = vlaneseq
    %v1494 = vshrl.u32 %v1493, 7
    %v1495 = vsub.s32 6, %v1494
    %v1496 = vrot.slane %v1465, %v1495
    %v1497 = vlaneseq
    %v1498 = vshrl.u32 %v1497, 7
    %v1499 = vsub.s32 7, %v1498
    %v1500 = vrot.slane %v1465, %v1499
    %v1501 = vlaneseq
    %v1502 = vshrl.u32 %v1501, 7
    %v1503 = vsub.s32 0, %v1502
    %v1504 = vrot.slane %v1466, %v1503
    %1514 = vmatprep.subr.mxu0 %v1034
    %1515 = vmatpush1.msra.mxu0 %v1033
    %1516 = vmatprep.subr.mxu0 %v1043
    %1517 = vmatpush1.msra.mxu0 %v1042
    %1518 = vmatprep.subr.mxu0 %v1052
    %1519 = vmatpush1.msra.mxu0 %v1051
    %1520 = vmatprep.subr.mxu0 %v1061
    %1521 = vmatpush1.msra.mxu0 %v1060
    %1522 = vmatprep.subr.mxu0 %v1070
    %1523 = vmatpush1.msra.mxu0 %v1069
    %1524 = vmatprep.subr.mxu0 %v1079
    %1525 = vmatpush1.msra.mxu0 %v1078
    %1526 = vmatprep.subr.mxu0 %v1088
    %1527 = vmatpush1.msra.mxu0 %v1087
    %1528 = vmatprep.subr.mxu0 %v1097
    %1529 = vmatpush1.msra.mxu0 %v1096
    %1530 = vmatprep.subr.mxu0 %v1106
    %1531 = vmatpush1.msra.mxu0 %v1105
    %1532 = vmatprep.subr.mxu0 %v1115
    %1533 = vmatpush1.msra.mxu0 %v1114
    %1534 = vmatprep.subr.mxu0 %v1124
    %1535 = vmatpush1.msra.mxu0 %v1123
    %1536 = vmatprep.subr.mxu0 %v1133
    %1537 = vmatpush1.msra.mxu0 %v1132
    %1538 = vmatprep.subr.mxu0 %v1142
    %1539 = vmatpush1.msra.mxu0 %v1141
    %1540 = vmatprep.subr.mxu0 %v1151
    %1541 = vmatpush1.msra.mxu0 %v1150
    %1542 = vmatprep.subr.mxu0 %v1160
    %1543 = vmatpush1.msra.mxu0 %v1159
    %1544 = vmatprep.subr.mxu0 %v1169
    %1545 = vmatpush1.msra.mxu0 %v1168
    %1546 = vmatprep.subr.mxu0 %v1178
    %1547 = vmatpush1.msra.mxu0 %v1177
    %1548 = vmatprep.subr.mxu0 %v1187
    %1549 = vmatpush1.msra.mxu0 %v1186
    %1550 = vmatprep.subr.mxu0 %v1196
    %1551 = vmatpush1.msra.mxu0 %v1195
    %1552 = vmatprep.subr.mxu0 %v1205
    %1553 = vmatpush1.msra.mxu0 %v1204
    %1554 = vmatprep.subr.mxu0 %v1214
    %1555 = vmatpush1.msra.mxu0 %v1213
    %1556 = vmatprep.subr.mxu0 %v1223
    %1557 = vmatpush1.msra.mxu0 %v1222
    %1558 = vmatprep.subr.mxu0 %v1232
    %1559 = vmatpush1.msra.mxu0 %v1231
    %1560 = vmatprep.subr.mxu0 %v1241
    %1561 = vmatpush1.msra.mxu0 %v1240
    %1562 = vmatprep.subr.mxu0 %v1250
    %1563 = vmatpush1.msra.mxu0 %v1249
    %1564 = vmatprep.subr.mxu0 %v1259
    %1565 = vmatpush1.msra.mxu0 %v1258
    %1566 = vmatprep.subr.mxu0 %v1268
    %1567 = vmatpush1.msra.mxu0 %v1267
    %1568 = vmatprep.subr.mxu0 %v1277
    %1569 = vmatpush1.msra.mxu0 %v1276
    %1570 = vmatprep.subr.mxu0 %v1286
    %1571 = vmatpush1.msra.mxu0 %v1285
    %1572 = vmatprep.subr.mxu0 %v1295
    %1573 = vmatpush1.msra.mxu0 %v1294
    %1574 = vmatprep.subr.mxu0 %v1304
    %1575 = vmatpush1.msra.mxu0 %v1303
    %1576 = vmatprep.subr.mxu0 %v1313
    %1577 = vmatpush1.msra.mxu0 %v1312
    %1578 = vmatprep.mubr.f32.mxu0 %v1031
    %1579 = vmatmul.mubr.f32.gmra.mrb[0].mxu0 %v1030
    %v1580 = vpop.f32.mrb[0].mxu0
    %v1581 = vadd.f32 %v1472, %v1580
    %v1582 = vpop.f32.mrb[0].mxu0
    %v1583 = vadd.f32 %v1476, %v1582
    %1584 = vdwg.mxu0
    %1585 = vmatprep.subr.mxu0 %v1322
    %1586 = vmatpush1.msra.mxu0 %v1321
    %1587 = vmatprep.subr.mxu0 %v1331
    %1588 = vmatpush1.msra.mxu0 %v1330
    %1589 = vmatprep.subr.mxu0 %v1340
    %1590 = vmatpush1.msra.mxu0 %v1339
    %1591 = vmatprep.subr.mxu0 %v1349
    %1592 = vmatpush1.msra.mxu0 %v1348
    %1593 = vmatprep.subr.mxu0 %v1358
    %1594 = vmatpush1.msra.mxu0 %v1357
    %1595 = vmatprep.subr.mxu0 %v1367
    %1596 = vmatpush1.msra.mxu0 %v1366
    %1597 = vmatprep.subr.mxu0 %v1376
    %1598 = vmatpush1.msra.mxu0 %v1375
    %1599 = vmatprep.subr.mxu0 %v1385
    %1600 = vmatpush1.msra.mxu0 %v1384
    %1601 = vmatprep.subr.mxu0 %v1394
    %1602 = vmatpush1.msra.mxu0 %v1393
    %1603 = vmatprep.subr.mxu0 %v1403
    %1604 = vmatpush1.msra.mxu0 %v1402
    %1605 = vmatprep.subr.mxu0 %v1412
    %1606 = vmatpush1.msra.mxu0 %v1411
    %1607 = vmatprep.subr.mxu0 %v1421
    %1608 = vmatpush1.msra.mxu0 %v1420
    %1609 = vmatprep.subr.mxu0 %v1430
    %1610 = vmatpush1.msra.mxu0 %v1429
    %1611 = vmatprep.subr.mxu0 %v1439
    %1612 = vmatpush1.msra.mxu0 %v1438
    %1613 = vmatprep.subr.mxu0 %v1448
    %1614 = vmatpush1.msra.mxu0 %v1447
    %1615 = vmatprep.subr.mxu0 %v1457
    %1616 = vmatpush1.msra.mxu0 %v1456
    %1617 = vmatprep.subr.mxu0 0.0
    %1618 = vmatpush1.msra.mxu0 0.0
    %1619 = vmatprep.subr.mxu0 0.0
    %1620 = vmatpush1.msra.mxu0 0.0
    %1621 = vmatprep.subr.mxu0 0.0
    %1622 = vmatpush1.msra.mxu0 0.0
    %1623 = vmatprep.subr.mxu0 0.0
    %1624 = vmatpush1.msra.mxu0 0.0
    %1625 = vmatprep.subr.mxu0 0.0
    %1626 = vmatpush1.msra.mxu0 0.0
    %1627 = vmatprep.subr.mxu0 0.0
    %1628 = vmatpush1.msra.mxu0 0.0
    %1629 = vmatprep.subr.mxu0 0.0
    %1630 = vmatpush1.msra.mxu0 0.0
    %1631 = vmatprep.subr.mxu0 0.0
    %1632 = vmatpush1.msra.mxu0 0.0
    %1633 = vmatprep.subr.mxu0 0.0
    %1634 = vmatpush1.msra.mxu0 0.0
    %1635 = vmatprep.subr.mxu0 0.0
    %1636 = vmatpush1.msra.mxu0 0.0
    %1637 = vmatprep.subr.mxu0 0.0
    %1638 = vmatpush1.msra.mxu0 0.0
    %1639 = vmatprep.subr.mxu0 0.0
    %1640 = vmatpush1.msra.mxu0 0.0
    %1641 = vmatprep.subr.mxu0 0.0
    %1642 = vmatpush1.msra.mxu0 0.0
    %1643 = vmatprep.subr.mxu0 0.0
    %1644 = vmatpush1.msra.mxu0 0.0
    %1645 = vmatprep.subr.mxu0 0.0
    %1646 = vmatpush1.msra.mxu0 0.0
    %1647 = vmatprep.subr.mxu0 0.0
    %1648 = vmatpush1.msra.mxu0 0.0
    %1649 = vmatprep.mubr.f32.mxu0 0.0
    %1650 = vmatmul.mubr.f32.gmra.mrb[0].mxu0 %v1032
    %v1651 = vpop.f32.mrb[0].mxu0
    %v1652 = vadd.f32 %v1581, %v1651
    %v1653 = vpop.f32.mrb[0].mxu0
    %v1654 = vadd.f32 %v1583, %v1653
    %1655 = vdwg.mxu0
    %1656 = vmatprep.subr.mxu0 %v1036
    %1657 = vmatpush1.msra.mxu0 %v1035
    %1658 = vmatprep.subr.mxu0 %v1045
    %1659 = vmatpush1.msra.mxu0 %v1044
    %1660 = vmatprep.subr.mxu0 %v1054
    %1661 = vmatpush1.msra.mxu0 %v1053
    %1662 = vmatprep.subr.mxu0 %v1063
    %1663 = vmatpush1.msra.mxu0 %v1062
    %1664 = vmatprep.subr.mxu0 %v1072
    %1665 = vmatpush1.msra.mxu0 %v1071
    %1666 = vmatprep.subr.mxu0 %v1081
    %1667 = vmatpush1.msra.mxu0 %v1080
    %1668 = vmatprep.subr.mxu0 %v1090
    %1669 = vmatpush1.msra.mxu0 %v1089
    %1670 = vmatprep.subr.mxu0 %v1099
    %1671 = vmatpush1.msra.mxu0 %v1098
    %1672 = vmatprep.subr.mxu0 %v1108
    %1673 = vmatpush1.msra.mxu0 %v1107
    %1674 = vmatprep.subr.mxu0 %v1117
    %1675 = vmatpush1.msra.mxu0 %v1116
    %1676 = vmatprep.subr.mxu0 %v1126
    %1677 = vmatpush1.msra.mxu0 %v1125
    %1678 = vmatprep.subr.mxu0 %v1135
    %1679 = vmatpush1.msra.mxu0 %v1134
    %1680 = vmatprep.subr.mxu0 %v1144
    %1681 = vmatpush1.msra.mxu0 %v1143
    %1682 = vmatprep.subr.mxu0 %v1153
    %1683 = vmatpush1.msra.mxu0 %v1152
    %1684 = vmatprep.subr.mxu0 %v1162
    %1685 = vmatpush1.msra.mxu0 %v1161
    %1686 = vmatprep.subr.mxu0 %v1171
    %1687 = vmatpush1.msra.mxu0 %v1170
    %1688 = vmatprep.subr.mxu0 %v1180
    %1689 = vmatpush1.msra.mxu0 %v1179
    %1690 = vmatprep.subr.mxu0 %v1189
    %1691 = vmatpush1.msra.mxu0 %v1188
    %1692 = vmatprep.subr.mxu0 %v1198
    %1693 = vmatpush1.msra.mxu0 %v1197
    %1694 = vmatprep.subr.mxu0 %v1207
    %1695 = vmatpush1.msra.mxu0 %v1206
    %1696 = vmatprep.subr.mxu0 %v1216
    %1697 = vmatpush1.msra.mxu0 %v1215
    %1698 = vmatprep.subr.mxu0 %v1225
    %1699 = vmatpush1.msra.mxu0 %v1224
    %1700 = vmatprep.subr.mxu0 %v1234
    %1701 = vmatpush1.msra.mxu0 %v1233
    %1702 = vmatprep.subr.mxu0 %v1243
    %1703 = vmatpush1.msra.mxu0 %v1242
    %1704 = vmatprep.subr.mxu0 %v1252
    %1705 = vmatpush1.msra.mxu0 %v1251
    %1706 = vmatprep.subr.mxu0 %v1261
    %1707 = vmatpush1.msra.mxu0 %v1260
    %1708 = vmatprep.subr.mxu0 %v1270
    %1709 = vmatpush1.msra.mxu0 %v1269
    %1710 = vmatprep.subr.mxu0 %v1279
    %1711 = vmatpush1.msra.mxu0 %v1278
    %1712 = vmatprep.subr.mxu0 %v1288
    %1713 = vmatpush1.msra.mxu0 %v1287
    %1714 = vmatprep.subr.mxu0 %v1297
    %1715 = vmatpush1.msra.mxu0 %v1296
    %1716 = vmatprep.subr.mxu0 %v1306
    %1717 = vmatpush1.msra.mxu0 %v1305
    %1718 = vmatprep.subr.mxu0 %v1315
    %1719 = vmatpush1.msra.mxu0 %v1314
    %1720 = vmatprep.mubr.f32.mxu0 %v1031
    %1721 = vmatmul.mubr.f32.gmra.mrb[0].mxu0 %v1030
    %v1722 = vpop.f32.mrb[0].mxu0
    %v1723 = vadd.f32 %v1480, %v1722
    %v1724 = vpop.f32.mrb[0].mxu0
    %v1725 = vadd.f32 %v1484, %v1724
    %1726 = vdwg.mxu0
    %1727 = vmatprep.subr.mxu0 %v1324
    %1728 = vmatpush1.msra.mxu0 %v1323
    %1729 = vmatprep.subr.mxu0 %v1333
    %1730 = vmatpush1.msra.mxu0 %v1332
    %1731 = vmatprep.subr.mxu0 %v1342
    %1732 = vmatpush1.msra.mxu0 %v1341
    %1733 = vmatprep.subr.mxu0 %v1351
    %1734 = vmatpush1.msra.mxu0 %v1350
    %1735 = vmatprep.subr.mxu0 %v1360
    %1736 = vmatpush1.msra.mxu0 %v1359
    %1737 = vmatprep.subr.mxu0 %v1369
    %1738 = vmatpush1.msra.mxu0 %v1368
    %1739 = vmatprep.subr.mxu0 %v1378
    %1740 = vmatpush1.msra.mxu0 %v1377
    %1741 = vmatprep.subr.mxu0 %v1387
    %1742 = vmatpush1.msra.mxu0 %v1386
    %1743 = vmatprep.subr.mxu0 %v1396
    %1744 = vmatpush1.msra.mxu0 %v1395
    %1745 = vmatprep.subr.mxu0 %v1405
    %1746 = vmatpush1.msra.mxu0 %v1404
    %1747 = vmatprep.subr.mxu0 %v1414
    %1748 = vmatpush1.msra.mxu0 %v1413
    %1749 = vmatprep.subr.mxu0 %v1423
    %1750 = vmatpush1.msra.mxu0 %v1422
    %1751 = vmatprep.subr.mxu0 %v1432
    %1752 = vmatpush1.msra.mxu0 %v1431
    %1753 = vmatprep.subr.mxu0 %v1441
    %1754 = vmatpush1.msra.mxu0 %v1440
    %1755 = vmatprep.subr.mxu0 %v1450
    %1756 = vmatpush1.msra.mxu0 %v1449
    %1757 = vmatprep.subr.mxu0 %v1459
    %1758 = vmatpush1.msra.mxu0 %v1458
    %1759 = vmatprep.subr.mxu0 0.0
    %1760 = vmatpush1.msra.mxu0 0.0
    %1761 = vmatprep.subr.mxu0 0.0
    %1762 = vmatpush1.msra.mxu0 0.0
    %1763 = vmatprep.subr.mxu0 0.0
    %1764 = vmatpush1.msra.mxu0 0.0
    %1765 = vmatprep.subr.mxu0 0.0
    %1766 = vmatpush1.msra.mxu0 0.0
    %1767 = vmatprep.subr.mxu0 0.0
    %1768 = vmatpush1.msra.mxu0 0.0
    %1769 = vmatprep.subr.mxu0 0.0
    %1770 = vmatpush1.msra.mxu0 0.0
    %1771 = vmatprep.subr.mxu0 0.0
    %1772 = vmatpush1.msra.mxu0 0.0
    %1773 = vmatprep.subr.mxu0 0.0
    %1774 = vmatpush1.msra.mxu0 0.0
    %1775 = vmatprep.subr.mxu0 0.0
    %1776 = vmatpush1.msra.mxu0 0.0
    %1777 = vmatprep.subr.mxu0 0.0
    %1778 = vmatpush1.msra.mxu0 0.0
    %1779 = vmatprep.subr.mxu0 0.0
    %1780 = vmatpush1.msra.mxu0 0.0
    %1781 = vmatprep.subr.mxu0 0.0
    %1782 = vmatpush1.msra.mxu0 0.0
    %1783 = vmatprep.subr.mxu0 0.0
    %1784 = vmatpush1.msra.mxu0 0.0
    %1785 = vmatprep.subr.mxu0 0.0
    %1786 = vmatpush1.msra.mxu0 0.0
    %1787 = vmatprep.subr.mxu0 0.0
    %1788 = vmatpush1.msra.mxu0 0.0
    %1789 = vmatprep.subr.mxu0 0.0
    %1790 = vmatpush1.msra.mxu0 0.0
    %1791 = vmatprep.mubr.f32.mxu0 0.0
    %1792 = vmatmul.mubr.f32.gmra.mrb[0].mxu0 %v1032
    %v1793 = vpop.f32.mrb[0].mxu0
    %v1794 = vadd.f32 %v1723, %v1793
    %v1795 = vpop.f32.mrb[0].mxu0
    %v1796 = vadd.f32 %v1725, %v1795
    %1797 = vdwg.mxu0
    %1798 = vmatprep.subr.mxu0 %v1038
    %1799 = vmatpush1.msra.mxu0 %v1037
    %1800 = vmatprep.subr.mxu0 %v1047
    %1801 = vmatpush1.msra.mxu0 %v1046
    %1802 = vmatprep.subr.mxu0 %v1056
    %1803 = vmatpush1.msra.mxu0 %v1055
    %1804 = vmatprep.subr.mxu0 %v1065
    %1805 = vmatpush1.msra.mxu0 %v1064
    %1806 = vmatprep.subr.mxu0 %v1074
    %1807 = vmatpush1.msra.mxu0 %v1073
    %1808 = vmatprep.subr.mxu0 %v1083
    %1809 = vmatpush1.msra.mxu0 %v1082
    %1810 = vmatprep.subr.mxu0 %v1092
    %1811 = vmatpush1.msra.mxu0 %v1091
    %1812 = vmatprep.subr.mxu0 %v1101
    %1813 = vmatpush1.msra.mxu0 %v1100
    %1814 = vmatprep.subr.mxu0 %v1110
    %1815 = vmatpush1.msra.mxu0 %v1109
    %1816 = vmatprep.subr.mxu0 %v1119
    %1817 = vmatpush1.msra.mxu0 %v1118
    %1818 = vmatprep.subr.mxu0 %v1128
    %1819 = vmatpush1.msra.mxu0 %v1127
    %1820 = vmatprep.subr.mxu0 %v1137
    %1821 = vmatpush1.msra.mxu0 %v1136
    %1822 = vmatprep.subr.mxu0 %v1146
    %1823 = vmatpush1.msra.mxu0 %v1145
    %1824 = vmatprep.subr.mxu0 %v1155
    %1825 = vmatpush1.msra.mxu0 %v1154
    %1826 = vmatprep.subr.mxu0 %v1164
    %1827 = vmatpush1.msra.mxu0 %v1163
    %1828 = vmatprep.subr.mxu0 %v1173
    %1829 = vmatpush1.msra.mxu0 %v1172
    %1830 = vmatprep.subr.mxu0 %v1182
    %1831 = vmatpush1.msra.mxu0 %v1181
    %1832 = vmatprep.subr.mxu0 %v1191
    %1833 = vmatpush1.msra.mxu0 %v1190
    %1834 = vmatprep.subr.mxu0 %v1200
    %1835 = vmatpush1.msra.mxu0 %v1199
    %1836 = vmatprep.subr.mxu0 %v1209
    %1837 = vmatpush1.msra.mxu0 %v1208
    %1838 = vmatprep.subr.mxu0 %v1218
    %1839 = vmatpush1.msra.mxu0 %v1217
    %1840 = vmatprep.subr.mxu0 %v1227
    %1841 = vmatpush1.msra.mxu0 %v1226
    %1842 = vmatprep.subr.mxu0 %v1236
    %1843 = vmatpush1.msra.mxu0 %v1235
    %1844 = vmatprep.subr.mxu0 %v1245
    %1845 = vmatpush1.msra.mxu0 %v1244
    %1846 = vmatprep.subr.mxu0 %v1254
    %1847 = vmatpush1.msra.mxu0 %v1253
    %1848 = vmatprep.subr.mxu0 %v1263
    %1849 = vmatpush1.msra.mxu0 %v1262
    %1850 = vmatprep.subr.mxu0 %v1272
    %1851 = vmatpush1.msra.mxu0 %v1271
    %1852 = vmatprep.subr.mxu0 %v1281
    %1853 = vmatpush1.msra.mxu0 %v1280
    %1854 = vmatprep.subr.mxu0 %v1290
    %1855 = vmatpush1.msra.mxu0 %v1289
    %1856 = vmatprep.subr.mxu0 %v1299
    %1857 = vmatpush1.msra.mxu0 %v1298
    %1858 = vmatprep.subr.mxu0 %v1308
    %1859 = vmatpush1.msra.mxu0 %v1307
    %1860 = vmatprep.subr.mxu0 %v1317
    %1861 = vmatpush1.msra.mxu0 %v1316
    %1862 = vmatprep.mubr.f32.mxu0 %v1031
    %1863 = vmatmul.mubr.f32.gmra.mrb[0].mxu0 %v1030
    %v1864 = vpop.f32.mrb[0].mxu0
    %v1865 = vadd.f32 %v1488, %v1864
    %v1866 = vpop.f32.mrb[0].mxu0
    %v1867 = vadd.f32 %v1492, %v1866
    %1868 = vdwg.mxu0
    %1869 = vmatprep.subr.mxu0 %v1326
    %1870 = vmatpush1.msra.mxu0 %v1325
    %1871 = vmatprep.subr.mxu0 %v1335
    %1872 = vmatpush1.msra.mxu0 %v1334
    %1873 = vmatprep.subr.mxu0 %v1344
    %1874 = vmatpush1.msra.mxu0 %v1343
    %1875 = vmatprep.subr.mxu0 %v1353
    %1876 = vmatpush1.msra.mxu0 %v1352
    %1877 = vmatprep.subr.mxu0 %v1362
    %1878 = vmatpush1.msra.mxu0 %v1361
    %1879 = vmatprep.subr.mxu0 %v1371
    %1880 = vmatpush1.msra.mxu0 %v1370
    %1881 = vmatprep.subr.mxu0 %v1380
    %1882 = vmatpush1.msra.mxu0 %v1379
    %1883 = vmatprep.subr.mxu0 %v1389
    %1884 = vmatpush1.msra.mxu0 %v1388
    %1885 = vmatprep.subr.mxu0 %v1398
    %1886 = vmatpush1.msra.mxu0 %v1397
    %1887 = vmatprep.subr.mxu0 %v1407
    %1888 = vmatpush1.msra.mxu0 %v1406
    %1889 = vmatprep.subr.mxu0 %v1416
    %1890 = vmatpush1.msra.mxu0 %v1415
    %1891 = vmatprep.subr.mxu0 %v1425
    %1892 = vmatpush1.msra.mxu0 %v1424
    %1893 = vmatprep.subr.mxu0 %v1434
    %1894 = vmatpush1.msra.mxu0 %v1433
    %1895 = vmatprep.subr.mxu0 %v1443
    %1896 = vmatpush1.msra.mxu0 %v1442
    %1897 = vmatprep.subr.mxu0 %v1452
    %1898 = vmatpush1.msra.mxu0 %v1451
    %1899 = vmatprep.subr.mxu0 %v1461
    %1900 = vmatpush1.msra.mxu0 %v1460
    %1901 = vmatprep.subr.mxu0 0.0
    %1902 = vmatpush1.msra.mxu0 0.0
    %1903 = vmatprep.subr.mxu0 0.0
    %1904 = vmatpush1.msra.mxu0 0.0
    %1905 = vmatprep.subr.mxu0 0.0
    %1906 = vmatpush1.msra.mxu0 0.0
    %1907 = vmatprep.subr.mxu0 0.0
    %1908 = vmatpush1.msra.mxu0 0.0
    %1909 = vmatprep.subr.mxu0 0.0
    %1910 = vmatpush1.msra.mxu0 0.0
    %1911 = vmatprep.subr.mxu0 0.0
    %1912 = vmatpush1.msra.mxu0 0.0
    %1913 = vmatprep.subr.mxu0 0.0
    %1914 = vmatpush1.msra.mxu0 0.0
    %1915 = vmatprep.subr.mxu0 0.0
    %1916 = vmatpush1.msra.mxu0 0.0
    %1917 = vmatprep.subr.mxu0 0.0
    %1918 = vmatpush1.msra.mxu0 0.0
    %1919 = vmatprep.subr.mxu0 0.0
    %1920 = vmatpush1.msra.mxu0 0.0
    %1921 = vmatprep.subr.mxu0 0.0
    %1922 = vmatpush1.msra.mxu0 0.0
    %1923 = vmatprep.subr.mxu0 0.0
    %1924 = vmatpush1.msra.mxu0 0.0
    %1925 = vmatprep.subr.mxu0 0.0
    %1926 = vmatpush1.msra.mxu0 0.0
    %1927 = vmatprep.subr.mxu0 0.0
    %1928 = vmatpush1.msra.mxu0 0.0
    %1929 = vmatprep.subr.mxu0 0.0
    %1930 = vmatpush1.msra.mxu0 0.0
    %1931 = vmatprep.subr.mxu0 0.0
    %1932 = vmatpush1.msra.mxu0 0.0
    %1933 = vmatprep.mubr.f32.mxu0 0.0
    %1934 = vmatmul.mubr.f32.gmra.mrb[0].mxu0 %v1032
    %v1935 = vpop.f32.mrb[0].mxu0
    %v1936 = vadd.f32 %v1865, %v1935
    %v1937 = vpop.f32.mrb[0].mxu0
    %v1938 = vadd.f32 %v1867, %v1937
    %1939 = vdwg.mxu0
    %1940 = vmatprep.subr.mxu0 %v1040
    %1941 = vmatpush1.msra.mxu0 %v1039
    %1942 = vmatprep.subr.mxu0 %v1049
    %1943 = vmatpush1.msra.mxu0 %v1048
    %1944 = vmatprep.subr.mxu0 %v1058
    %1945 = vmatpush1.msra.mxu0 %v1057
    %1946 = vmatprep.subr.mxu0 %v1067
    %1947 = vmatpush1.msra.mxu0 %v1066
    %1948 = vmatprep.subr.mxu0 %v1076
    %1949 = vmatpush1.msra.mxu0 %v1075
    %1950 = vmatprep.subr.mxu0 %v1085
    %1951 = vmatpush1.msra.mxu0 %v1084
    %1952 = vmatprep.subr.mxu0 %v1094
    %1953 = vmatpush1.msra.mxu0 %v1093
    %1954 = vmatprep.subr.mxu0 %v1103
    %1955 = vmatpush1.msra.mxu0 %v1102
    %1956 = vmatprep.subr.mxu0 %v1112
    %1957 = vmatpush1.msra.mxu0 %v1111
    %1958 = vmatprep.subr.mxu0 %v1121
    %1959 = vmatpush1.msra.mxu0 %v1120
    %1960 = vmatprep.subr.mxu0 %v1130
    %1961 = vmatpush1.msra.mxu0 %v1129
    %1962 = vmatprep.subr.mxu0 %v1139
    %1963 = vmatpush1.msra.mxu0 %v1138
    %1964 = vmatprep.subr.mxu0 %v1148
    %1965 = vmatpush1.msra.mxu0 %v1147
    %1966 = vmatprep.subr.mxu0 %v1157
    %1967 = vmatpush1.msra.mxu0 %v1156
    %1968 = vmatprep.subr.mxu0 %v1166
    %1969 = vmatpush1.msra.mxu0 %v1165
    %1970 = vmatprep.subr.mxu0 %v1175
    %1971 = vmatpush1.msra.mxu0 %v1174
    %1972 = vmatprep.subr.mxu0 %v1184
    %1973 = vmatpush1.msra.mxu0 %v1183
    %1974 = vmatprep.subr.mxu0 %v1193
    %1975 = vmatpush1.msra.mxu0 %v1192
    %1976 = vmatprep.subr.mxu0 %v1202
    %1977 = vmatpush1.msra.mxu0 %v1201
    %1978 = vmatprep.subr.mxu0 %v1211
    %1979 = vmatpush1.msra.mxu0 %v1210
    %1980 = vmatprep.subr.mxu0 %v1220
    %1981 = vmatpush1.msra.mxu0 %v1219
    %1982 = vmatprep.subr.mxu0 %v1229
    %1983 = vmatpush1.msra.mxu0 %v1228
    %1984 = vmatprep.subr.mxu0 %v1238
    %1985 = vmatpush1.msra.mxu0 %v1237
    %1986 = vmatprep.subr.mxu0 %v1247
    %1987 = vmatpush1.msra.mxu0 %v1246
    %1988 = vmatprep.subr.mxu0 %v1256
    %1989 = vmatpush1.msra.mxu0 %v1255
    %1990 = vmatprep.subr.mxu0 %v1265
    %1991 = vmatpush1.msra.mxu0 %v1264
    %1992 = vmatprep.subr.mxu0 %v1274
    %1993 = vmatpush1.msra.mxu0 %v1273
    %1994 = vmatprep.subr.mxu0 %v1283
    %1995 = vmatpush1.msra.mxu0 %v1282
    %1996 = vmatprep.subr.mxu0 %v1292
    %1997 = vmatpush1.msra.mxu0 %v1291
    %1998 = vmatprep.subr.mxu0 %v1301
    %1999 = vmatpush1.msra.mxu0 %v1300
    %2000 = vmatprep.subr.mxu0 %v1310
    %2001 = vmatpush1.msra.mxu0 %v1309
    %2002 = vmatprep.subr.mxu0 %v1319
    %2003 = vmatpush1.msra.mxu0 %v1318
    %2004 = vmatprep.mubr.f32.mxu0 %v1031
    %2005 = vmatmul.mubr.f32.gmra.mrb[0].mxu0 %v1030
    %v2006 = vpop.f32.mrb[0].mxu0
    %v2007 = vadd.f32 %v1496, %v2006
    %v2008 = vpop.f32.mrb[0].mxu0
    %v2009 = vadd.f32 %v1500, %v2008
    %2010 = vdwg.mxu0
    %2011 = vmatprep.subr.mxu0 %v1328
    %2012 = vmatpush1.msra.mxu0 %v1327
    %2013 = vmatprep.subr.mxu0 %v1337
    %2014 = vmatpush1.msra.mxu0 %v1336
    %2015 = vmatprep.subr.mxu0 %v1346
    %2016 = vmatpush1.msra.mxu0 %v1345
    %2017 = vmatprep.subr.mxu0 %v1355
    %2018 = vmatpush1.msra.mxu0 %v1354
    %2019 = vmatprep.subr.mxu0 %v1364
    %2020 = vmatpush1.msra.mxu0 %v1363
    %2021 = vmatprep.subr.mxu0 %v1373
    %2022 = vmatpush1.msra.mxu0 %v1372
    %2023 = vmatprep.subr.mxu0 %v1382
    %2024 = vmatpush1.msra.mxu0 %v1381
    %2025 = vmatprep.subr.mxu0 %v1391
    %2026 = vmatpush1.msra.mxu0 %v1390
    %2027 = vmatprep.subr.mxu0 %v1400
    %2028 = vmatpush1.msra.mxu0 %v1399
    %2029 = vmatprep.subr.mxu0 %v1409
    %2030 = vmatpush1.msra.mxu0 %v1408
    %2031 = vmatprep.subr.mxu0 %v1418
    %2032 = vmatpush1.msra.mxu0 %v1417
    %2033 = vmatprep.subr.mxu0 %v1427
    %2034 = vmatpush1.msra.mxu0 %v1426
    %2035 = vmatprep.subr.mxu0 %v1436
    %2036 = vmatpush1.msra.mxu0 %v1435
    %2037 = vmatprep.subr.mxu0 %v1445
    %2038 = vmatpush1.msra.mxu0 %v1444
    %2039 = vmatprep.subr.mxu0 %v1454
    %2040 = vmatpush1.msra.mxu0 %v1453
    %2041 = vmatprep.subr.mxu0 %v1463
    %2042 = vmatpush1.msra.mxu0 %v1462
    %2043 = vmatprep.subr.mxu0 0.0
    %2044 = vmatpush1.msra.mxu0 0.0
    %2045 = vmatprep.subr.mxu0 0.0
    %2046 = vmatpush1.msra.mxu0 0.0
    %2047 = vmatprep.subr.mxu0 0.0
    %2048 = vmatpush1.msra.mxu0 0.0
    %2049 = vmatprep.subr.mxu0 0.0
    %2050 = vmatpush1.msra.mxu0 0.0
    %2051 = vmatprep.subr.mxu0 0.0
    %2052 = vmatpush1.msra.mxu0 0.0
    %2053 = vmatprep.subr.mxu0 0.0
    %2054 = vmatpush1.msra.mxu0 0.0
    %2055 = vmatprep.subr.mxu0 0.0
    %2056 = vmatpush1.msra.mxu0 0.0
    %2057 = vmatprep.subr.mxu0 0.0
    %2058 = vmatpush1.msra.mxu0 0.0
    %2059 = vmatprep.subr.mxu0 0.0
    %2060 = vmatpush1.msra.mxu0 0.0
    %2061 = vmatprep.subr.mxu0 0.0
    %2062 = vmatpush1.msra.mxu0 0.0
    %2063 = vmatprep.subr.mxu0 0.0
    %2064 = vmatpush1.msra.mxu0 0.0
    %2065 = vmatprep.subr.mxu0 0.0
    %2066 = vmatpush1.msra.mxu0 0.0
    %2067 = vmatprep.subr.mxu0 0.0
    %2068 = vmatpush1.msra.mxu0 0.0
    %2069 = vmatprep.subr.mxu0 0.0
    %2070 = vmatpush1.msra.mxu0 0.0
    %2071 = vmatprep.subr.mxu0 0.0
    %2072 = vmatpush1.msra.mxu0 0.0
    %2073 = vmatprep.subr.mxu0 0.0
    %2074 = vmatpush1.msra.mxu0 0.0
    %2075 = vmatprep.mubr.f32.mxu0 0.0
    %2076 = vmatmul.mubr.f32.gmra.mrb[0].mxu0 %v1032
    %v2077 = vpop.f32.mrb[0].mxu0
    %v2078 = vadd.f32 %v2007, %v2077
    %v2079 = vpop.f32.mrb[0].mxu0
    %v2080 = vadd.f32 %v2009, %v2079
    %2081 = vdwg.mxu0
    %2082 = vmatprep.subr.mxu0 0.0
    %2083 = vmatpush1.msra.mxu0 %v1041
    %2084 = vmatprep.subr.mxu0 0.0
    %2085 = vmatpush1.msra.mxu0 %v1050
    %2086 = vmatprep.subr.mxu0 0.0
    %2087 = vmatpush1.msra.mxu0 %v1059
    %2088 = vmatprep.subr.mxu0 0.0
    %2089 = vmatpush1.msra.mxu0 %v1068
    %2090 = vmatprep.subr.mxu0 0.0
    %2091 = vmatpush1.msra.mxu0 %v1077
    %2092 = vmatprep.subr.mxu0 0.0
    %2093 = vmatpush1.msra.mxu0 %v1086
    %2094 = vmatprep.subr.mxu0 0.0
    %2095 = vmatpush1.msra.mxu0 %v1095
    %2096 = vmatprep.subr.mxu0 0.0
    %2097 = vmatpush1.msra.mxu0 %v1104
    %2098 = vmatprep.subr.mxu0 0.0
    %2099 = vmatpush1.msra.mxu0 %v1113
    %2100 = vmatprep.subr.mxu0 0.0
    %2101 = vmatpush1.msra.mxu0 %v1122
    %2102 = vmatprep.subr.mxu0 0.0
    %2103 = vmatpush1.msra.mxu0 %v1131
    %2104 = vmatprep.subr.mxu0 0.0
    %2105 = vmatpush1.msra.mxu0 %v1140
    %2106 = vmatprep.subr.mxu0 0.0
    %2107 = vmatpush1.msra.mxu0 %v1149
    %2108 = vmatprep.subr.mxu0 0.0
    %2109 = vmatpush1.msra.mxu0 %v1158
    %2110 = vmatprep.subr.mxu0 0.0
    %2111 = vmatpush1.msra.mxu0 %v1167
    %2112 = vmatprep.subr.mxu0 0.0
    %2113 = vmatpush1.msra.mxu0 %v1176
    %2114 = vmatprep.subr.mxu0 0.0
    %2115 = vmatpush1.msra.mxu0 %v1185
    %2116 = vmatprep.subr.mxu0 0.0
    %2117 = vmatpush1.msra.mxu0 %v1194
    %2118 = vmatprep.subr.mxu0 0.0
    %2119 = vmatpush1.msra.mxu0 %v1203
    %2120 = vmatprep.subr.mxu0 0.0
    %2121 = vmatpush1.msra.mxu0 %v1212
    %2122 = vmatprep.subr.mxu0 0.0
    %2123 = vmatpush1.msra.mxu0 %v1221
    %2124 = vmatprep.subr.mxu0 0.0
    %2125 = vmatpush1.msra.mxu0 %v1230
    %2126 = vmatprep.subr.mxu0 0.0
    %2127 = vmatpush1.msra.mxu0 %v1239
    %2128 = vmatprep.subr.mxu0 0.0
    %2129 = vmatpush1.msra.mxu0 %v1248
    %2130 = vmatprep.subr.mxu0 0.0
    %2131 = vmatpush1.msra.mxu0 %v1257
    %2132 = vmatprep.subr.mxu0 0.0
    %2133 = vmatpush1.msra.mxu0 %v1266
    %2134 = vmatprep.subr.mxu0 0.0
    %2135 = vmatpush1.msra.mxu0 %v1275
    %2136 = vmatprep.subr.mxu0 0.0
    %2137 = vmatpush1.msra.mxu0 %v1284
    %2138 = vmatprep.subr.mxu0 0.0
    %2139 = vmatpush1.msra.mxu0 %v1293
    %2140 = vmatprep.subr.mxu0 0.0
    %2141 = vmatpush1.msra.mxu0 %v1302
    %2142 = vmatprep.subr.mxu0 0.0
    %2143 = vmatpush1.msra.mxu0 %v1311
    %2144 = vmatprep.subr.mxu0 0.0
    %2145 = vmatpush1.msra.mxu0 %v1320
    %2146 = vmatprep.mubr.f32.mxu0 %v1031
    %2147 = vmatmul.mubr.f32.gmra.mrb[0].mxu0 %v1030
    %v2148 = vpop.f32.mrb[0].mxu0
    %v2149 = vadd.f32 %v1504, %v2148
    %v2150 = vpop.f32.mrb[0].mxu0
    %2151 = vdwg.mxu0
    %2152 = vmatprep.subr.mxu0 0.0
    %2153 = vmatpush1.msra.mxu0 %v1329
    %2154 = vmatprep.subr.mxu0 0.0
    %2155 = vmatpush1.msra.mxu0 %v1338
    %2156 = vmatprep.subr.mxu0 0.0
    %2157 = vmatpush1.msra.mxu0 %v1347
    %2158 = vmatprep.subr.mxu0 0.0
    %2159 = vmatpush1.msra.mxu0 %v1356
    %2160 = vmatprep.subr.mxu0 0.0
    %2161 = vmatpush1.msra.mxu0 %v1365
    %2162 = vmatprep.subr.mxu0 0.0
    %2163 = vmatpush1.msra.mxu0 %v1374
    %2164 = vmatprep.subr.mxu0 0.0
    %2165 = vmatpush1.msra.mxu0 %v1383
    %2166 = vmatprep.subr.mxu0 0.0
    %2167 = vmatpush1.msra.mxu0 %v1392
    %2168 = vmatprep.subr.mxu0 0.0
    %2169 = vmatpush1.msra.mxu0 %v1401
    %2170 = vmatprep.subr.mxu0 0.0
    %2171 = vmatpush1.msra.mxu0 %v1410
    %2172 = vmatprep.subr.mxu0 0.0
    %2173 = vmatpush1.msra.mxu0 %v1419
    %2174 = vmatprep.subr.mxu0 0.0
    %2175 = vmatpush1.msra.mxu0 %v1428
    %2176 = vmatprep.subr.mxu0 0.0
    %2177 = vmatpush1.msra.mxu0 %v1437
    %2178 = vmatprep.subr.mxu0 0.0
    %2179 = vmatpush1.msra.mxu0 %v1446
    %2180 = vmatprep.subr.mxu0 0.0
    %2181 = vmatpush1.msra.mxu0 %v1455
    %2182 = vmatprep.subr.mxu0 0.0
    %2183 = vmatpush1.msra.mxu0 %v1464
    %2184 = vmatprep.subr.mxu0 0.0
    %2185 = vmatpush1.msra.mxu0 0.0
    %2186 = vmatprep.subr.mxu0 0.0
    %2187 = vmatpush1.msra.mxu0 0.0
    %2188 = vmatprep.subr.mxu0 0.0
    %2189 = vmatpush1.msra.mxu0 0.0
    %2190 = vmatprep.subr.mxu0 0.0
    %2191 = vmatpush1.msra.mxu0 0.0
    %2192 = vmatprep.subr.mxu0 0.0
    %2193 = vmatpush1.msra.mxu0 0.0
    %2194 = vmatprep.subr.mxu0 0.0
    %2195 = vmatpush1.msra.mxu0 0.0
    %2196 = vmatprep.subr.mxu0 0.0
    %2197 = vmatpush1.msra.mxu0 0.0
    %2198 = vmatprep.subr.mxu0 0.0
    %2199 = vmatpush1.msra.mxu0 0.0
    %2200 = vmatprep.subr.mxu0 0.0
    %2201 = vmatpush1.msra.mxu0 0.0
    %2202 = vmatprep.subr.mxu0 0.0
    %2203 = vmatpush1.msra.mxu0 0.0
    %2204 = vmatprep.subr.mxu0 0.0
    %2205 = vmatpush1.msra.mxu0 0.0
    %2206 = vmatprep.subr.mxu0 0.0
    %2207 = vmatpush1.msra.mxu0 0.0
    %2208 = vmatprep.subr.mxu0 0.0
    %2209 = vmatpush1.msra.mxu0 0.0
    %2210 = vmatprep.subr.mxu0 0.0
    %2211 = vmatpush1.msra.mxu0 0.0
    %2212 = vmatprep.subr.mxu0 0.0
    %2213 = vmatpush1.msra.mxu0 0.0
    %2214 = vmatprep.subr.mxu0 0.0
    %2215 = vmatpush1.msra.mxu0 0.0
    %2216 = vmatprep.mubr.f32.mxu0 0.0
    %2217 = vmatmul.mubr.f32.gmra.mrb[0].mxu0 %v1032
    %v2218 = vpop.f32.mrb[0].mxu0
    %v2219 = vadd.f32 %v2149, %v2218
    %v2220 = vpop.f32.mrb[0].mxu0
    %2221 = vdwg.mxu0
    %v2222 = vmul.f32 %v1652, 0.01
    %v2223 = vmul.f32 %v1654, 0.01
    %v2224 = vmul.f32 %v1794, 0.01
    %v2225 = vmul.f32 %v1796, 0.01
    %v2226 = vmul.f32 %v1936, 0.01
    %v2227 = vmul.f32 %v1938, 0.01
    %v2228 = vmul.f32 %v2078, 0.01
    %v2229 = vmul.f32 %v2080, 0.01
    %v2230 = vmul.f32 %v2219, 0.01
    %v2231 = vmax.f32 %v1652, %v2222
    %v2232 = vmax.f32 %v1654, %v2223
    %v2233 = vmax.f32 %v1794, %v2224
    %v2234 = vmax.f32 %v1796, %v2225
    %v2235 = vmax.f32 %v1936, %v2226
    %v2236 = vmax.f32 %v1938, %v2227
    %v2237 = vmax.f32 %v2078, %v2228
    %v2238 = vmax.f32 %v2080, %v2229
    %v2239 = vmax.f32 %v2219, %v2230
    %v2240 = vld [vmem:[#allocation25] sm:$0xff]
    %v2241 = vld [vmem:[#allocation25 + $0x8] sm:$0xff]
    %v2242 = vld [vmem:[#allocation25 + $0x10] sm:$0xff]
    %v2243 = vld [vmem:[#allocation25 + $0x18] sm:$0xff]
    %v2244 = vld [vmem:[#allocation25 + $0x20] sm:$0xff]
    %v2245 = vld [vmem:[#allocation25 + $0x28] sm:$0xff]
    %v2246 = vld [vmem:[#allocation25 + $0x30] sm:$0xff]
    %v2247 = vld [vmem:[#allocation25 + $0x38] sm:$0xff]
    %v2248 = vld [vmem:[#allocation25 + $0x40] sm:$0xff]
    %v2249 = vld [vmem:[#allocation25 + $0x48] sm:$0xff]
    %v2250 = vld [vmem:[#allocation25 + $0x50] sm:$0xff]
    %v2251 = vld [vmem:[#allocation25 + $0x58] sm:$0xff]
    %v2252 = vld [vmem:[#allocation25 + $0x60] sm:$0xff]
    %v2253 = vld [vmem:[#allocation25 + $0x68] sm:$0xff]
    %v2254 = vld [vmem:[#allocation25 + $0x70] sm:$0xff]
    %v2255 = vld [vmem:[#allocation25 + $0x78] sm:$0xff]
    %v2256 = vld [vmem:[#allocation25 + $0x80] sm:$0xff]
    %v2257 = vld [vmem:[#allocation25 + $0x88] sm:$0xff]
    %v2258 = vld [vmem:[#allocation25 + $0x90] sm:$0xff]
    %v2259 = vld [vmem:[#allocation25 + $0x98] sm:$0xff]
    %v2260 = vld [vmem:[#allocation25 + $0xa0] sm:$0xff]
    %v2261 = vld [vmem:[#allocation25 + $0xa8] sm:$0xff]
    %v2262 = vld [vmem:[#allocation25 + $0xb0] sm:$0xff]
    %v2263 = vld [vmem:[#allocation25 + $0xb8] sm:$0xff]
    %v2264 = vld [vmem:[#allocation25 + $0xc0] sm:$0xff]
    %v2265 = vld [vmem:[#allocation25 + $0xc8] sm:$0xff]
    %v2266 = vld [vmem:[#allocation25 + $0xd0] sm:$0xff]
    %v2267 = vld [vmem:[#allocation25 + $0xd8] sm:$0xff]
    %v2268 = vld [vmem:[#allocation25 + $0xe0] sm:$0xff]
    %v2269 = vld [vmem:[#allocation25 + $0xe8] sm:$0xff]
    %v2270 = vld [vmem:[#allocation25 + $0xf0] sm:$0xff]
    %v2271 = vld [vmem:[#allocation25 + $0xf8] sm:$0xff]
    %v2272 = vld [vmem:[#allocation25 + $0x100] sm:$0xff]
    %v2273 = vld [vmem:[#allocation25 + $0x108] sm:$0xff]
    %v2274 = vld [vmem:[#allocation25 + $0x110] sm:$0xff]
    %v2275 = vld [vmem:[#allocation25 + $0x118] sm:$0xff]
    %v2276 = vld [vmem:[#allocation25 + $0x120] sm:$0xff]
    %v2277 = vld [vmem:[#allocation25 + $0x128] sm:$0xff]
    %v2278 = vld [vmem:[#allocation25 + $0x130] sm:$0xff]
    %v2279 = vld [vmem:[#allocation25 + $0x138] sm:$0xff]
    %v2280 = vld [vmem:[#allocation25 + $0x140] sm:$0xff]
    %v2281 = vld [vmem:[#allocation25 + $0x148] sm:$0xff]
    %v2282 = vld [vmem:[#allocation25 + $0x150] sm:$0xff]
    %v2283 = vld [vmem:[#allocation25 + $0x158] sm:$0xff]
    %v2284 = vld [vmem:[#allocation25 + $0x160] sm:$0xff]
    %v2285 = vld [vmem:[#allocation25 + $0x168] sm:$0xff]
    %v2286 = vld [vmem:[#allocation25 + $0x170] sm:$0xff]
    %v2287 = vld [vmem:[#allocation25 + $0x178] sm:$0xff]
    %v2288 = vld [vmem:[#allocation25 + $0x180] sm:$0xff]
    %v2289 = vld [vmem:[#allocation25 + $0x188] sm:$0xff]
    %v2290 = vld [vmem:[#allocation25 + $0x190] sm:$0xff]
    %v2291 = vld [vmem:[#allocation25 + $0x198] sm:$0xff]
    %v2292 = vld [vmem:[#allocation25 + $0x1a0] sm:$0xff]
    %v2293 = vld [vmem:[#allocation25 + $0x1a8] sm:$0xff]
    %v2294 = vld [vmem:[#allocation25 + $0x1b0] sm:$0xff]
    %v2295 = vld [vmem:[#allocation25 + $0x1b8] sm:$0xff]
    %v2296 = vld [vmem:[#allocation25 + $0x1c0] sm:$0xff]
    %v2297 = vld [vmem:[#allocation25 + $0x1c8] sm:$0xff]
    %v2298 = vld [vmem:[#allocation25 + $0x1d0] sm:$0xff]
    %v2299 = vld [vmem:[#allocation25 + $0x1d8] sm:$0xff]
    %v2300 = vld [vmem:[#allocation25 + $0x1e0] sm:$0xff]
    %v2301 = vld [vmem:[#allocation25 + $0x1e8] sm:$0xff]
    %v2302 = vld [vmem:[#allocation25 + $0x1f0] sm:$0xff]
    %v2303 = vld [vmem:[#allocation25 + $0x1f8] sm:$0xff]
    %v2304 = vld [vmem:[#allocation25 + $0x200] sm:$0xff]
    %v2305 = vld [vmem:[#allocation25 + $0x208] sm:$0xff]
    %v2306 = vld [vmem:[#allocation25 + $0x210] sm:$0xff]
    %v2307 = vld [vmem:[#allocation25 + $0x218] sm:$0xff]
    %v2308 = vld [vmem:[#allocation25 + $0x220] sm:$0xff]
    %v2309 = vld [vmem:[#allocation25 + $0x228] sm:$0xff]
    %v2310 = vld [vmem:[#allocation25 + $0x230] sm:$0xff]
    %v2311 = vld [vmem:[#allocation25 + $0x238] sm:$0xff]
    %v2312 = vld [vmem:[#allocation25 + $0x240] sm:$0xff]
    %v2313 = vld [vmem:[#allocation25 + $0x248] sm:$0xff]
    %v2314 = vld [vmem:[#allocation25 + $0x250] sm:$0xff]
    %v2315 = vld [vmem:[#allocation25 + $0x258] sm:$0xff]
    %v2316 = vld [vmem:[#allocation25 + $0x260] sm:$0xff]
    %v2317 = vld [vmem:[#allocation25 + $0x268] sm:$0xff]
    %v2318 = vld [vmem:[#allocation25 + $0x270] sm:$0xff]
    %v2319 = vld [vmem:[#allocation25 + $0x278] sm:$0xff]
    %v2320 = vld [vmem:[#allocation25 + $0x280] sm:$0xff]
    %v2321 = vld [vmem:[#allocation25 + $0x288] sm:$0xff]
    %v2322 = vld [vmem:[#allocation25 + $0x290] sm:$0xff]
    %v2323 = vld [vmem:[#allocation25 + $0x298] sm:$0xff]
    %v2324 = vld [vmem:[#allocation25 + $0x2a0] sm:$0xff]
    %v2325 = vld [vmem:[#allocation25 + $0x2a8] sm:$0xff]
    %v2326 = vld [vmem:[#allocation25 + $0x2b0] sm:$0xff]
    %v2327 = vld [vmem:[#allocation25 + $0x2b8] sm:$0xff]
    %v2328 = vld [vmem:[#allocation25 + $0x2c0] sm:$0xff]
    %v2329 = vld [vmem:[#allocation25 + $0x2c8] sm:$0xff]
    %v2330 = vld [vmem:[#allocation25 + $0x2d0] sm:$0xff]
    %v2331 = vld [vmem:[#allocation25 + $0x2d8] sm:$0xff]
    %v2332 = vld [vmem:[#allocation25 + $0x2e0] sm:$0xff]
    %v2333 = vld [vmem:[#allocation25 + $0x2e8] sm:$0xff]
    %v2334 = vld [vmem:[#allocation25 + $0x2f0] sm:$0xff]
    %v2335 = vld [vmem:[#allocation25 + $0x2f8] sm:$0xff]
    %v2336 = vld [vmem:[#allocation25 + $0x300] sm:$0xff]
    %v2337 = vld [vmem:[#allocation25 + $0x308] sm:$0xff]
    %v2338 = vld [vmem:[#allocation25 + $0x310] sm:$0xff]
    %v2339 = vld [vmem:[#allocation25 + $0x318] sm:$0xff]
    %v2340 = vld [vmem:[#allocation25 + $0x320] sm:$0xff]
    %v2341 = vld [vmem:[#allocation25 + $0x328] sm:$0xff]
    %v2342 = vld [vmem:[#allocation25 + $0x330] sm:$0xff]
    %v2343 = vld [vmem:[#allocation25 + $0x338] sm:$0xff]
    %v2344 = vld [vmem:[#allocation25 + $0x340] sm:$0xff]
    %v2345 = vld [vmem:[#allocation25 + $0x348] sm:$0xff]
    %v2346 = vld [vmem:[#allocation25 + $0x350] sm:$0xff]
    %v2347 = vld [vmem:[#allocation25 + $0x358] sm:$0xff]
    %v2348 = vld [vmem:[#allocation25 + $0x360] sm:$0xff]
    %v2349 = vld [vmem:[#allocation25 + $0x368] sm:$0xff]
    %v2350 = vld [vmem:[#allocation25 + $0x370] sm:$0xff]
    %v2351 = vld [vmem:[#allocation25 + $0x378] sm:$0xff]
    %v2352 = vld [vmem:[#allocation25 + $0x380] sm:$0xff]
    %v2353 = vld [vmem:[#allocation25 + $0x388] sm:$0xff]
    %v2354 = vld [vmem:[#allocation25 + $0x390] sm:$0xff]
    %v2355 = vld [vmem:[#allocation25 + $0x398] sm:$0xff]
    %v2356 = vld [vmem:[#allocation25 + $0x3a0] sm:$0xff]
    %v2357 = vld [vmem:[#allocation25 + $0x3a8] sm:$0xff]
    %v2358 = vld [vmem:[#allocation25 + $0x3b0] sm:$0xff]
    %v2359 = vld [vmem:[#allocation25 + $0x3b8] sm:$0xff]
    %v2360 = vld [vmem:[#allocation25 + $0x3c0] sm:$0xff]
    %v2361 = vld [vmem:[#allocation25 + $0x3c8] sm:$0xff]
    %v2362 = vld [vmem:[#allocation25 + $0x3d0] sm:$0xff]
    %v2363 = vld [vmem:[#allocation25 + $0x3d8] sm:$0xff]
    %v2364 = vld [vmem:[#allocation25 + $0x3e0] sm:$0xff]
    %v2365 = vld [vmem:[#allocation25 + $0x3e8] sm:$0xff]
    %v2366 = vld [vmem:[#allocation25 + $0x3f0] sm:$0xff]
    %v2367 = vld [vmem:[#allocation25 + $0x3f8] sm:$0xff]
    %v2368 = vld [vmem:[#allocation25 + $0x400] sm:$0xff]
    %v2369 = vld [vmem:[#allocation25 + $0x408] sm:$0xff]
    %v2370 = vld [vmem:[#allocation25 + $0x410] sm:$0xff]
    %v2371 = vld [vmem:[#allocation25 + $0x418] sm:$0xff]
    %v2372 = vld [vmem:[#allocation25 + $0x420] sm:$0xff]
    %v2373 = vld [vmem:[#allocation25 + $0x428] sm:$0xff]
    %v2374 = vld [vmem:[#allocation25 + $0x430] sm:$0xff]
    %v2375 = vld [vmem:[#allocation25 + $0x438] sm:$0xff]
    %v2376 = vld [vmem:[#allocation25 + $0x440] sm:$0xff]
    %v2377 = vld [vmem:[#allocation25 + $0x448] sm:$0xff]
    %v2378 = vld [vmem:[#allocation25 + $0x450] sm:$0xff]
    %v2379 = vld [vmem:[#allocation25 + $0x458] sm:$0xff]
    %v2380 = vld [vmem:[#allocation25 + $0x460] sm:$0xff]
    %v2381 = vld [vmem:[#allocation25 + $0x468] sm:$0xff]
    %v2382 = vld [vmem:[#allocation25 + $0x470] sm:$0xff]
    %v2383 = vld [vmem:[#allocation25 + $0x478] sm:$0xff]
    %v2384 = vld [vmem:[#allocation25 + $0x480] sm:$0xff]
    %v2385 = vld [vmem:[#allocation25 + $0x488] sm:$0xff]
    %v2386 = vld [vmem:[#allocation25 + $0x490] sm:$0xff]
    %v2387 = vld [vmem:[#allocation25 + $0x498] sm:$0xff]
    %v2388 = vld [vmem:[#allocation25 + $0x4a0] sm:$0xff]
    %v2389 = vld [vmem:[#allocation25 + $0x4a8] sm:$0xff]
    %v2390 = vld [vmem:[#allocation25 + $0x4b0] sm:$0xff]
    %v2391 = vld [vmem:[#allocation25 + $0x4b8] sm:$0xff]
    %v2392 = vld [vmem:[#allocation25 + $0x4c0] sm:$0xff]
    %v2393 = vld [vmem:[#allocation25 + $0x4c8] sm:$0xff]
    %v2394 = vld [vmem:[#allocation25 + $0x4d0] sm:$0xff]
    %v2395 = vld [vmem:[#allocation25 + $0x4d8] sm:$0xff]
    %v2396 = vld [vmem:[#allocation25 + $0x4e0] sm:$0xff]
    %v2397 = vld [vmem:[#allocation25 + $0x4e8] sm:$0xff]
    %v2398 = vld [vmem:[#allocation25 + $0x4f0] sm:$0xff]
    %v2399 = vld [vmem:[#allocation25 + $0x4f8] sm:$0xff]
    %v2400 = vld [vmem:[#allocation25 + $0x500] sm:$0xff]
    %v2401 = vld [vmem:[#allocation25 + $0x508] sm:$0xff]
    %v2402 = vld [vmem:[#allocation25 + $0x510] sm:$0xff]
    %v2403 = vld [vmem:[#allocation25 + $0x518] sm:$0xff]
    %v2404 = vld [vmem:[#allocation25 + $0x520] sm:$0xff]
    %v2405 = vld [vmem:[#allocation25 + $0x528] sm:$0xff]
    %v2406 = vld [vmem:[#allocation25 + $0x530] sm:$0xff]
    %v2407 = vld [vmem:[#allocation25 + $0x538] sm:$0xff]
    %v2408 = vld [vmem:[#allocation25 + $0x540] sm:$0xff]
    %v2409 = vld [vmem:[#allocation25 + $0x548] sm:$0xff]
    %v2410 = vld [vmem:[#allocation25 + $0x550] sm:$0xff]
    %v2411 = vld [vmem:[#allocation25 + $0x558] sm:$0xff]
    %v2412 = vld [vmem:[#allocation25 + $0x560] sm:$0xff]
    %v2413 = vld [vmem:[#allocation25 + $0x568] sm:$0xff]
    %v2414 = vld [vmem:[#allocation25 + $0x570] sm:$0xff]
    %v2415 = vld [vmem:[#allocation25 + $0x578] sm:$0xff]
    %v2416 = vld [vmem:[#allocation25 + $0x580] sm:$0xff]
    %v2417 = vld [vmem:[#allocation25 + $0x588] sm:$0xff]
    %v2418 = vld [vmem:[#allocation25 + $0x590] sm:$0xff]
    %v2419 = vld [vmem:[#allocation25 + $0x598] sm:$0xff]
    %v2420 = vld [vmem:[#allocation25 + $0x5a0] sm:$0xff]
    %v2421 = vld [vmem:[#allocation25 + $0x5a8] sm:$0xff]
    %v2422 = vld [vmem:[#allocation25 + $0x5b0] sm:$0xff]
    %v2423 = vld [vmem:[#allocation25 + $0x5b8] sm:$0xff]
    %v2424 = vld [vmem:[#allocation25 + $0x5c0] sm:$0xff]
    %v2425 = vld [vmem:[#allocation25 + $0x5c8] sm:$0xff]
    %v2426 = vld [vmem:[#allocation25 + $0x5d0] sm:$0xff]
    %v2427 = vld [vmem:[#allocation25 + $0x5d8] sm:$0xff]
    %v2428 = vld [vmem:[#allocation25 + $0x5e0] sm:$0xff]
    %v2429 = vld [vmem:[#allocation25 + $0x5e8] sm:$0xff]
    %v2430 = vld [vmem:[#allocation25 + $0x5f0] sm:$0xff]
    %v2431 = vld [vmem:[#allocation25 + $0x5f8] sm:$0xff]
    %v2432 = vld [vmem:[#allocation25 + $0x600] sm:$0xff]
    %v2433 = vld [vmem:[#allocation25 + $0x608] sm:$0xff]
    %v2434 = vld [vmem:[#allocation25 + $0x610] sm:$0xff]
    %v2435 = vld [vmem:[#allocation25 + $0x618] sm:$0xff]
    %v2436 = vld [vmem:[#allocation25 + $0x620] sm:$0xff]
    %v2437 = vld [vmem:[#allocation25 + $0x628] sm:$0xff]
    %v2438 = vld [vmem:[#allocation25 + $0x630] sm:$0xff]
    %v2439 = vld [vmem:[#allocation25 + $0x638] sm:$0xff]
    %v2440 = vld [vmem:[#allocation25 + $0x640] sm:$0xff]
    %v2441 = vld [vmem:[#allocation25 + $0x648] sm:$0xff]
    %v2442 = vld [vmem:[#allocation25 + $0x650] sm:$0xff]
    %v2443 = vld [vmem:[#allocation25 + $0x658] sm:$0xff]
    %v2444 = vld [vmem:[#allocation25 + $0x660] sm:$0xff]
    %v2445 = vld [vmem:[#allocation25 + $0x668] sm:$0xff]
    %v2446 = vld [vmem:[#allocation25 + $0x670] sm:$0xff]
    %v2447 = vld [vmem:[#allocation25 + $0x678] sm:$0xff]
    %v2448 = vld [vmem:[#allocation25 + $0x680] sm:$0xff]
    %v2449 = vld [vmem:[#allocation25 + $0x688] sm:$0xff]
    %v2450 = vld [vmem:[#allocation25 + $0x690] sm:$0xff]
    %v2451 = vld [vmem:[#allocation25 + $0x698] sm:$0xff]
    %v2452 = vld [vmem:[#allocation25 + $0x6a0] sm:$0xff]
    %v2453 = vld [vmem:[#allocation25 + $0x6a8] sm:$0xff]
    %v2454 = vld [vmem:[#allocation25 + $0x6b0] sm:$0xff]
    %v2455 = vld [vmem:[#allocation25 + $0x6b8] sm:$0xff]
    %v2456 = vld [vmem:[#allocation25 + $0x6c0] sm:$0xff]
    %v2457 = vld [vmem:[#allocation25 + $0x6c8] sm:$0xff]
    %v2458 = vld [vmem:[#allocation25 + $0x6d0] sm:$0xff]
    %v2459 = vld [vmem:[#allocation25 + $0x6d8] sm:$0xff]
    %v2460 = vld [vmem:[#allocation25 + $0x6e0] sm:$0xff]
    %v2461 = vld [vmem:[#allocation25 + $0x6e8] sm:$0xff]
    %v2462 = vld [vmem:[#allocation25 + $0x6f0] sm:$0xff]
    %v2463 = vld [vmem:[#allocation25 + $0x6f8] sm:$0xff]
    %v2464 = vld [vmem:[#allocation25 + $0x700] sm:$0xff]
    %v2465 = vld [vmem:[#allocation25 + $0x708] sm:$0xff]
    %v2466 = vld [vmem:[#allocation25 + $0x710] sm:$0xff]
    %v2467 = vld [vmem:[#allocation25 + $0x718] sm:$0xff]
    %v2468 = vld [vmem:[#allocation25 + $0x720] sm:$0xff]
    %v2469 = vld [vmem:[#allocation25 + $0x728] sm:$0xff]
    %v2470 = vld [vmem:[#allocation25 + $0x730] sm:$0xff]
    %v2471 = vld [vmem:[#allocation25 + $0x738] sm:$0xff]
    %v2472 = vld [vmem:[#allocation25 + $0x740] sm:$0xff]
    %v2473 = vld [vmem:[#allocation25 + $0x748] sm:$0xff]
    %v2474 = vld [vmem:[#allocation25 + $0x750] sm:$0xff]
    %v2475 = vld [vmem:[#allocation25 + $0x758] sm:$0xff]
    %v2476 = vld [vmem:[#allocation25 + $0x760] sm:$0xff]
    %v2477 = vld [vmem:[#allocation25 + $0x768] sm:$0xff]
    %v2478 = vld [vmem:[#allocation25 + $0x770] sm:$0xff]
    %v2479 = vld [vmem:[#allocation25 + $0x778] sm:$0xff]
    %v2480 = vld [vmem:[#allocation25 + $0x780] sm:$0xff]
    %v2481 = vld [vmem:[#allocation25 + $0x788] sm:$0xff]
    %v2482 = vld [vmem:[#allocation25 + $0x790] sm:$0xff]
    %v2483 = vld [vmem:[#allocation25 + $0x798] sm:$0xff]
    %v2484 = vld [vmem:[#allocation25 + $0x7a0] sm:$0xff]
    %v2485 = vld [vmem:[#allocation25 + $0x7a8] sm:$0xff]
    %v2486 = vld [vmem:[#allocation25 + $0x7b0] sm:$0xff]
    %v2487 = vld [vmem:[#allocation25 + $0x7b8] sm:$0xff]
    %v2488 = vld [vmem:[#allocation25 + $0x7c0] sm:$0xff]
    %v2489 = vld [vmem:[#allocation25 + $0x7c8] sm:$0xff]
    %v2490 = vld [vmem:[#allocation25 + $0x7d0] sm:$0xff]
    %v2491 = vld [vmem:[#allocation25 + $0x7d8] sm:$0xff]
    %v2492 = vld [vmem:[#allocation25 + $0x7e0] sm:$0xff]
    %v2493 = vld [vmem:[#allocation25 + $0x7e8] sm:$0xff]
    %v2494 = vld [vmem:[#allocation25 + $0x7f0] sm:$0xff]
    %v2495 = vld [vmem:[#allocation25 + $0x7f8] sm:$0xff]
    %v2496 = vld [vmem:[#allocation25 + $0x800] sm:$0xff]
    %v2497 = vld [vmem:[#allocation25 + $0x808] sm:$0xff]
    %v2498 = vld [vmem:[#allocation25 + $0x810] sm:$0xff]
    %v2499 = vld [vmem:[#allocation25 + $0x818] sm:$0xff]
    %v2500 = vld [vmem:[#allocation25 + $0x820] sm:$0xff]
    %v2501 = vld [vmem:[#allocation25 + $0x828] sm:$0xff]
    %v2502 = vld [vmem:[#allocation25 + $0x830] sm:$0xff]
    %v2503 = vld [vmem:[#allocation25 + $0x838] sm:$0xff]
    %v2504 = vld [vmem:[#allocation25 + $0x840] sm:$0xff]
    %v2505 = vld [vmem:[#allocation25 + $0x848] sm:$0xff]
    %v2506 = vld [vmem:[#allocation25 + $0x850] sm:$0xff]
    %v2507 = vld [vmem:[#allocation25 + $0x858] sm:$0xff]
    %v2508 = vld [vmem:[#allocation25 + $0x860] sm:$0xff]
    %v2509 = vld [vmem:[#allocation25 + $0x868] sm:$0xff]
    %v2510 = vld [vmem:[#allocation25 + $0x870] sm:$0xff]
    %v2511 = vld [vmem:[#allocation25 + $0x878] sm:$0xff]
    %v2512 = vld [vmem:[#allocation25 + $0x880] sm:$0xff]
    %v2513 = vld [vmem:[#allocation25 + $0x888] sm:$0xff]
    %v2514 = vld [vmem:[#allocation25 + $0x890] sm:$0xff]
    %v2515 = vld [vmem:[#allocation25 + $0x898] sm:$0xff]
    %v2516 = vld [vmem:[#allocation25 + $0x8a0] sm:$0xff]
    %v2517 = vld [vmem:[#allocation25 + $0x8a8] sm:$0xff]
    %v2518 = vld [vmem:[#allocation25 + $0x8b0] sm:$0xff]
    %v2519 = vld [vmem:[#allocation25 + $0x8b8] sm:$0xff]
    %v2520 = vld [vmem:[#allocation25 + $0x8c0] sm:$0xff]
    %v2521 = vld [vmem:[#allocation25 + $0x8c8] sm:$0xff]
    %v2522 = vld [vmem:[#allocation25 + $0x8d0] sm:$0xff]
    %v2523 = vld [vmem:[#allocation25 + $0x8d8] sm:$0xff]
    %v2524 = vld [vmem:[#allocation25 + $0x8e0] sm:$0xff]
    %v2525 = vld [vmem:[#allocation25 + $0x8e8] sm:$0xff]
    %v2526 = vld [vmem:[#allocation25 + $0x8f0] sm:$0xff]
    %v2527 = vld [vmem:[#allocation25 + $0x8f8] sm:$0xff]
    %v2528 = vld [vmem:[#allocation25 + $0x900] sm:$0xff]
    %v2529 = vld [vmem:[#allocation25 + $0x908] sm:$0xff]
    %v2530 = vld [vmem:[#allocation25 + $0x910] sm:$0xff]
    %v2531 = vld [vmem:[#allocation25 + $0x918] sm:$0xff]
    %v2532 = vld [vmem:[#allocation25 + $0x920] sm:$0xff]
    %v2533 = vld [vmem:[#allocation25 + $0x928] sm:$0xff]
    %v2534 = vld [vmem:[#allocation25 + $0x930] sm:$0xff]
    %v2535 = vld [vmem:[#allocation25 + $0x938] sm:$0xff]
    %v2536 = vld [vmem:[#allocation25 + $0x940] sm:$0xff]
    %v2537 = vld [vmem:[#allocation25 + $0x948] sm:$0xff]
    %v2538 = vld [vmem:[#allocation25 + $0x950] sm:$0xff]
    %v2539 = vld [vmem:[#allocation25 + $0x958] sm:$0xff]
    %v2540 = vld [vmem:[#allocation25 + $0x960] sm:$0xff]
    %v2541 = vld [vmem:[#allocation25 + $0x968] sm:$0xff]
    %v2542 = vld [vmem:[#allocation25 + $0x970] sm:$0xff]
    %v2543 = vld [vmem:[#allocation25 + $0x978] sm:$0xff]
    %v2544 = vld [vmem:[#allocation25 + $0x980] sm:$0xff]
    %v2545 = vld [vmem:[#allocation25 + $0x988] sm:$0xff]
    %v2546 = vld [vmem:[#allocation25 + $0x990] sm:$0xff]
    %v2547 = vld [vmem:[#allocation25 + $0x998] sm:$0xff]
    %v2548 = vld [vmem:[#allocation25 + $0x9a0] sm:$0xff]
    %v2549 = vld [vmem:[#allocation25 + $0x9a8] sm:$0xff]
    %v2550 = vld [vmem:[#allocation25 + $0x9b0] sm:$0xff]
    %v2551 = vld [vmem:[#allocation25 + $0x9b8] sm:$0xff]
    %v2552 = vld [vmem:[#allocation25 + $0x9c0] sm:$0xff]
    %v2553 = vld [vmem:[#allocation25 + $0x9c8] sm:$0xff]
    %v2554 = vld [vmem:[#allocation25 + $0x9d0] sm:$0xff]
    %v2555 = vld [vmem:[#allocation25 + $0x9d8] sm:$0xff]
    %v2556 = vld [vmem:[#allocation25 + $0x9e0] sm:$0xff]
    %v2557 = vld [vmem:[#allocation25 + $0x9e8] sm:$0xff]
    %v2558 = vld [vmem:[#allocation25 + $0x9f0] sm:$0xff]
    %v2559 = vld [vmem:[#allocation25 + $0x9f8] sm:$0xff]
    %v2560 = vld [vmem:[#allocation25 + $0xa00] sm:$0xff]
    %v2561 = vld [vmem:[#allocation25 + $0xa08] sm:$0xff]
    %v2562 = vld [vmem:[#allocation25 + $0xa10] sm:$0xff]
    %v2563 = vld [vmem:[#allocation25 + $0xa18] sm:$0xff]
    %v2564 = vld [vmem:[#allocation25 + $0xa20] sm:$0xff]
    %v2565 = vld [vmem:[#allocation25 + $0xa28] sm:$0xff]
    %v2566 = vld [vmem:[#allocation25 + $0xa30] sm:$0xff]
    %v2567 = vld [vmem:[#allocation25 + $0xa38] sm:$0xff]
    %v2568 = vld [vmem:[#allocation25 + $0xa40] sm:$0xff]
    %v2569 = vld [vmem:[#allocation25 + $0xa48] sm:$0xff]
    %v2570 = vld [vmem:[#allocation25 + $0xa50] sm:$0xff]
    %v2571 = vld [vmem:[#allocation25 + $0xa58] sm:$0xff]
    %v2572 = vld [vmem:[#allocation25 + $0xa60] sm:$0xff]
    %v2573 = vld [vmem:[#allocation25 + $0xa68] sm:$0xff]
    %v2574 = vld [vmem:[#allocation25 + $0xa70] sm:$0xff]
    %v2575 = vld [vmem:[#allocation25 + $0xa78] sm:$0xff]
    %v2576 = vld [vmem:[#allocation25 + $0xa80] sm:$0xff]
    %v2577 = vld [vmem:[#allocation25 + $0xa88] sm:$0xff]
    %v2578 = vld [vmem:[#allocation25 + $0xa90] sm:$0xff]
    %v2579 = vld [vmem:[#allocation25 + $0xa98] sm:$0xff]
    %v2580 = vld [vmem:[#allocation25 + $0xaa0] sm:$0xff]
    %v2581 = vld [vmem:[#allocation25 + $0xaa8] sm:$0xff]
    %v2582 = vld [vmem:[#allocation25 + $0xab0] sm:$0xff]
    %v2583 = vld [vmem:[#allocation25 + $0xab8] sm:$0xff]
    %v2584 = vld [vmem:[#allocation25 + $0xac0] sm:$0xff]
    %v2585 = vld [vmem:[#allocation25 + $0xac8] sm:$0xff]
    %v2586 = vld [vmem:[#allocation25 + $0xad0] sm:$0xff]
    %v2587 = vld [vmem:[#allocation25 + $0xad8] sm:$0xff]
    %v2588 = vld [vmem:[#allocation25 + $0xae0] sm:$0xff]
    %v2589 = vld [vmem:[#allocation25 + $0xae8] sm:$0xff]
    %v2590 = vld [vmem:[#allocation25 + $0xaf0] sm:$0xff]
    %v2591 = vld [vmem:[#allocation25 + $0xaf8] sm:$0xff]
    %v2592 = vld [vmem:[#allocation25 + $0xb00] sm:$0xff]
    %v2593 = vld [vmem:[#allocation25 + $0xb08] sm:$0xff]
    %v2594 = vld [vmem:[#allocation25 + $0xb10] sm:$0xff]
    %v2595 = vld [vmem:[#allocation25 + $0xb18] sm:$0xff]
    %v2596 = vld [vmem:[#allocation25 + $0xb20] sm:$0xff]
    %v2597 = vld [vmem:[#allocation25 + $0xb28] sm:$0xff]
    %v2598 = vld [vmem:[#allocation25 + $0xb30] sm:$0xff]
    %v2599 = vld [vmem:[#allocation25 + $0xb38] sm:$0xff]
    %v2600 = vld [vmem:[#allocation25 + $0xb40] sm:$0xff]
    %v2601 = vld [vmem:[#allocation25 + $0xb48] sm:$0xff]
    %v2602 = vld [vmem:[#allocation25 + $0xb50] sm:$0xff]
    %v2603 = vld [vmem:[#allocation25 + $0xb58] sm:$0xff]
    %v2604 = vld [vmem:[#allocation25 + $0xb60] sm:$0xff]
    %v2605 = vld [vmem:[#allocation25 + $0xb68] sm:$0xff]
    %v2606 = vld [vmem:[#allocation25 + $0xb70] sm:$0xff]
    %v2607 = vld [vmem:[#allocation25 + $0xb78] sm:$0xff]
    %v2608 = vld [vmem:[#allocation25 + $0xb80] sm:$0xff]
    %v2609 = vld [vmem:[#allocation25 + $0xb88] sm:$0xff]
    %v2610 = vld [vmem:[#allocation25 + $0xb90] sm:$0xff]
    %v2611 = vld [vmem:[#allocation25 + $0xb98] sm:$0xff]
    %v2612 = vld [vmem:[#allocation25 + $0xba0] sm:$0xff]
    %v2613 = vld [vmem:[#allocation25 + $0xba8] sm:$0xff]
    %v2614 = vld [vmem:[#allocation25 + $0xbb0] sm:$0xff]
    %v2615 = vld [vmem:[#allocation25 + $0xbb8] sm:$0xff]
    %v2616 = vld [vmem:[#allocation25 + $0xbc0] sm:$0xff]
    %v2617 = vld [vmem:[#allocation25 + $0xbc8] sm:$0xff]
    %v2618 = vld [vmem:[#allocation25 + $0xbd0] sm:$0xff]
    %v2619 = vld [vmem:[#allocation25 + $0xbd8] sm:$0xff]
    %v2620 = vld [vmem:[#allocation25 + $0xbe0] sm:$0xff]
    %v2621 = vld [vmem:[#allocation25 + $0xbe8] sm:$0xff]
    %v2622 = vld [vmem:[#allocation25 + $0xbf0] sm:$0xff]
    %v2623 = vld [vmem:[#allocation25 + $0xbf8] sm:$0xff]
    %v2624 = vld [vmem:[#allocation25 + $0xc00] sm:$0xff]
    %v2625 = vld [vmem:[#allocation25 + $0xc08] sm:$0xff]
    %v2626 = vld [vmem:[#allocation25 + $0xc10] sm:$0xff]
    %v2627 = vld [vmem:[#allocation25 + $0xc18] sm:$0xff]
    %v2628 = vld [vmem:[#allocation25 + $0xc20] sm:$0xff]
    %v2629 = vld [vmem:[#allocation25 + $0xc28] sm:$0xff]
    %v2630 = vld [vmem:[#allocation25 + $0xc30] sm:$0xff]
    %v2631 = vld [vmem:[#allocation25 + $0xc38] sm:$0xff]
    %v2632 = vld [vmem:[#allocation25 + $0xc40] sm:$0xff]
    %v2633 = vld [vmem:[#allocation25 + $0xc48] sm:$0xff]
    %v2634 = vld [vmem:[#allocation25 + $0xc50] sm:$0xff]
    %v2635 = vld [vmem:[#allocation25 + $0xc58] sm:$0xff]
    %v2636 = vld [vmem:[#allocation25 + $0xc60] sm:$0xff]
    %v2637 = vld [vmem:[#allocation25 + $0xc68] sm:$0xff]
    %v2638 = vld [vmem:[#allocation25 + $0xc70] sm:$0xff]
    %v2639 = vld [vmem:[#allocation25 + $0xc78] sm:$0xff]
    %v2640 = vld [vmem:[#allocation25 + $0xc80] sm:$0xff]
    %v2641 = vld [vmem:[#allocation25 + $0xc88] sm:$0xff]
    %v2642 = vld [vmem:[#allocation25 + $0xc90] sm:$0xff]
    %v2643 = vld [vmem:[#allocation25 + $0xc98] sm:$0xff]
    %v2644 = vld [vmem:[#allocation25 + $0xca0] sm:$0xff]
    %v2645 = vld [vmem:[#allocation25 + $0xca8] sm:$0xff]
    %v2646 = vld [vmem:[#allocation25 + $0xcb0] sm:$0xff]
    %v2647 = vld [vmem:[#allocation25 + $0xcb8] sm:$0xff]
    %v2648 = vld [vmem:[#allocation25 + $0xcc0] sm:$0xff]
    %v2649 = vld [vmem:[#allocation25 + $0xcc8] sm:$0xff]
    %v2650 = vld [vmem:[#allocation25 + $0xcd0] sm:$0xff]
    %v2651 = vld [vmem:[#allocation25 + $0xcd8] sm:$0xff]
    %v2652 = vld [vmem:[#allocation25 + $0xce0] sm:$0xff]
    %v2653 = vld [vmem:[#allocation25 + $0xce8] sm:$0xff]
    %v2654 = vld [vmem:[#allocation25 + $0xcf0] sm:$0xff]
    %v2655 = vld [vmem:[#allocation25 + $0xcf8] sm:$0xff]
    %v2656 = vld [vmem:[#allocation25 + $0xd00] sm:$0xff]
    %v2657 = vld [vmem:[#allocation25 + $0xd08] sm:$0xff]
    %v2658 = vld [vmem:[#allocation25 + $0xd10] sm:$0xff]
    %v2659 = vld [vmem:[#allocation25 + $0xd18] sm:$0xff]
    %v2660 = vld [vmem:[#allocation25 + $0xd20] sm:$0xff]
    %v2661 = vld [vmem:[#allocation25 + $0xd28] sm:$0xff]
    %v2662 = vld [vmem:[#allocation25 + $0xd30] sm:$0xff]
    %v2663 = vld [vmem:[#allocation25 + $0xd38] sm:$0xff]
    %v2664 = vld [vmem:[#allocation25 + $0xd40] sm:$0xff]
    %v2665 = vld [vmem:[#allocation25 + $0xd48] sm:$0xff]
    %v2666 = vld [vmem:[#allocation25 + $0xd50] sm:$0xff]
    %v2667 = vld [vmem:[#allocation25 + $0xd58] sm:$0xff]
    %v2668 = vld [vmem:[#allocation25 + $0xd60] sm:$0xff]
    %v2669 = vld [vmem:[#allocation25 + $0xd68] sm:$0xff]
    %v2670 = vld [vmem:[#allocation25 + $0xd70] sm:$0xff]
    %v2671 = vld [vmem:[#allocation25 + $0xd78] sm:$0xff]
    %v2672 = vld [vmem:[#allocation25 + $0xd80] sm:$0xff]
    %v2673 = vld [vmem:[#allocation25 + $0xd88] sm:$0xff]
    %v2674 = vld [vmem:[#allocation25 + $0xd90] sm:$0xff]
    %v2675 = vld [vmem:[#allocation25 + $0xd98] sm:$0xff]
    %v2676 = vld [vmem:[#allocation25 + $0xda0] sm:$0xff]
    %v2677 = vld [vmem:[#allocation25 + $0xda8] sm:$0xff]
    %v2678 = vld [vmem:[#allocation25 + $0xdb0] sm:$0xff]
    %v2679 = vld [vmem:[#allocation25 + $0xdb8] sm:$0xff]
    %v2680 = vld [vmem:[#allocation25 + $0xdc0] sm:$0xff]
    %v2681 = vld [vmem:[#allocation25 + $0xdc8] sm:$0xff]
    %v2682 = vld [vmem:[#allocation25 + $0xdd0] sm:$0xff]
    %v2683 = vld [vmem:[#allocation25 + $0xdd8] sm:$0xff]
    %v2684 = vld [vmem:[#allocation25 + $0xde0] sm:$0xff]
    %v2685 = vld [vmem:[#allocation25 + $0xde8] sm:$0xff]
    %v2686 = vld [vmem:[#allocation25 + $0xdf0] sm:$0xff]
    %v2687 = vld [vmem:[#allocation25 + $0xdf8] sm:$0xff]
    %v2688 = vld [vmem:[#allocation25 + $0xe00] sm:$0xff]
    %v2689 = vld [vmem:[#allocation25 + $0xe08] sm:$0xff]
    %v2690 = vld [vmem:[#allocation25 + $0xe10] sm:$0xff]
    %v2691 = vld [vmem:[#allocation25 + $0xe18] sm:$0xff]
    %v2692 = vld [vmem:[#allocation25 + $0xe20] sm:$0xff]
    %v2693 = vld [vmem:[#allocation25 + $0xe28] sm:$0xff]
    %v2694 = vld [vmem:[#allocation25 + $0xe30] sm:$0xff]
    %v2695 = vld [vmem:[#allocation25 + $0xe38] sm:$0xff]
    %v2696 = vld [vmem:[#allocation25 + $0xe40] sm:$0xff]
    %v2697 = vld [vmem:[#allocation25 + $0xe48] sm:$0xff]
    %v2698 = vld [vmem:[#allocation25 + $0xe50] sm:$0xff]
    %v2699 = vld [vmem:[#allocation25 + $0xe58] sm:$0xff]
    %v2700 = vld [vmem:[#allocation25 + $0xe60] sm:$0xff]
    %v2701 = vld [vmem:[#allocation25 + $0xe68] sm:$0xff]
    %v2702 = vld [vmem:[#allocation25 + $0xe70] sm:$0xff]
    %v2703 = vld [vmem:[#allocation25 + $0xe78] sm:$0xff]
    %v2704 = vld [vmem:[#allocation25 + $0xe80] sm:$0xff]
    %v2705 = vld [vmem:[#allocation25 + $0xe88] sm:$0xff]
    %v2706 = vld [vmem:[#allocation25 + $0xe90] sm:$0xff]
    %v2707 = vld [vmem:[#allocation25 + $0xe98] sm:$0xff]
    %v2708 = vld [vmem:[#allocation25 + $0xea0] sm:$0xff]
    %v2709 = vld [vmem:[#allocation25 + $0xea8] sm:$0xff]
    %v2710 = vld [vmem:[#allocation25 + $0xeb0] sm:$0xff]
    %v2711 = vld [vmem:[#allocation25 + $0xeb8] sm:$0xff]
    %v2712 = vld [vmem:[#allocation25 + $0xec0] sm:$0xff]
    %v2713 = vld [vmem:[#allocation25 + $0xec8] sm:$0xff]
    %v2714 = vld [vmem:[#allocation25 + $0xed0] sm:$0xff]
    %v2715 = vld [vmem:[#allocation25 + $0xed8] sm:$0xff]
    %v2716 = vld [vmem:[#allocation25 + $0xee0] sm:$0xff]
    %v2717 = vld [vmem:[#allocation25 + $0xee8] sm:$0xff]
    %v2718 = vld [vmem:[#allocation25 + $0xef0] sm:$0xff]
    %v2719 = vld [vmem:[#allocation25 + $0xef8] sm:$0xff]
    %v2720 = vld [vmem:[#allocation25 + $0xf00] sm:$0xff]
    %v2721 = vld [vmem:[#allocation25 + $0xf08] sm:$0xff]
    %v2722 = vld [vmem:[#allocation25 + $0xf10] sm:$0xff]
    %v2723 = vld [vmem:[#allocation25 + $0xf18] sm:$0xff]
    %v2724 = vld [vmem:[#allocation25 + $0xf20] sm:$0xff]
    %v2725 = vld [vmem:[#allocation25 + $0xf28] sm:$0xff]
    %v2726 = vld [vmem:[#allocation25 + $0xf30] sm:$0xff]
    %v2727 = vld [vmem:[#allocation25 + $0xf38] sm:$0xff]
    %v2728 = vld [vmem:[#allocation25 + $0xf40] sm:$0xff]
    %v2729 = vld [vmem:[#allocation25 + $0xf48] sm:$0xff]
    %v2730 = vld [vmem:[#allocation25 + $0xf50] sm:$0xff]
    %v2731 = vld [vmem:[#allocation25 + $0xf58] sm:$0xff]
    %v2732 = vld [vmem:[#allocation25 + $0xf60] sm:$0xff]
    %v2733 = vld [vmem:[#allocation25 + $0xf68] sm:$0xff]
    %v2734 = vld [vmem:[#allocation25 + $0xf70] sm:$0xff]
    %v2735 = vld [vmem:[#allocation25 + $0xf78] sm:$0xff]
    %v2736 = vld [vmem:[#allocation25 + $0xf80] sm:$0xff]
    %v2737 = vld [vmem:[#allocation25 + $0xf88] sm:$0xff]
    %v2738 = vld [vmem:[#allocation25 + $0xf90] sm:$0xff]
    %v2739 = vld [vmem:[#allocation25 + $0xf98] sm:$0xff]
    %v2740 = vld [vmem:[#allocation25 + $0xfa0] sm:$0xff]
    %v2741 = vld [vmem:[#allocation25 + $0xfa8] sm:$0xff]
    %v2742 = vld [vmem:[#allocation25 + $0xfb0] sm:$0xff]
    %v2743 = vld [vmem:[#allocation25 + $0xfb8] sm:$0xff]
    %v2744 = vld [vmem:[#allocation25 + $0xfc0] sm:$0xff]
    %v2745 = vld [vmem:[#allocation25 + $0xfc8] sm:$0xff]
    %v2746 = vld [vmem:[#allocation25 + $0xfd0] sm:$0xff]
    %v2747 = vld [vmem:[#allocation25 + $0xfd8] sm:$0xff]
    %v2748 = vld [vmem:[#allocation25 + $0xfe0] sm:$0xff]
    %v2749 = vld [vmem:[#allocation25 + $0xfe8] sm:$0xff]
    %v2750 = vld [vmem:[#allocation25 + $0xff0] sm:$0xff]
    %v2751 = vld [vmem:[#allocation25 + $0xff8] sm:$0xff]
    %v2752 = vld [vmem:[#allocation25 + $0x1000] sm:$0xff]
    %v2753 = vld [vmem:[#allocation25 + $0x1008] sm:$0xff]
    %v2754 = vld [vmem:[#allocation25 + $0x1010] sm:$0xff]
    %v2755 = vld [vmem:[#allocation25 + $0x1018] sm:$0xff]
    %v2756 = vld [vmem:[#allocation25 + $0x1020] sm:$0xff]
    %v2757 = vld [vmem:[#allocation25 + $0x1028] sm:$0xff]
    %v2758 = vld [vmem:[#allocation25 + $0x1030] sm:$0xff]
    %v2759 = vld [vmem:[#allocation25 + $0x1038] sm:$0xff]
    %v2760 = vld [vmem:[#allocation25 + $0x1040] sm:$0xff]
    %v2761 = vld [vmem:[#allocation25 + $0x1048] sm:$0xff]
    %v2762 = vld [vmem:[#allocation25 + $0x1050] sm:$0xff]
    %v2763 = vld [vmem:[#allocation25 + $0x1058] sm:$0xff]
    %v2764 = vld [vmem:[#allocation25 + $0x1060] sm:$0xff]
    %v2765 = vld [vmem:[#allocation25 + $0x1068] sm:$0xff]
    %v2766 = vld [vmem:[#allocation25 + $0x1070] sm:$0xff]
    %v2767 = vld [vmem:[#allocation25 + $0x1078] sm:$0xff]
    %v2768 = vld [vmem:[#allocation25 + $0x1080] sm:$0xff]
    %v2769 = vld [vmem:[#allocation25 + $0x1088] sm:$0xff]
    %v2770 = vld [vmem:[#allocation25 + $0x1090] sm:$0xff]
    %v2771 = vld [vmem:[#allocation25 + $0x1098] sm:$0xff]
    %v2772 = vld [vmem:[#allocation25 + $0x10a0] sm:$0xff]
    %v2773 = vld [vmem:[#allocation25 + $0x10a8] sm:$0xff]
    %v2774 = vld [vmem:[#allocation25 + $0x10b0] sm:$0xff]
    %v2775 = vld [vmem:[#allocation25 + $0x10b8] sm:$0xff]
    %v2776 = vld [vmem:[#allocation25 + $0x10c0] sm:$0xff]
    %v2777 = vld [vmem:[#allocation25 + $0x10c8] sm:$0xff]
    %v2778 = vld [vmem:[#allocation25 + $0x10d0] sm:$0xff]
    %v2779 = vld [vmem:[#allocation25 + $0x10d8] sm:$0xff]
    %v2780 = vld [vmem:[#allocation25 + $0x10e0] sm:$0xff]
    %v2781 = vld [vmem:[#allocation25 + $0x10e8] sm:$0xff]
    %v2782 = vld [vmem:[#allocation25 + $0x10f0] sm:$0xff]
    %v2783 = vld [vmem:[#allocation25 + $0x10f8] sm:$0xff]
    %v2784 = vld [vmem:[#allocation25 + $0x1100] sm:$0xff]
    %v2785 = vld [vmem:[#allocation25 + $0x1108] sm:$0xff]
    %v2786 = vld [vmem:[#allocation25 + $0x1110] sm:$0xff]
    %v2787 = vld [vmem:[#allocation25 + $0x1118] sm:$0xff]
    %v2788 = vld [vmem:[#allocation25 + $0x1120] sm:$0xff]
    %v2789 = vld [vmem:[#allocation25 + $0x1128] sm:$0xff]
    %v2790 = vld [vmem:[#allocation25 + $0x1130] sm:$0xff]
    %v2791 = vld [vmem:[#allocation25 + $0x1138] sm:$0xff]
    %v2792 = vld [vmem:[#allocation25 + $0x1140] sm:$0xff]
    %v2793 = vld [vmem:[#allocation25 + $0x1148] sm:$0xff]
    %v2794 = vld [vmem:[#allocation25 + $0x1150] sm:$0xff]
    %v2795 = vld [vmem:[#allocation25 + $0x1158] sm:$0xff]
    %v2796 = vld [vmem:[#allocation25 + $0x1160] sm:$0xff]
    %v2797 = vld [vmem:[#allocation25 + $0x1168] sm:$0xff]
    %v2798 = vld [vmem:[#allocation25 + $0x1170] sm:$0xff]
    %v2799 = vld [vmem:[#allocation25 + $0x1178] sm:$0xff]
    %v2800 = vld [vmem:[#allocation25 + $0x1180] sm:$0xff]
    %v2801 = vld [vmem:[#allocation25 + $0x1188] sm:$0xff]
    %v2802 = vld [vmem:[#allocation25 + $0x1190] sm:$0xff]
    %v2803 = vld [vmem:[#allocation25 + $0x1198] sm:$0xff]
    %v2804 = vld [vmem:[#allocation25 + $0x11a0] sm:$0xff]
    %v2805 = vld [vmem:[#allocation25 + $0x11a8] sm:$0xff]
    %v2806 = vld [vmem:[#allocation25 + $0x11b0] sm:$0xff]
    %v2807 = vld [vmem:[#allocation25 + $0x11b8] sm:$0xff]
    %v2808 = vld [vmem:[#allocation25 + $0x11c0] sm:$0xff]
    %v2809 = vld [vmem:[#allocation25 + $0x11c8] sm:$0xff]
    %v2810 = vld [vmem:[#allocation25 + $0x11d0] sm:$0xff]
    %v2811 = vld [vmem:[#allocation25 + $0x11d8] sm:$0xff]
    %v2812 = vld [vmem:[#allocation25 + $0x11e0] sm:$0xff]
    %v2813 = vld [vmem:[#allocation25 + $0x11e8] sm:$0xff]
    %v2814 = vld [vmem:[#allocation25 + $0x11f0] sm:$0xff]
    %v2815 = vld [vmem:[#allocation25 + $0x11f8] sm:$0xff]
    %v2816 = vld [vmem:[#allocation26] sm:$0xf]
    %v2818 = vlaneseq
    %v2819 = vshrl.u32 %v2818, 7
    %v2820 = vsub.s32 0, %v2819
    %v2821 = vrot.slane %v2816, %v2820
    %v2822 = vlaneseq
    %v2823 = vshrl.u32 %v2822, 7
    %v2824 = vsub.s32 1, %v2823
    %v2825 = vrot.slane %v2816, %v2824
    %v2826 = vlaneseq
    %v2827 = vshrl.u32 %v2826, 7
    %v2828 = vsub.s32 2, %v2827
    %v2829 = vrot.slane %v2816, %v2828
    %v2830 = vlaneseq
    %v2831 = vshrl.u32 %v2830, 7
    %v2832 = vsub.s32 3, %v2831
    %v2833 = vrot.slane %v2816, %v2832
    %2838 = vmatprep.subr.mxu0 %v2241
    %2839 = vmatpush1.msra.mxu0 %v2240
    %2840 = vmatprep.subr.mxu0 %v2245
    %2841 = vmatpush1.msra.mxu0 %v2244
    %2842 = vmatprep.subr.mxu0 %v2249
    %2843 = vmatpush1.msra.mxu0 %v2248
    %2844 = vmatprep.subr.mxu0 %v2253
    %2845 = vmatpush1.msra.mxu0 %v2252
    %2846 = vmatprep.subr.mxu0 %v2257
    %2847 = vmatpush1.msra.mxu0 %v2256
    %2848 = vmatprep.subr.mxu0 %v2261
    %2849 = vmatpush1.msra.mxu0 %v2260
    %2850 = vmatprep.subr.mxu0 %v2265
    %2851 = vmatpush1.msra.mxu0 %v2264
    %2852 = vmatprep.subr.mxu0 %v2269
    %2853 = vmatpush1.msra.mxu0 %v2268
    %2854 = vmatprep.subr.mxu0 %v2273
    %2855 = vmatpush1.msra.mxu0 %v2272
    %2856 = vmatprep.subr.mxu0 %v2277
    %2857 = vmatpush1.msra.mxu0 %v2276
    %2858 = vmatprep.subr.mxu0 %v2281
    %2859 = vmatpush1.msra.mxu0 %v2280
    %2860 = vmatprep.subr.mxu0 %v2285
    %2861 = vmatpush1.msra.mxu0 %v2284
    %2862 = vmatprep.subr.mxu0 %v2289
    %2863 = vmatpush1.msra.mxu0 %v2288
    %2864 = vmatprep.subr.mxu0 %v2293
    %2865 = vmatpush1.msra.mxu0 %v2292
    %2866 = vmatprep.subr.mxu0 %v2297
    %2867 = vmatpush1.msra.mxu0 %v2296
    %2868 = vmatprep.subr.mxu0 %v2301
    %2869 = vmatpush1.msra.mxu0 %v2300
    %2870 = vmatprep.subr.mxu0 %v2305
    %2871 = vmatpush1.msra.mxu0 %v2304
    %2872 = vmatprep.subr.mxu0 %v2309
    %2873 = vmatpush1.msra.mxu0 %v2308
    %2874 = vmatprep.subr.mxu0 %v2313
    %2875 = vmatpush1.msra.mxu0 %v2312
    %2876 = vmatprep.subr.mxu0 %v2317
    %2877 = vmatpush1.msra.mxu0 %v2316
    %2878 = vmatprep.subr.mxu0 %v2321
    %2879 = vmatpush1.msra.mxu0 %v2320
    %2880 = vmatprep.subr.mxu0 %v2325
    %2881 = vmatpush1.msra.mxu0 %v2324
    %2882 = vmatprep.subr.mxu0 %v2329
    %2883 = vmatpush1.msra.mxu0 %v2328
    %2884 = vmatprep.subr.mxu0 %v2333
    %2885 = vmatpush1.msra.mxu0 %v2332
    %2886 = vmatprep.subr.mxu0 %v2337
    %2887 = vmatpush1.msra.mxu0 %v2336
    %2888 = vmatprep.subr.mxu0 %v2341
    %2889 = vmatpush1.msra.mxu0 %v2340
    %2890 = vmatprep.subr.mxu0 %v2345
    %2891 = vmatpush1.msra.mxu0 %v2344
    %2892 = vmatprep.subr.mxu0 %v2349
    %2893 = vmatpush1.msra.mxu0 %v2348
    %2894 = vmatprep.subr.mxu0 %v2353
    %2895 = vmatpush1.msra.mxu0 %v2352
    %2896 = vmatprep.subr.mxu0 %v2357
    %2897 = vmatpush1.msra.mxu0 %v2356
    %2898 = vmatprep.subr.mxu0 %v2361
    %2899 = vmatpush1.msra.mxu0 %v2360
    %2900 = vmatprep.subr.mxu0 %v2365
    %2901 = vmatpush1.msra.mxu0 %v2364
    %2902 = vmatprep.mubr.f32.mxu0 %v2232
    %2903 = vmatmul.mubr.f32.gmra.mrb[0].mxu0 %v2231
    %v2904 = vpop.f32.mrb[0].mxu0
    %v2905 = vadd.f32 %v2821, %v2904
    %v2906 = vpop.f32.mrb[0].mxu0
    %v2907 = vadd.f32 %v2825, %v2906
    %2908 = vdwg.mxu0
    %2909 = vmatprep.subr.mxu0 %v2369
    %2910 = vmatpush1.msra.mxu0 %v2368
    %2911 = vmatprep.subr.mxu0 %v2373
    %2912 = vmatpush1.msra.mxu0 %v2372
    %2913 = vmatprep.subr.mxu0 %v2377
    %2914 = vmatpush1.msra.mxu0 %v2376
    %2915 = vmatprep.subr.mxu0 %v2381
    %2916 = vmatpush1.msra.mxu0 %v2380
    %2917 = vmatprep.subr.mxu0 %v2385
    %2918 = vmatpush1.msra.mxu0 %v2384
    %2919 = vmatprep.subr.mxu0 %v2389
    %2920 = vmatpush1.msra.mxu0 %v2388
    %2921 = vmatprep.subr.mxu0 %v2393
    %2922 = vmatpush1.msra.mxu0 %v2392
    %2923 = vmatprep.subr.mxu0 %v2397
    %2924 = vmatpush1.msra.mxu0 %v2396
    %2925 = vmatprep.subr.mxu0 %v2401
    %2926 = vmatpush1.msra.mxu0 %v2400
    %2927 = vmatprep.subr.mxu0 %v2405
    %2928 = vmatpush1.msra.mxu0 %v2404
    %2929 = vmatprep.subr.mxu0 %v2409
    %2930 = vmatpush1.msra.mxu0 %v2408
    %2931 = vmatprep.subr.mxu0 %v2413
    %2932 = vmatpush1.msra.mxu0 %v2412
    %2933 = vmatprep.subr.mxu0 %v2417
    %2934 = vmatpush1.msra.mxu0 %v2416
    %2935 = vmatprep.subr.mxu0 %v2421
    %2936 = vmatpush1.msra.mxu0 %v2420
    %2937 = vmatprep.subr.mxu0 %v2425
    %2938 = vmatpush1.msra.mxu0 %v2424
    %2939 = vmatprep.subr.mxu0 %v2429
    %2940 = vmatpush1.msra.mxu0 %v2428
    %2941 = vmatprep.subr.mxu0 %v2433
    %2942 = vmatpush1.msra.mxu0 %v2432
    %2943 = vmatprep.subr.mxu0 %v2437
    %2944 = vmatpush1.msra.mxu0 %v2436
    %2945 = vmatprep.subr.mxu0 %v2441
    %2946 = vmatpush1.msra.mxu0 %v2440
    %2947 = vmatprep.subr.mxu0 %v2445
    %2948 = vmatpush1.msra.mxu0 %v2444
    %2949 = vmatprep.subr.mxu0 %v2449
    %2950 = vmatpush1.msra.mxu0 %v2448
    %2951 = vmatprep.subr.mxu0 %v2453
    %2952 = vmatpush1.msra.mxu0 %v2452
    %2953 = vmatprep.subr.mxu0 %v2457
    %2954 = vmatpush1.msra.mxu0 %v2456
    %2955 = vmatprep.subr.mxu0 %v2461
    %2956 = vmatpush1.msra.mxu0 %v2460
    %2957 = vmatprep.subr.mxu0 %v2465
    %2958 = vmatpush1.msra.mxu0 %v2464
    %2959 = vmatprep.subr.mxu0 %v2469
    %2960 = vmatpush1.msra.mxu0 %v2468
    %2961 = vmatprep.subr.mxu0 %v2473
    %2962 = vmatpush1.msra.mxu0 %v2472
    %2963 = vmatprep.subr.mxu0 %v2477
    %2964 = vmatpush1.msra.mxu0 %v2476
    %2965 = vmatprep.subr.mxu0 %v2481
    %2966 = vmatpush1.msra.mxu0 %v2480
    %2967 = vmatprep.subr.mxu0 %v2485
    %2968 = vmatpush1.msra.mxu0 %v2484
    %2969 = vmatprep.subr.mxu0 %v2489
    %2970 = vmatpush1.msra.mxu0 %v2488
    %2971 = vmatprep.subr.mxu0 %v2493
    %2972 = vmatpush1.msra.mxu0 %v2492
    %2973 = vmatprep.mubr.f32.mxu0 %v2234
    %2974 = vmatmul.mubr.f32.gmra.mrb[0].mxu0 %v2233
    %v2975 = vpop.f32.mrb[0].mxu0
    %v2976 = vadd.f32 %v2905, %v2975
    %v2977 = vpop.f32.mrb[0].mxu0
    %v2978 = vadd.f32 %v2907, %v2977
    %2979 = vdwg.mxu0
    %2980 = vmatprep.subr.mxu0 %v2497
    %2981 = vmatpush1.msra.mxu0 %v2496
    %2982 = vmatprep.subr.mxu0 %v2501
    %2983 = vmatpush1.msra.mxu0 %v2500
    %2984 = vmatprep.subr.mxu0 %v2505
    %2985 = vmatpush1.msra.mxu0 %v2504
    %2986 = vmatprep.subr.mxu0 %v2509
    %2987 = vmatpush1.msra.mxu0 %v2508
    %2988 = vmatprep.subr.mxu0 %v2513
    %2989 = vmatpush1.msra.mxu0 %v2512
    %2990 = vmatprep.subr.mxu0 %v2517
    %2991 = vmatpush1.msra.mxu0 %v2516
    %2992 = vmatprep.subr.mxu0 %v2521
    %2993 = vmatpush1.msra.mxu0 %v2520
    %2994 = vmatprep.subr.mxu0 %v2525
    %2995 = vmatpush1.msra.mxu0 %v2524
    %2996 = vmatprep.subr.mxu0 %v2529
    %2997 = vmatpush1.msra.mxu0 %v2528
    %2998 = vmatprep.subr.mxu0 %v2533
    %2999 = vmatpush1.msra.mxu0 %v2532
    %3000 = vmatprep.subr.mxu0 %v2537
    %3001 = vmatpush1.msra.mxu0 %v2536
    %3002 = vmatprep.subr.mxu0 %v2541
    %3003 = vmatpush1.msra.mxu0 %v2540
    %3004 = vmatprep.subr.mxu0 %v2545
    %3005 = vmatpush1.msra.mxu0 %v2544
    %3006 = vmatprep.subr.mxu0 %v2549
    %3007 = vmatpush1.msra.mxu0 %v2548
    %3008 = vmatprep.subr.mxu0 %v2553
    %3009 = vmatpush1.msra.mxu0 %v2552
    %3010 = vmatprep.subr.mxu0 %v2557
    %3011 = vmatpush1.msra.mxu0 %v2556
    %3012 = vmatprep.subr.mxu0 %v2561
    %3013 = vmatpush1.msra.mxu0 %v2560
    %3014 = vmatprep.subr.mxu0 %v2565
    %3015 = vmatpush1.msra.mxu0 %v2564
    %3016 = vmatprep.subr.mxu0 %v2569
    %3017 = vmatpush1.msra.mxu0 %v2568
    %3018 = vmatprep.subr.mxu0 %v2573
    %3019 = vmatpush1.msra.mxu0 %v2572
    %3020 = vmatprep.subr.mxu0 %v2577
    %3021 = vmatpush1.msra.mxu0 %v2576
    %3022 = vmatprep.subr.mxu0 %v2581
    %3023 = vmatpush1.msra.mxu0 %v2580
    %3024 = vmatprep.subr.mxu0 %v2585
    %3025 = vmatpush1.msra.mxu0 %v2584
    %3026 = vmatprep.subr.mxu0 %v2589
    %3027 = vmatpush1.msra.mxu0 %v2588
    %3028 = vmatprep.subr.mxu0 %v2593
    %3029 = vmatpush1.msra.mxu0 %v2592
    %3030 = vmatprep.subr.mxu0 %v2597
    %3031 = vmatpush1.msra.mxu0 %v2596
    %3032 = vmatprep.subr.mxu0 %v2601
    %3033 = vmatpush1.msra.mxu0 %v2600
    %3034 = vmatprep.subr.mxu0 %v2605
    %3035 = vmatpush1.msra.mxu0 %v2604
    %3036 = vmatprep.subr.mxu0 %v2609
    %3037 = vmatpush1.msra.mxu0 %v2608
    %3038 = vmatprep.subr.mxu0 %v2613
    %3039 = vmatpush1.msra.mxu0 %v2612
    %3040 = vmatprep.subr.mxu0 %v2617
    %3041 = vmatpush1.msra.mxu0 %v2616
    %3042 = vmatprep.subr.mxu0 %v2621
    %3043 = vmatpush1.msra.mxu0 %v2620
    %3044 = vmatprep.mubr.f32.mxu0 %v2236
    %3045 = vmatmul.mubr.f32.gmra.mrb[0].mxu0 %v2235
    %v3046 = vpop.f32.mrb[0].mxu0
    %v3047 = vadd.f32 %v2976, %v3046
    %v3048 = vpop.f32.mrb[0].mxu0
    %v3049 = vadd.f32 %v2978, %v3048
    %3050 = vdwg.mxu0
    %3051 = vmatprep.subr.mxu0 %v2625
    %3052 = vmatpush1.msra.mxu0 %v2624
    %3053 = vmatprep.subr.mxu0 %v2629
    %3054 = vmatpush1.msra.mxu0 %v2628
    %3055 = vmatprep.subr.mxu0 %v2633
    %3056 = vmatpush1.msra.mxu0 %v2632
    %3057 = vmatprep.subr.mxu0 %v2637
    %3058 = vmatpush1.msra.mxu0 %v2636
    %3059 = vmatprep.subr.mxu0 %v2641
    %3060 = vmatpush1.msra.mxu0 %v2640
    %3061 = vmatprep.subr.mxu0 %v2645
    %3062 = vmatpush1.msra.mxu0 %v2644
    %3063 = vmatprep.subr.mxu0 %v2649
    %3064 = vmatpush1.msra.mxu0 %v2648
    %3065 = vmatprep.subr.mxu0 %v2653
    %3066 = vmatpush1.msra.mxu0 %v2652
    %3067 = vmatprep.subr.mxu0 %v2657
    %3068 = vmatpush1.msra.mxu0 %v2656
    %3069 = vmatprep.subr.mxu0 %v2661
    %3070 = vmatpush1.msra.mxu0 %v2660
    %3071 = vmatprep.subr.mxu0 %v2665
    %3072 = vmatpush1.msra.mxu0 %v2664
    %3073 = vmatprep.subr.mxu0 %v2669
    %3074 = vmatpush1.msra.mxu0 %v2668
    %3075 = vmatprep.subr.mxu0 %v2673
    %3076 = vmatpush1.msra.mxu0 %v2672
    %3077 = vmatprep.subr.mxu0 %v2677
    %3078 = vmatpush1.msra.mxu0 %v2676
    %3079 = vmatprep.subr.mxu0 %v2681
    %3080 = vmatpush1.msra.mxu0 %v2680
    %3081 = vmatprep.subr.mxu0 %v2685
    %3082 = vmatpush1.msra.mxu0 %v2684
    %3083 = vmatprep.subr.mxu0 %v2689
    %3084 = vmatpush1.msra.mxu0 %v2688
    %3085 = vmatprep.subr.mxu0 %v2693
    %3086 = vmatpush1.msra.mxu0 %v2692
    %3087 = vmatprep.subr.mxu0 %v2697
    %3088 = vmatpush1.msra.mxu0 %v2696
    %3089 = vmatprep.subr.mxu0 %v2701
    %3090 = vmatpush1.msra.mxu0 %v2700
    %3091 = vmatprep.subr.mxu0 %v2705
    %3092 = vmatpush1.msra.mxu0 %v2704
    %3093 = vmatprep.subr.mxu0 %v2709
    %3094 = vmatpush1.msra.mxu0 %v2708
    %3095 = vmatprep.subr.mxu0 %v2713
    %3096 = vmatpush1.msra.mxu0 %v2712
    %3097 = vmatprep.subr.mxu0 %v2717
    %3098 = vmatpush1.msra.mxu0 %v2716
    %3099 = vmatprep.subr.mxu0 %v2721
    %3100 = vmatpush1.msra.mxu0 %v2720
    %3101 = vmatprep.subr.mxu0 %v2725
    %3102 = vmatpush1.msra.mxu0 %v2724
    %3103 = vmatprep.subr.mxu0 %v2729
    %3104 = vmatpush1.msra.mxu0 %v2728
    %3105 = vmatprep.subr.mxu0 %v2733
    %3106 = vmatpush1.msra.mxu0 %v2732
    %3107 = vmatprep.subr.mxu0 %v2737
    %3108 = vmatpush1.msra.mxu0 %v2736
    %3109 = vmatprep.subr.mxu0 %v2741
    %3110 = vmatpush1.msra.mxu0 %v2740
    %3111 = vmatprep.subr.mxu0 %v2745
    %3112 = vmatpush1.msra.mxu0 %v2744
    %3113 = vmatprep.subr.mxu0 %v2749
    %3114 = vmatpush1.msra.mxu0 %v2748
    %3115 = vmatprep.mubr.f32.mxu0 %v2238
    %3116 = vmatmul.mubr.f32.gmra.mrb[0].mxu0 %v2237
    %v3117 = vpop.f32.mrb[0].mxu0
    %v3118 = vadd.f32 %v3047, %v3117
    %v3119 = vpop.f32.mrb[0].mxu0
    %v3120 = vadd.f32 %v3049, %v3119
    %3121 = vdwg.mxu0
    %3122 = vmatprep.subr.mxu0 %v2753
    %3123 = vmatpush1.msra.mxu0 %v2752
    %3124 = vmatprep.subr.mxu0 %v2757
    %3125 = vmatpush1.msra.mxu0 %v2756
    %3126 = vmatprep.subr.mxu0 %v2761
    %3127 = vmatpush1.msra.mxu0 %v2760
    %3128 = vmatprep.subr.mxu0 %v2765
    %3129 = vmatpush1.msra.mxu0 %v2764
    %3130 = vmatprep.subr.mxu0 %v2769
    %3131 = vmatpush1.msra.mxu0 %v2768
    %3132 = vmatprep.subr.mxu0 %v2773
    %3133 = vmatpush1.msra.mxu0 %v2772
    %3134 = vmatprep.subr.mxu0 %v2777
    %3135 = vmatpush1.msra.mxu0 %v2776
    %3136 = vmatprep.subr.mxu0 %v2781
    %3137 = vmatpush1.msra.mxu0 %v2780
    %3138 = vmatprep.subr.mxu0 %v2785
    %3139 = vmatpush1.msra.mxu0 %v2784
    %3140 = vmatprep.subr.mxu0 %v2789
    %3141 = vmatpush1.msra.mxu0 %v2788
    %3142 = vmatprep.subr.mxu0 %v2793
    %3143 = vmatpush1.msra.mxu0 %v2792
    %3144 = vmatprep.subr.mxu0 %v2797
    %3145 = vmatpush1.msra.mxu0 %v2796
    %3146 = vmatprep.subr.mxu0 %v2801
    %3147 = vmatpush1.msra.mxu0 %v2800
    %3148 = vmatprep.subr.mxu0 %v2805
    %3149 = vmatpush1.msra.mxu0 %v2804
    %3150 = vmatprep.subr.mxu0 %v2809
    %3151 = vmatpush1.msra.mxu0 %v2808
    %3152 = vmatprep.subr.mxu0 %v2813
    %3153 = vmatpush1.msra.mxu0 %v2812
    %3154 = vmatprep.subr.mxu0 0.0
    %3155 = vmatpush1.msra.mxu0 0.0
    %3156 = vmatprep.subr.mxu0 0.0
    %3157 = vmatpush1.msra.mxu0 0.0
    %3158 = vmatprep.subr.mxu0 0.0
    %3159 = vmatpush1.msra.mxu0 0.0
    %3160 = vmatprep.subr.mxu0 0.0
    %3161 = vmatpush1.msra.mxu0 0.0
    %3162 = vmatprep.subr.mxu0 0.0
    %3163 = vmatpush1.msra.mxu0 0.0
    %3164 = vmatprep.subr.mxu0 0.0
    %3165 = vmatpush1.msra.mxu0 0.0
    %3166 = vmatprep.subr.mxu0 0.0
    %3167 = vmatpush1.msra.mxu0 0.0
    %3168 = vmatprep.subr.mxu0 0.0
    %3169 = vmatpush1.msra.mxu0 0.0
    %3170 = vmatprep.subr.mxu0 0.0
    %3171 = vmatpush1.msra.mxu0 0.0
    %3172 = vmatprep.subr.mxu0 0.0
    %3173 = vmatpush1.msra.mxu0 0.0
    %3174 = vmatprep.subr.mxu0 0.0
    %3175 = vmatpush1.msra.mxu0 0.0
    %3176 = vmatprep.subr.mxu0 0.0
    %3177 = vmatpush1.msra.mxu0 0.0
    %3178 = vmatprep.subr.mxu0 0.0
    %3179 = vmatpush1.msra.mxu0 0.0
    %3180 = vmatprep.subr.mxu0 0.0
    %3181 = vmatpush1.msra.mxu0 0.0
    %3182 = vmatprep.subr.mxu0 0.0
    %3183 = vmatpush1.msra.mxu0 0.0
    %3184 = vmatprep.subr.mxu0 0.0
    %3185 = vmatpush1.msra.mxu0 0.0
    %3186 = vmatprep.mubr.f32.mxu0 0.0
    %3187 = vmatmul.mubr.f32.gmra.mrb[0].mxu0 %v2239
    %v3188 = vpop.f32.mrb[0].mxu0
    %v3189 = vadd.f32 %v3118, %v3188
    %v3190 = vpop.f32.mrb[0].mxu0
    %v3191 = vadd.f32 %v3120, %v3190
    %3192 = vdwg.mxu0
    %3193 = vmatprep.subr.mxu0 %v2243
    %3194 = vmatpush1.msra.mxu0 %v2242
    %3195 = vmatprep.subr.mxu0 %v2247
    %3196 = vmatpush1.msra.mxu0 %v2246
    %3197 = vmatprep.subr.mxu0 %v2251
    %3198 = vmatpush1.msra.mxu0 %v2250
    %3199 = vmatprep.subr.mxu0 %v2255
    %3200 = vmatpush1.msra.mxu0 %v2254
    %3201 = vmatprep.subr.mxu0 %v2259
    %3202 = vmatpush1.msra.mxu0 %v2258
    %3203 = vmatprep.subr.mxu0 %v2263
    %3204 = vmatpush1.msra.mxu0 %v2262
    %3205 = vmatprep.subr.mxu0 %v2267
    %3206 = vmatpush1.msra.mxu0 %v2266
    %3207 = vmatprep.subr.mxu0 %v2271
    %3208 = vmatpush1.msra.mxu0 %v2270
    %3209 = vmatprep.subr.mxu0 %v2275
    %3210 = vmatpush1.msra.mxu0 %v2274
    %3211 = vmatprep.subr.mxu0 %v2279
    %3212 = vmatpush1.msra.mxu0 %v2278
    %3213 = vmatprep.subr.mxu0 %v2283
    %3214 = vmatpush1.msra.mxu0 %v2282
    %3215 = vmatprep.subr.mxu0 %v2287
    %3216 = vmatpush1.msra.mxu0 %v2286
    %3217 = vmatprep.subr.mxu0 %v2291
    %3218 = vmatpush1.msra.mxu0 %v2290
    %3219 = vmatprep.subr.mxu0 %v2295
    %3220 = vmatpush1.msra.mxu0 %v2294
    %3221 = vmatprep.subr.mxu0 %v2299
    %3222 = vmatpush1.msra.mxu0 %v2298
    %3223 = vmatprep.subr.mxu0 %v2303
    %3224 = vmatpush1.msra.mxu0 %v2302
    %3225 = vmatprep.subr.mxu0 %v2307
    %3226 = vmatpush1.msra.mxu0 %v2306
    %3227 = vmatprep.subr.mxu0 %v2311
    %3228 = vmatpush1.msra.mxu0 %v2310
    %3229 = vmatprep.subr.mxu0 %v2315
    %3230 = vmatpush1.msra.mxu0 %v2314
    %3231 = vmatprep.subr.mxu0 %v2319
    %3232 = vmatpush1.msra.mxu0 %v2318
    %3233 = vmatprep.subr.mxu0 %v2323
    %3234 = vmatpush1.msra.mxu0 %v2322
    %3235 = vmatprep.subr.mxu0 %v2327
    %3236 = vmatpush1.msra.mxu0 %v2326
    %3237 = vmatprep.subr.mxu0 %v2331
    %3238 = vmatpush1.msra.mxu0 %v2330
    %3239 = vmatprep.subr.mxu0 %v2335
    %3240 = vmatpush1.msra.mxu0 %v2334
    %3241 = vmatprep.subr.mxu0 %v2339
    %3242 = vmatpush1.msra.mxu0 %v2338
    %3243 = vmatprep.subr.mxu0 %v2343
    %3244 = vmatpush1.msra.mxu0 %v2342
    %3245 = vmatprep.subr.mxu0 %v2347
    %3246 = vmatpush1.msra.mxu0 %v2346
    %3247 = vmatprep.subr.mxu0 %v2351
    %3248 = vmatpush1.msra.mxu0 %v2350
    %3249 = vmatprep.subr.mxu0 %v2355
    %3250 = vmatpush1.msra.mxu0 %v2354
    %3251 = vmatprep.subr.mxu0 %v2359
    %3252 = vmatpush1.msra.mxu0 %v2358
    %3253 = vmatprep.subr.mxu0 %v2363
    %3254 = vmatpush1.msra.mxu0 %v2362
    %3255 = vmatprep.subr.mxu0 %v2367
    %3256 = vmatpush1.msra.mxu0 %v2366
    %3257 = vmatprep.mubr.f32.mxu0 %v2232
    %3258 = vmatmul.mubr.f32.gmra.mrb[0].mxu0 %v2231
    %v3259 = vpop.f32.mrb[0].mxu0
    %v3260 = vadd.f32 %v2829, %v3259
    %v3261 = vpop.f32.mrb[0].mxu0
    %v3262 = vadd.f32 %v2833, %v3261
    %3263 = vdwg.mxu0
    %3264 = vmatprep.subr.mxu0 %v2371
    %3265 = vmatpush1.msra.mxu0 %v2370
    %3266 = vmatprep.subr.mxu0 %v2375
    %3267 = vmatpush1.msra.mxu0 %v2374
    %3268 = vmatprep.subr.mxu0 %v2379
    %3269 = vmatpush1.msra.mxu0 %v2378
    %3270 = vmatprep.subr.mxu0 %v2383
    %3271 = vmatpush1.msra.mxu0 %v2382
    %3272 = vmatprep.subr.mxu0 %v2387
    %3273 = vmatpush1.msra.mxu0 %v2386
    %3274 = vmatprep.subr.mxu0 %v2391
    %3275 = vmatpush1.msra.mxu0 %v2390
    %3276 = vmatprep.subr.mxu0 %v2395
    %3277 = vmatpush1.msra.mxu0 %v2394
    %3278 = vmatprep.subr.mxu0 %v2399
    %3279 = vmatpush1.msra.mxu0 %v2398
    %3280 = vmatprep.subr.mxu0 %v2403
    %3281 = vmatpush1.msra.mxu0 %v2402
    %3282 = vmatprep.subr.mxu0 %v2407
    %3283 = vmatpush1.msra.mxu0 %v2406
    %3284 = vmatprep.subr.mxu0 %v2411
    %3285 = vmatpush1.msra.mxu0 %v2410
    %3286 = vmatprep.subr.mxu0 %v2415
    %3287 = vmatpush1.msra.mxu0 %v2414
    %3288 = vmatprep.subr.mxu0 %v2419
    %3289 = vmatpush1.msra.mxu0 %v2418
    %3290 = vmatprep.subr.mxu0 %v2423
    %3291 = vmatpush1.msra.mxu0 %v2422
    %3292 = vmatprep.subr.mxu0 %v2427
    %3293 = vmatpush1.msra.mxu0 %v2426
    %3294 = vmatprep.subr.mxu0 %v2431
    %3295 = vmatpush1.msra.mxu0 %v2430
    %3296 = vmatprep.subr.mxu0 %v2435
    %3297 = vmatpush1.msra.mxu0 %v2434
    %3298 = vmatprep.subr.mxu0 %v2439
    %3299 = vmatpush1.msra.mxu0 %v2438
    %3300 = vmatprep.subr.mxu0 %v2443
    %3301 = vmatpush1.msra.mxu0 %v2442
    %3302 = vmatprep.subr.mxu0 %v2447
    %3303 = vmatpush1.msra.mxu0 %v2446
    %3304 = vmatprep.subr.mxu0 %v2451
    %3305 = vmatpush1.msra.mxu0 %v2450
    %3306 = vmatprep.subr.mxu0 %v2455
    %3307 = vmatpush1.msra.mxu0 %v2454
    %3308 = vmatprep.subr.mxu0 %v2459
    %3309 = vmatpush1.msra.mxu0 %v2458
    %3310 = vmatprep.subr.mxu0 %v2463
    %3311 = vmatpush1.msra.mxu0 %v2462
    %3312 = vmatprep.subr.mxu0 %v2467
    %3313 = vmatpush1.msra.mxu0 %v2466
    %3314 = vmatprep.subr.mxu0 %v2471
    %3315 = vmatpush1.msra.mxu0 %v2470
    %3316 = vmatprep.subr.mxu0 %v2475
    %3317 = vmatpush1.msra.mxu0 %v2474
    %3318 = vmatprep.subr.mxu0 %v2479
    %3319 = vmatpush1.msra.mxu0 %v2478
    %3320 = vmatprep.subr.mxu0 %v2483
    %3321 = vmatpush1.msra.mxu0 %v2482
    %3322 = vmatprep.subr.mxu0 %v2487
    %3323 = vmatpush1.msra.mxu0 %v2486
    %3324 = vmatprep.subr.mxu0 %v2491
    %3325 = vmatpush1.msra.mxu0 %v2490
    %3326 = vmatprep.subr.mxu0 %v2495
    %3327 = vmatpush1.msra.mxu0 %v2494
    %3328 = vmatprep.mubr.f32.mxu0 %v2234
    %3329 = vmatmul.mubr.f32.gmra.mrb[0].mxu0 %v2233
    %v3330 = vpop.f32.mrb[0].mxu0
    %v3331 = vadd.f32 %v3260, %v3330
    %v3332 = vpop.f32.mrb[0].mxu0
    %v3333 = vadd.f32 %v3262, %v3332
    %3334 = vdwg.mxu0
    %3335 = vmatprep.subr.mxu0 %v2499
    %3336 = vmatpush1.msra.mxu0 %v2498
    %3337 = vmatprep.subr.mxu0 %v2503
    %3338 = vmatpush1.msra.mxu0 %v2502
    %3339 = vmatprep.subr.mxu0 %v2507
    %3340 = vmatpush1.msra.mxu0 %v2506
    %3341 = vmatprep.subr.mxu0 %v2511
    %3342 = vmatpush1.msra.mxu0 %v2510
    %3343 = vmatprep.subr.mxu0 %v2515
    %3344 = vmatpush1.msra.mxu0 %v2514
    %3345 = vmatprep.subr.mxu0 %v2519
    %3346 = vmatpush1.msra.mxu0 %v2518
    %3347 = vmatprep.subr.mxu0 %v2523
    %3348 = vmatpush1.msra.mxu0 %v2522
    %3349 = vmatprep.subr.mxu0 %v2527
    %3350 = vmatpush1.msra.mxu0 %v2526
    %3351 = vmatprep.subr.mxu0 %v2531
    %3352 = vmatpush1.msra.mxu0 %v2530
    %3353 = vmatprep.subr.mxu0 %v2535
    %3354 = vmatpush1.msra.mxu0 %v2534
    %3355 = vmatprep.subr.mxu0 %v2539
    %3356 = vmatpush1.msra.mxu0 %v2538
    %3357 = vmatprep.subr.mxu0 %v2543
    %3358 = vmatpush1.msra.mxu0 %v2542
    %3359 = vmatprep.subr.mxu0 %v2547
    %3360 = vmatpush1.msra.mxu0 %v2546
    %3361 = vmatprep.subr.mxu0 %v2551
    %3362 = vmatpush1.msra.mxu0 %v2550
    %3363 = vmatprep.subr.mxu0 %v2555
    %3364 = vmatpush1.msra.mxu0 %v2554
    %3365 = vmatprep.subr.mxu0 %v2559
    %3366 = vmatpush1.msra.mxu0 %v2558
    %3367 = vmatprep.subr.mxu0 %v2563
    %3368 = vmatpush1.msra.mxu0 %v2562
    %3369 = vmatprep.subr.mxu0 %v2567
    %3370 = vmatpush1.msra.mxu0 %v2566
    %3371 = vmatprep.subr.mxu0 %v2571
    %3372 = vmatpush1.msra.mxu0 %v2570
    %3373 = vmatprep.subr.mxu0 %v2575
    %3374 = vmatpush1.msra.mxu0 %v2574
    %3375 = vmatprep.subr.mxu0 %v2579
    %3376 = vmatpush1.msra.mxu0 %v2578
    %3377 = vmatprep.subr.mxu0 %v2583
    %3378 = vmatpush1.msra.mxu0 %v2582
    %3379 = vmatprep.subr.mxu0 %v2587
    %3380 = vmatpush1.msra.mxu0 %v2586
    %3381 = vmatprep.subr.mxu0 %v2591
    %3382 = vmatpush1.msra.mxu0 %v2590
    %3383 = vmatprep.subr.mxu0 %v2595
    %3384 = vmatpush1.msra.mxu0 %v2594
    %3385 = vmatprep.subr.mxu0 %v2599
    %3386 = vmatpush1.msra.mxu0 %v2598
    %3387 = vmatprep.subr.mxu0 %v2603
    %3388 = vmatpush1.msra.mxu0 %v2602
    %3389 = vmatprep.subr.mxu0 %v2607
    %3390 = vmatpush1.msra.mxu0 %v2606
    %3391 = vmatprep.subr.mxu0 %v2611
    %3392 = vmatpush1.msra.mxu0 %v2610
    %3393 = vmatprep.subr.mxu0 %v2615
    %3394 = vmatpush1.msra.mxu0 %v2614
    %3395 = vmatprep.subr.mxu0 %v2619
    %3396 = vmatpush1.msra.mxu0 %v2618
    %3397 = vmatprep.subr.mxu0 %v2623
    %3398 = vmatpush1.msra.mxu0 %v2622
    %3399 = vmatprep.mubr.f32.mxu0 %v2236
    %3400 = vmatmul.mubr.f32.gmra.mrb[0].mxu0 %v2235
    %v3401 = vpop.f32.mrb[0].mxu0
    %v3402 = vadd.f32 %v3331, %v3401
    %v3403 = vpop.f32.mrb[0].mxu0
    %v3404 = vadd.f32 %v3333, %v3403
    %3405 = vdwg.mxu0
    %3406 = vmatprep.subr.mxu0 %v2627
    %3407 = vmatpush1.msra.mxu0 %v2626
    %3408 = vmatprep.subr.mxu0 %v2631
    %3409 = vmatpush1.msra.mxu0 %v2630
    %3410 = vmatprep.subr.mxu0 %v2635
    %3411 = vmatpush1.msra.mxu0 %v2634
    %3412 = vmatprep.subr.mxu0 %v2639
    %3413 = vmatpush1.msra.mxu0 %v2638
    %3414 = vmatprep.subr.mxu0 %v2643
    %3415 = vmatpush1.msra.mxu0 %v2642
    %3416 = vmatprep.subr.mxu0 %v2647
    %3417 = vmatpush1.msra.mxu0 %v2646
    %3418 = vmatprep.subr.mxu0 %v2651
    %3419 = vmatpush1.msra.mxu0 %v2650
    %3420 = vmatprep.subr.mxu0 %v2655
    %3421 = vmatpush1.msra.mxu0 %v2654
    %3422 = vmatprep.subr.mxu0 %v2659
    %3423 = vmatpush1.msra.mxu0 %v2658
    %3424 = vmatprep.subr.mxu0 %v2663
    %3425 = vmatpush1.msra.mxu0 %v2662
    %3426 = vmatprep.subr.mxu0 %v2667
    %3427 = vmatpush1.msra.mxu0 %v2666
    %3428 = vmatprep.subr.mxu0 %v2671
    %3429 = vmatpush1.msra.mxu0 %v2670
    %3430 = vmatprep.subr.mxu0 %v2675
    %3431 = vmatpush1.msra.mxu0 %v2674
    %3432 = vmatprep.subr.mxu0 %v2679
    %3433 = vmatpush1.msra.mxu0 %v2678
    %3434 = vmatprep.subr.mxu0 %v2683
    %3435 = vmatpush1.msra.mxu0 %v2682
    %3436 = vmatprep.subr.mxu0 %v2687
    %3437 = vmatpush1.msra.mxu0 %v2686
    %3438 = vmatprep.subr.mxu0 %v2691
    %3439 = vmatpush1.msra.mxu0 %v2690
    %3440 = vmatprep.subr.mxu0 %v2695
    %3441 = vmatpush1.msra.mxu0 %v2694
    %3442 = vmatprep.subr.mxu0 %v2699
    %3443 = vmatpush1.msra.mxu0 %v2698
    %3444 = vmatprep.subr.mxu0 %v2703
    %3445 = vmatpush1.msra.mxu0 %v2702
    %3446 = vmatprep.subr.mxu0 %v2707
    %3447 = vmatpush1.msra.mxu0 %v2706
    %3448 = vmatprep.subr.mxu0 %v2711
    %3449 = vmatpush1.msra.mxu0 %v2710
    %3450 = vmatprep.subr.mxu0 %v2715
    %3451 = vmatpush1.msra.mxu0 %v2714
    %3452 = vmatprep.subr.mxu0 %v2719
    %3453 = vmatpush1.msra.mxu0 %v2718
    %3454 = vmatprep.subr.mxu0 %v2723
    %3455 = vmatpush1.msra.mxu0 %v2722
    %3456 = vmatprep.subr.mxu0 %v2727
    %3457 = vmatpush1.msra.mxu0 %v2726
    %3458 = vmatprep.subr.mxu0 %v2731
    %3459 = vmatpush1.msra.mxu0 %v2730
    %3460 = vmatprep.subr.mxu0 %v2735
    %3461 = vmatpush1.msra.mxu0 %v2734
    %3462 = vmatprep.subr.mxu0 %v2739
    %3463 = vmatpush1.msra.mxu0 %v2738
    %3464 = vmatprep.subr.mxu0 %v2743
    %3465 = vmatpush1.msra.mxu0 %v2742
    %3466 = vmatprep.subr.mxu0 %v2747
    %3467 = vmatpush1.msra.mxu0 %v2746
    %3468 = vmatprep.subr.mxu0 %v2751
    %3469 = vmatpush1.msra.mxu0 %v2750
    %3470 = vmatprep.mubr.f32.mxu0 %v2238
    %3471 = vmatmul.mubr.f32.gmra.mrb[0].mxu0 %v2237
    %v3472 = vpop.f32.mrb[0].mxu0
    %v3473 = vadd.f32 %v3402, %v3472
    %v3474 = vpop.f32.mrb[0].mxu0
    %v3475 = vadd.f32 %v3404, %v3474
    %3476 = vdwg.mxu0
    %3477 = vmatprep.subr.mxu0 %v2755
    %3478 = vmatpush1.msra.mxu0 %v2754
    %3479 = vmatprep.subr.mxu0 %v2759
    %3480 = vmatpush1.msra.mxu0 %v2758
    %3481 = vmatprep.subr.mxu0 %v2763
    %3482 = vmatpush1.msra.mxu0 %v2762
    %3483 = vmatprep.subr.mxu0 %v2767
    %3484 = vmatpush1.msra.mxu0 %v2766
    %3485 = vmatprep.subr.mxu0 %v2771
    %3486 = vmatpush1.msra.mxu0 %v2770
    %3487 = vmatprep.subr.mxu0 %v2775
    %3488 = vmatpush1.msra.mxu0 %v2774
    %3489 = vmatprep.subr.mxu0 %v2779
    %3490 = vmatpush1.msra.mxu0 %v2778
    %3491 = vmatprep.subr.mxu0 %v2783
    %3492 = vmatpush1.msra.mxu0 %v2782
    %3493 = vmatprep.subr.mxu0 %v2787
    %3494 = vmatpush1.msra.mxu0 %v2786
    %3495 = vmatprep.subr.mxu0 %v2791
    %3496 = vmatpush1.msra.mxu0 %v2790
    %3497 = vmatprep.subr.mxu0 %v2795
    %3498 = vmatpush1.msra.mxu0 %v2794
    %3499 = vmatprep.subr.mxu0 %v2799
    %3500 = vmatpush1.msra.mxu0 %v2798
    %3501 = vmatprep.subr.mxu0 %v2803
    %3502 = vmatpush1.msra.mxu0 %v2802
    %3503 = vmatprep.subr.mxu0 %v2807
    %3504 = vmatpush1.msra.mxu0 %v2806
    %3505 = vmatprep.subr.mxu0 %v2811
    %3506 = vmatpush1.msra.mxu0 %v2810
    %3507 = vmatprep.subr.mxu0 %v2815
    %3508 = vmatpush1.msra.mxu0 %v2814
    %3509 = vmatprep.subr.mxu0 0.0
    %3510 = vmatpush1.msra.mxu0 0.0
    %3511 = vmatprep.subr.mxu0 0.0
    %3512 = vmatpush1.msra.mxu0 0.0
    %3513 = vmatprep.subr.mxu0 0.0
    %3514 = vmatpush1.msra.mxu0 0.0
    %3515 = vmatprep.subr.mxu0 0.0
    %3516 = vmatpush1.msra.mxu0 0.0
    %3517 = vmatprep.subr.mxu0 0.0
    %3518 = vmatpush1.msra.mxu0 0.0
    %3519 = vmatprep.subr.mxu0 0.0
    %3520 = vmatpush1.msra.mxu0 0.0
    %3521 = vmatprep.subr.mxu0 0.0
    %3522 = vmatpush1.msra.mxu0 0.0
    %3523 = vmatprep.subr.mxu0 0.0
    %3524 = vmatpush1.msra.mxu0 0.0
    %3525 = vmatprep.subr.mxu0 0.0
    %3526 = vmatpush1.msra.mxu0 0.0
    %3527 = vmatprep.subr.mxu0 0.0
    %3528 = vmatpush1.msra.mxu0 0.0
    %3529 = vmatprep.subr.mxu0 0.0
    %3530 = vmatpush1.msra.mxu0 0.0
    %3531 = vmatprep.subr.mxu0 0.0
    %3532 = vmatpush1.msra.mxu0 0.0
    %3533 = vmatprep.subr.mxu0 0.0
    %3534 = vmatpush1.msra.mxu0 0.0
    %3535 = vmatprep.subr.mxu0 0.0
    %3536 = vmatpush1.msra.mxu0 0.0
    %3537 = vmatprep.subr.mxu0 0.0
    %3538 = vmatpush1.msra.mxu0 0.0
    %3539 = vmatprep.subr.mxu0 0.0
    %3540 = vmatpush1.msra.mxu0 0.0
    %3541 = vmatprep.mubr.f32.mxu0 0.0
    %3542 = vmatmul.mubr.f32.gmra.mrb[0].mxu0 %v2239
    %v3543 = vpop.f32.mrb[0].mxu0
    %v3544 = vadd.f32 %v3473, %v3543
    %v3545 = vpop.f32.mrb[0].mxu0
    %v3546 = vadd.f32 %v3475, %v3545
    %3547 = vdwg.mxu0
    %v3548 = vmul.f32 %v3189, 0.01
    %v3549 = vmul.f32 %v3191, 0.01
    %v3550 = vmul.f32 %v3544, 0.01
    %v3551 = vmul.f32 %v3546, 0.01
    %v3552 = vmax.f32 %v3189, %v3548
    %v3553 = vmax.f32 %v3191, %v3549
    %v3554 = vmax.f32 %v3544, %v3550
    %v3555 = vmax.f32 %v3546, %v3551
    %v3556 = vld [vmem:[#allocation28] sm:$0xff]
    %v3557 = vld [vmem:[#allocation28 + $0x8] sm:$0xff]
    %v3558 = vld [vmem:[#allocation28 + $0x10] sm:$0xff]
    %v3559 = vld [vmem:[#allocation28 + $0x18] sm:$0xff]
    %v3560 = vld [vmem:[#allocation28 + $0x20] sm:$0xff]
    %v3561 = vld [vmem:[#allocation28 + $0x28] sm:$0xff]
    %v3562 = vld [vmem:[#allocation28 + $0x30] sm:$0xff]
    %v3563 = vld [vmem:[#allocation28 + $0x38] sm:$0xff]
    %v3564 = vld [vmem:[#allocation28 + $0x40] sm:$0xff]
    %v3565 = vld [vmem:[#allocation28 + $0x48] sm:$0xff]
    %v3566 = vld [vmem:[#allocation28 + $0x50] sm:$0xff]
    %v3567 = vld [vmem:[#allocation28 + $0x58] sm:$0xff]
    %v3568 = vld [vmem:[#allocation28 + $0x60] sm:$0xff]
    %v3569 = vld [vmem:[#allocation28 + $0x68] sm:$0xff]
    %v3570 = vld [vmem:[#allocation28 + $0x70] sm:$0xff]
    %v3571 = vld [vmem:[#allocation28 + $0x78] sm:$0xff]
    %v3572 = vld [vmem:[#allocation28 + $0x80] sm:$0xff]
    %v3573 = vld [vmem:[#allocation28 + $0x88] sm:$0xff]
    %v3574 = vld [vmem:[#allocation28 + $0x90] sm:$0xff]
    %v3575 = vld [vmem:[#allocation28 + $0x98] sm:$0xff]
    %v3576 = vld [vmem:[#allocation28 + $0xa0] sm:$0xff]
    %v3577 = vld [vmem:[#allocation28 + $0xa8] sm:$0xff]
    %v3578 = vld [vmem:[#allocation28 + $0xb0] sm:$0xff]
    %v3579 = vld [vmem:[#allocation28 + $0xb8] sm:$0xff]
    %v3580 = vld [vmem:[#allocation28 + $0xc0] sm:$0xff]
    %v3581 = vld [vmem:[#allocation28 + $0xc8] sm:$0xff]
    %v3582 = vld [vmem:[#allocation28 + $0xd0] sm:$0xff]
    %v3583 = vld [vmem:[#allocation28 + $0xd8] sm:$0xff]
    %v3584 = vld [vmem:[#allocation28 + $0xe0] sm:$0xff]
    %v3585 = vld [vmem:[#allocation28 + $0xe8] sm:$0xff]
    %v3586 = vld [vmem:[#allocation28 + $0xf0] sm:$0xff]
    %v3587 = vld [vmem:[#allocation28 + $0xf8] sm:$0xff]
    %v3588 = vld [vmem:[#allocation28 + $0x100] sm:$0xff]
    %v3589 = vld [vmem:[#allocation28 + $0x108] sm:$0xff]
    %v3590 = vld [vmem:[#allocation28 + $0x110] sm:$0xff]
    %v3591 = vld [vmem:[#allocation28 + $0x118] sm:$0xff]
    %v3592 = vld [vmem:[#allocation28 + $0x120] sm:$0xff]
    %v3593 = vld [vmem:[#allocation28 + $0x128] sm:$0xff]
    %v3594 = vld [vmem:[#allocation28 + $0x130] sm:$0xff]
    %v3595 = vld [vmem:[#allocation28 + $0x138] sm:$0xff]
    %v3596 = vld [vmem:[#allocation28 + $0x140] sm:$0xff]
    %v3597 = vld [vmem:[#allocation28 + $0x148] sm:$0xff]
    %v3598 = vld [vmem:[#allocation28 + $0x150] sm:$0xff]
    %v3599 = vld [vmem:[#allocation28 + $0x158] sm:$0xff]
    %v3600 = vld [vmem:[#allocation28 + $0x160] sm:$0xff]
    %v3601 = vld [vmem:[#allocation28 + $0x168] sm:$0xff]
    %v3602 = vld [vmem:[#allocation28 + $0x170] sm:$0xff]
    %v3603 = vld [vmem:[#allocation28 + $0x178] sm:$0xff]
    %v3604 = vld [vmem:[#allocation28 + $0x180] sm:$0xff]
    %v3605 = vld [vmem:[#allocation28 + $0x188] sm:$0xff]
    %v3606 = vld [vmem:[#allocation28 + $0x190] sm:$0xff]
    %v3607 = vld [vmem:[#allocation28 + $0x198] sm:$0xff]
    %v3608 = vld [vmem:[#allocation28 + $0x1a0] sm:$0xff]
    %v3609 = vld [vmem:[#allocation28 + $0x1a8] sm:$0xff]
    %v3610 = vld [vmem:[#allocation28 + $0x1b0] sm:$0xff]
    %v3611 = vld [vmem:[#allocation28 + $0x1b8] sm:$0xff]
    %v3612 = vld [vmem:[#allocation28 + $0x1c0] sm:$0xff]
    %v3613 = vld [vmem:[#allocation28 + $0x1c8] sm:$0xff]
    %v3614 = vld [vmem:[#allocation28 + $0x1d0] sm:$0xff]
    %v3615 = vld [vmem:[#allocation28 + $0x1d8] sm:$0xff]
    %v3616 = vld [vmem:[#allocation28 + $0x1e0] sm:$0xff]
    %v3617 = vld [vmem:[#allocation28 + $0x1e8] sm:$0xff]
    %v3618 = vld [vmem:[#allocation28 + $0x1f0] sm:$0xff]
    %v3619 = vld [vmem:[#allocation28 + $0x1f8] sm:$0xff]
    %v3620 = vld [vmem:[#allocation28 + $0x200] sm:$0xff]
    %v3621 = vld [vmem:[#allocation28 + $0x208] sm:$0xff]
    %v3622 = vld [vmem:[#allocation28 + $0x210] sm:$0xff]
    %v3623 = vld [vmem:[#allocation28 + $0x218] sm:$0xff]
    %v3624 = vld [vmem:[#allocation28 + $0x220] sm:$0xff]
    %v3625 = vld [vmem:[#allocation28 + $0x228] sm:$0xff]
    %v3626 = vld [vmem:[#allocation28 + $0x230] sm:$0xff]
    %v3627 = vld [vmem:[#allocation28 + $0x238] sm:$0xff]
    %v3628 = vld [vmem:[#allocation28 + $0x240] sm:$0xff]
    %v3629 = vld [vmem:[#allocation28 + $0x248] sm:$0xff]
    %v3630 = vld [vmem:[#allocation28 + $0x250] sm:$0xff]
    %v3631 = vld [vmem:[#allocation28 + $0x258] sm:$0xff]
    %v3632 = vld [vmem:[#allocation28 + $0x260] sm:$0xff]
    %v3633 = vld [vmem:[#allocation28 + $0x268] sm:$0xff]
    %v3634 = vld [vmem:[#allocation28 + $0x270] sm:$0xff]
    %v3635 = vld [vmem:[#allocation28 + $0x278] sm:$0xff]
    %v3636 = vld [vmem:[#allocation28 + $0x280] sm:$0xff]
    %v3637 = vld [vmem:[#allocation28 + $0x288] sm:$0xff]
    %v3638 = vld [vmem:[#allocation28 + $0x290] sm:$0xff]
    %v3639 = vld [vmem:[#allocation28 + $0x298] sm:$0xff]
    %v3640 = vld [vmem:[#allocation28 + $0x2a0] sm:$0xff]
    %v3641 = vld [vmem:[#allocation28 + $0x2a8] sm:$0xff]
    %v3642 = vld [vmem:[#allocation28 + $0x2b0] sm:$0xff]
    %v3643 = vld [vmem:[#allocation28 + $0x2b8] sm:$0xff]
    %v3644 = vld [vmem:[#allocation28 + $0x2c0] sm:$0xff]
    %v3645 = vld [vmem:[#allocation28 + $0x2c8] sm:$0xff]
    %v3646 = vld [vmem:[#allocation28 + $0x2d0] sm:$0xff]
    %v3647 = vld [vmem:[#allocation28 + $0x2d8] sm:$0xff]
    %v3648 = vld [vmem:[#allocation28 + $0x2e0] sm:$0xff]
    %v3649 = vld [vmem:[#allocation28 + $0x2e8] sm:$0xff]
    %v3650 = vld [vmem:[#allocation28 + $0x2f0] sm:$0xff]
    %v3651 = vld [vmem:[#allocation28 + $0x2f8] sm:$0xff]
    %v3652 = vld [vmem:[#allocation28 + $0x300] sm:$0xff]
    %v3653 = vld [vmem:[#allocation28 + $0x308] sm:$0xff]
    %v3654 = vld [vmem:[#allocation28 + $0x310] sm:$0xff]
    %v3655 = vld [vmem:[#allocation28 + $0x318] sm:$0xff]
    %v3656 = vld [vmem:[#allocation28 + $0x320] sm:$0xff]
    %v3657 = vld [vmem:[#allocation28 + $0x328] sm:$0xff]
    %v3658 = vld [vmem:[#allocation28 + $0x330] sm:$0xff]
    %v3659 = vld [vmem:[#allocation28 + $0x338] sm:$0xff]
    %v3660 = vld [vmem:[#allocation28 + $0x340] sm:$0xff]
    %v3661 = vld [vmem:[#allocation28 + $0x348] sm:$0xff]
    %v3662 = vld [vmem:[#allocation28 + $0x350] sm:$0xff]
    %v3663 = vld [vmem:[#allocation28 + $0x358] sm:$0xff]
    %v3664 = vld [vmem:[#allocation28 + $0x360] sm:$0xff]
    %v3665 = vld [vmem:[#allocation28 + $0x368] sm:$0xff]
    %v3666 = vld [vmem:[#allocation28 + $0x370] sm:$0xff]
    %v3667 = vld [vmem:[#allocation28 + $0x378] sm:$0xff]
    %v3668 = vld [vmem:[#allocation28 + $0x380] sm:$0xff]
    %v3669 = vld [vmem:[#allocation28 + $0x388] sm:$0xff]
    %v3670 = vld [vmem:[#allocation28 + $0x390] sm:$0xff]
    %v3671 = vld [vmem:[#allocation28 + $0x398] sm:$0xff]
    %v3672 = vld [vmem:[#allocation28 + $0x3a0] sm:$0xff]
    %v3673 = vld [vmem:[#allocation28 + $0x3a8] sm:$0xff]
    %v3674 = vld [vmem:[#allocation28 + $0x3b0] sm:$0xff]
    %v3675 = vld [vmem:[#allocation28 + $0x3b8] sm:$0xff]
    %v3676 = vld [vmem:[#allocation28 + $0x3c0] sm:$0xff]
    %v3677 = vld [vmem:[#allocation28 + $0x3c8] sm:$0xff]
    %v3678 = vld [vmem:[#allocation28 + $0x3d0] sm:$0xff]
    %v3679 = vld [vmem:[#allocation28 + $0x3d8] sm:$0xff]
    %v3680 = vld [vmem:[#allocation28 + $0x3e0] sm:$0xff]
    %v3681 = vld [vmem:[#allocation28 + $0x3e8] sm:$0xff]
    %v3682 = vld [vmem:[#allocation28 + $0x3f0] sm:$0xff]
    %v3683 = vld [vmem:[#allocation28 + $0x3f8] sm:$0xff]
    %v3684 = vld [vmem:[#allocation29] sm:$0x3]
    %v3686 = vlaneseq
    %v3687 = vshrl.u32 %v3686, 7
    %v3688 = vsub.s32 0, %v3687
    %v3689 = vrot.slane %v3684, %v3688
    %v3690 = vlaneseq
    %v3691 = vshrl.u32 %v3690, 7
    %v3692 = vsub.s32 1, %v3691
    %v3693 = vrot.slane %v3684, %v3692
    %3696 = vmatprep.subr.mxu0 %v3557
    %3697 = vmatpush1.msra.mxu0 %v3556
    %3698 = vmatprep.subr.mxu0 %v3559
    %3699 = vmatpush1.msra.mxu0 %v3558
    %3700 = vmatprep.subr.mxu0 %v3561
    %3701 = vmatpush1.msra.mxu0 %v3560
    %3702 = vmatprep.subr.mxu0 %v3563
    %3703 = vmatpush1.msra.mxu0 %v3562
    %3704 = vmatprep.subr.mxu0 %v3565
    %3705 = vmatpush1.msra.mxu0 %v3564
    %3706 = vmatprep.subr.mxu0 %v3567
    %3707 = vmatpush1.msra.mxu0 %v3566
    %3708 = vmatprep.subr.mxu0 %v3569
    %3709 = vmatpush1.msra.mxu0 %v3568
    %3710 = vmatprep.subr.mxu0 %v3571
    %3711 = vmatpush1.msra.mxu0 %v3570
    %3712 = vmatprep.subr.mxu0 %v3573
    %3713 = vmatpush1.msra.mxu0 %v3572
    %3714 = vmatprep.subr.mxu0 %v3575
    %3715 = vmatpush1.msra.mxu0 %v3574
    %3716 = vmatprep.subr.mxu0 %v3577
    %3717 = vmatpush1.msra.mxu0 %v3576
    %3718 = vmatprep.subr.mxu0 %v3579
    %3719 = vmatpush1.msra.mxu0 %v3578
    %3720 = vmatprep.subr.mxu0 %v3581
    %3721 = vmatpush1.msra.mxu0 %v3580
    %3722 = vmatprep.subr.mxu0 %v3583
    %3723 = vmatpush1.msra.mxu0 %v3582
    %3724 = vmatprep.subr.mxu0 %v3585
    %3725 = vmatpush1.msra.mxu0 %v3584
    %3726 = vmatprep.subr.mxu0 %v3587
    %3727 = vmatpush1.msra.mxu0 %v3586
    %3728 = vmatprep.subr.mxu0 %v3589
    %3729 = vmatpush1.msra.mxu0 %v3588
    %3730 = vmatprep.subr.mxu0 %v3591
    %3731 = vmatpush1.msra.mxu0 %v3590
    %3732 = vmatprep.subr.mxu0 %v3593
    %3733 = vmatpush1.msra.mxu0 %v3592
    %3734 = vmatprep.subr.mxu0 %v3595
    %3735 = vmatpush1.msra.mxu0 %v3594
    %3736 = vmatprep.subr.mxu0 %v3597
    %3737 = vmatpush1.msra.mxu0 %v3596
    %3738 = vmatprep.subr.mxu0 %v3599
    %3739 = vmatpush1.msra.mxu0 %v3598
    %3740 = vmatprep.subr.mxu0 %v3601
    %3741 = vmatpush1.msra.mxu0 %v3600
    %3742 = vmatprep.subr.mxu0 %v3603
    %3743 = vmatpush1.msra.mxu0 %v3602
    %3744 = vmatprep.subr.mxu0 %v3605
    %3745 = vmatpush1.msra.mxu0 %v3604
    %3746 = vmatprep.subr.mxu0 %v3607
    %3747 = vmatpush1.msra.mxu0 %v3606
    %3748 = vmatprep.subr.mxu0 %v3609
    %3749 = vmatpush1.msra.mxu0 %v3608
    %3750 = vmatprep.subr.mxu0 %v3611
    %3751 = vmatpush1.msra.mxu0 %v3610
    %3752 = vmatprep.subr.mxu0 %v3613
    %3753 = vmatpush1.msra.mxu0 %v3612
    %3754 = vmatprep.subr.mxu0 %v3615
    %3755 = vmatpush1.msra.mxu0 %v3614
    %3756 = vmatprep.subr.mxu0 %v3617
    %3757 = vmatpush1.msra.mxu0 %v3616
    %3758 = vmatprep.subr.mxu0 %v3619
    %3759 = vmatpush1.msra.mxu0 %v3618
    %3760 = vmatprep.mubr.f32.mxu0 %v3553
    %3761 = vmatmul.mubr.f32.gmra.mrb[0].mxu0 %v3552
    %v3762 = vpop.f32.mrb[0].mxu0
    %v3763 = vadd.f32 %v3689, %v3762
    %v3764 = vpop.f32.mrb[0].mxu0
    %v3765 = vadd.f32 %v3693, %v3764
    %3766 = vdwg.mxu0
    %3767 = vmatprep.subr.mxu0 %v3621
    %3768 = vmatpush1.msra.mxu0 %v3620
    %3769 = vmatprep.subr.mxu0 %v3623
    %3770 = vmatpush1.msra.mxu0 %v3622
    %3771 = vmatprep.subr.mxu0 %v3625
    %3772 = vmatpush1.msra.mxu0 %v3624
    %3773 = vmatprep.subr.mxu0 %v3627
    %3774 = vmatpush1.msra.mxu0 %v3626
    %3775 = vmatprep.subr.mxu0 %v3629
    %3776 = vmatpush1.msra.mxu0 %v3628
    %3777 = vmatprep.subr.mxu0 %v3631
    %3778 = vmatpush1.msra.mxu0 %v3630
    %3779 = vmatprep.subr.mxu0 %v3633
    %3780 = vmatpush1.msra.mxu0 %v3632
    %3781 = vmatprep.subr.mxu0 %v3635
    %3782 = vmatpush1.msra.mxu0 %v3634
    %3783 = vmatprep.subr.mxu0 %v3637
    %3784 = vmatpush1.msra.mxu0 %v3636
    %3785 = vmatprep.subr.mxu0 %v3639
    %3786 = vmatpush1.msra.mxu0 %v3638
    %3787 = vmatprep.subr.mxu0 %v3641
    %3788 = vmatpush1.msra.mxu0 %v3640
    %3789 = vmatprep.subr.mxu0 %v3643
    %3790 = vmatpush1.msra.mxu0 %v3642
    %3791 = vmatprep.subr.mxu0 %v3645
    %3792 = vmatpush1.msra.mxu0 %v3644
    %3793 = vmatprep.subr.mxu0 %v3647
    %3794 = vmatpush1.msra.mxu0 %v3646
    %3795 = vmatprep.subr.mxu0 %v3649
    %3796 = vmatpush1.msra.mxu0 %v3648
    %3797 = vmatprep.subr.mxu0 %v3651
    %3798 = vmatpush1.msra.mxu0 %v3650
    %3799 = vmatprep.subr.mxu0 %v3653
    %3800 = vmatpush1.msra.mxu0 %v3652
    %3801 = vmatprep.subr.mxu0 %v3655
    %3802 = vmatpush1.msra.mxu0 %v3654
    %3803 = vmatprep.subr.mxu0 %v3657
    %3804 = vmatpush1.msra.mxu0 %v3656
    %3805 = vmatprep.subr.mxu0 %v3659
    %3806 = vmatpush1.msra.mxu0 %v3658
    %3807 = vmatprep.subr.mxu0 %v3661
    %3808 = vmatpush1.msra.mxu0 %v3660
    %3809 = vmatprep.subr.mxu0 %v3663
    %3810 = vmatpush1.msra.mxu0 %v3662
    %3811 = vmatprep.subr.mxu0 %v3665
    %3812 = vmatpush1.msra.mxu0 %v3664
    %3813 = vmatprep.subr.mxu0 %v3667
    %3814 = vmatpush1.msra.mxu0 %v3666
    %3815 = vmatprep.subr.mxu0 %v3669
    %3816 = vmatpush1.msra.mxu0 %v3668
    %3817 = vmatprep.subr.mxu0 %v3671
    %3818 = vmatpush1.msra.mxu0 %v3670
    %3819 = vmatprep.subr.mxu0 %v3673
    %3820 = vmatpush1.msra.mxu0 %v3672
    %3821 = vmatprep.subr.mxu0 %v3675
    %3822 = vmatpush1.msra.mxu0 %v3674
    %3823 = vmatprep.subr.mxu0 %v3677
    %3824 = vmatpush1.msra.mxu0 %v3676
    %3825 = vmatprep.subr.mxu0 %v3679
    %3826 = vmatpush1.msra.mxu0 %v3678
    %3827 = vmatprep.subr.mxu0 %v3681
    %3828 = vmatpush1.msra.mxu0 %v3680
    %3829 = vmatprep.subr.mxu0 %v3683
    %3830 = vmatpush1.msra.mxu0 %v3682
    %3831 = vmatprep.mubr.f32.mxu0 %v3555
    %3832 = vmatmul.mubr.f32.gmra.mrb[0].mxu0 %v3554
    %v3833 = vpop.f32.mrb[0].mxu0
    %v3834 = vadd.f32 %v3763, %v3833
    %v3835 = vpop.f32.mrb[0].mxu0
    %v3836 = vadd.f32 %v3765, %v3835
    %3837 = vdwg.mxu0
    %v3838 = vsub.f32 %v3834, %v339
    %v3839 = vsub.f32 %v3836, %v340
    %v3840 = vmul.f32 %v3838, %v3838
    %v3841 = vmul.f32 %v3839, %v3839
    %vm3842 = vcmask 1041408
    %v3843 = vsel %vm3842, %v3840, 0.0
    %v3844 = vsel %vm3842, %v3841, 0.0
    %v3845 = vadd.f32 %v3843, %v3844
    %3846 = vadd.xlane.f32.xlu0 %v3845
    %v3847 = vpop.xlane.xlu0 %3846
    %v3848 = vrot.slane %v3847, 4
    %v3849 = vadd.f32 %v3847, %v3848
    %v3850 = vrot.slane %v3849, 2
    %v3851 = vadd.f32 %v3849, %v3850
    %v3852 = vrot.slane %v3851, 1
    %v3853 = vadd.f32 %v3851, %v3852
    %s3854 = vtos %v3853
    %s3855 = smul.f32 %s3854, 0.005
    %v3856 = vadd.f32 %v811, 1.0
    %v3857 = vmul.f32 %v809, %v809
    %v3858 = vsub.f32 %v3856, %v3857
    %v3859 = vmul.f32 %v811, 1.442695
    %v3860 = vpow.pop %v3859
    %v3861 = vsub.f32 %v3858, %v3860
    %v3862 = vsel %vm3842, %v3861, 0.0
    %3863 = vadd.xlane.f32.xlu0 %v3862
    %v3864 = vpop.xlane.xlu0 %3863
    %v3865 = vrot.slane %v3864, 4
    %v3866 = vadd.f32 %v3864, %v3865
    %v3867 = vrot.slane %v3866, 2
    %v3868 = vadd.f32 %v3866, %v3867
    %v3869 = vrot.slane %v3868, 1
    %v3870 = vadd.f32 %v3868, %v3869
    %s3871 = vtos %v3870
    %s3872 = smul.f32 %s3871, -0.5
    %v3873 = vrcp.pop 2.0
    %s3874 = vtos %v3873
    %s3875 = smul.f32 %s3872, %s3874
    %s3876 = smul.f32 %s3875, 0.5
    %s3877 = sadd.f32 %s3855, %s3876
    %s3878 = scalar_lea.smem [#allocation31], 0
    %3879 = sst [smem:[%s3878]] %s3877
    // Predicated region
    $region154: #{odvae_forward.1} parent=1 // pred_check
      _
    $region155: #{odvae_forward.1} parent=1 // pred_check_branch
      %3881 = sbr.rel (0) target = $region157
    $region156: #{odvae_forward.1} parent=1 // pred_region
      %s3883 = ssub.s32 16, 16
      %3884 = vsyncadd [#allocation4], %s3883
      %3887 = dma.smem_to_hbm [#allocation31], 16, %s20, [#allocation4]
    $region157: #{odvae_forward.1} parent=1 // pred_fallthru
      _
    // Predicated region
    $region158: #{odvae_forward.1} parent=1 // pred_check
      _
    $region159: #{odvae_forward.1} parent=1 // pred_check_branch
      %3889 = sbr.rel (0) target = $region161
    $region160: #{odvae_forward.1} parent=1 // pred_region
      %3890 = dma.done [#allocation4], 16
    $region161: #{odvae_forward.1} parent=1 // pred_fallthru
      _
    %3891 = sfence
    %3892 = vsyncpa [#allocation3], 1
    %3893 = vsyncpa [#allocation6], 1
    %3894 = vsyncpa [#allocation9], 1
    %3895 = vsyncpa [#allocation12], 1
    %3896 = vsyncpa [#allocation15], 1
    %3897 = vsyncpa [#allocation18], 1
    %3898 = vsyncpa [#allocation21], 1
    %3899 = vsyncpa [#allocation24], 1
    %3900 = vsyncpa [#allocation27], 1
    %3901 = vsyncpa [#allocation30], 1
    %3902 = vsyncpa [#allocation4], 1

</llo_original>
